<compile_context>
chip_gen: v7x
topology: tpu7x:2x2x1
jax: 0.10.0
libtpu: 0.0.40
codegen_flags: <defaults>
</compile_context>

<pallas_src>
import functools

import numpy as np
import jax
import jax.numpy as jnp
from jax import lax
from jax.experimental import pallas as pl
from jax.experimental.pallas import tpu as pltpu


# --------------------------------------------------------------------------- #
# Kernel
# --------------------------------------------------------------------------- #
def _bottleneck_kernel(x_ref, m_ref, w1_ref, b1_ref, w2_ref, b2_ref, out_ref, *,
                       img_w, L, cin, cout, add_residual, use_mxu):
    """Fused Bottleneck: SiLU(BN(conv2(SiLU(BN(conv1(x)))))) [+ x].

    Lane-dense layout (pixels -- and the packed images -- on the lane axis):
      x_ref  : (1, Cin, L)     L = images_per_step * H*W
      m_ref  : (9, 1, L) f32   [O2] precomputed zero-halo mask per 3x3 tap
      w*_ref : (Cout, 9*Cin)   [O1]/[O3] im2col weights with BN scale folded in
      b*_ref : (Cout, 1) f32   fused eval-mode BN bias
      out_ref: (1, Cout, L)
    """
    x = x_ref[0].astype(jnp.float32)                       # (Cin, L)
    masks = m_ref[...]                                     # (9, 1, L), loaded once
    # Flat-index shift of each 3x3 tap, dy-major (matches mask / weight order).
    offsets = tuple((dy - 1) * img_w + (dx - 1) for dy in range(3) for dx in range(3))

    def conv_bn_silu(v, w_ref, b_ref):
        # v: (Cin, L) f32  ->  (Cout, L) f32
        # Each tap is one XLU lane-rotate of the flat image; the zero halo (and
        # the roll wrap across packed-image boundaries) lives in the masks, so
        # there is no padded copy of the image anywhere (HBM or VMEM).
        taps = []
        for t, off in enumerate(offsets):
            s = v if off == 0 else pltpu.roll(v, shift=(-off) % L, axis=1)
            if off != 0:
                s = s * masks[t]
            taps.append(s)

        if use_mxu:
            # [O3]/[O4] large-C path: one im2col patch, ONE bf16 MXU dot
            # (K = 9*Cin), f32 accumulation, single bias add.
            patch = jnp.concatenate(taps, axis=0).astype(jnp.bfloat16)   # (9*Cin, L)
            y = jnp.dot(w_ref[...], patch,
                        preferred_element_type=jnp.float32) + b_ref[...]
        else:
            # Tiny-C path: the MXU would be <2% utilized, and the f32 VPU FMAs
            # keep the 1e-4 match with the f32 reference exact.
            # TODO(synk): switch to a split-precision (bf16 hi/lo, 3-pass) MXU
            #   dot here if the tolerance is ever relaxed -- fewer ops even at C=4.
            w2d = w_ref[...].astype(jnp.float32)                         # (Cout, 9*Cin)
            acc = jnp.broadcast_to(b_ref[...], (cout, L))                # [O1] init = bias
            for t in range(9):
                s = taps[t]
                for ci in range(cin):
                    k = t * cin + ci
                    acc = acc + w2d[:, k:k + 1] * s[ci:ci + 1, :]
            y = acc
        return y * jax.nn.sigmoid(y)                       # SiLU (sigmoid -> EUP slot)

    # The intermediate activation never leaves vregs/VMEM (single fused kernel).
    h = conv_bn_silu(x, w1_ref, b1_ref)
    y = conv_bn_silu(h, w2_ref, b2_ref)
    if add_residual:
        y = y + x                                          # Bottleneck cat=True
    out_ref[0] = y.astype(out_ref.dtype)                   # lane-dense unmasked store


# --------------------------------------------------------------------------- #
# Wrapper helpers
# --------------------------------------------------------------------------- #
def _tensorcores_per_chip():
    """v7x exposes 2 TensorCores per chip; v5e/v6e expose 1 (heuristic)."""
    try:
        kind = jax.devices()[0].device_kind.lower()
    except Exception:
        return 1
    return 2 if ("v7" in kind or "7x" in kind) else 1


def _images_per_step(n, n_tc):
    """Pack as many images per grid step as possible while keeping >=1 step per TC."""
    for ips in range(n, 0, -1):
        if n % ips == 0 and (n // ips) >= min(n_tc, n):
            return ips
    return 1


def _halo_masks(H, W, images_per_step):
    """[O2] (9, 1, L) f32 masks zeroing each tap's out-of-image contributions.

    Built host-side once. The flat lane axis packs `images_per_step` images; the
    masks also kill the roll wrap-around at packed-image boundaries.
    """
    HW = H * W
    L = images_per_step * HW
    pos = np.arange(L) % HW
    row, col = pos // W, pos % W
    masks = np.ones((9, 1, L), np.float32)
    t = 0
    for dy in range(3):
        for dx in range(3):
            valid = np.ones(L, bool)
            if dy == 0:
                valid &= row >= 1
            elif dy == 2:
                valid &= row <= H - 2
            if dx == 0:
                valid &= col >= 1
            elif dx == 2:
                valid &= col <= W - 2
            masks[t, 0, :] = valid
            t += 1
    return jnp.asarray(masks)


# --------------------------------------------------------------------------- #
# Public wrapper
# --------------------------------------------------------------------------- #
def bottleneck(x, params, cat=True):
    """Bottleneck forward.  x: (N, C, H, W) float32 (NCHW, as in PyTorch)."""
    N, C, H, W = x.shape
    HW = H * W
    (w1, s1, b1), (w2, s2, b2) = params                    # w*: (Cout, Cin, 3, 3) OIHW

    # [O5] one grid step per TensorCore: whole batch packed on lanes for
    # single-core v5e/v6e, >= 2 parallel steps kept for v7x's two cores.
    n_tc = _tensorcores_per_chip()
    ips = _images_per_step(N, n_tc)
    steps = N // ips
    L = ips * HW

    use_mxu = C >= 32                                      # static formulation switch
    w_dtype = jnp.bfloat16 if use_mxu else jnp.float32     # [O4] bf16 weights in HBM (MXU path)

    def prep_w(w, scale):
        # [O1] fold eval-mode BN scale into the conv weights (free at prep time);
        # [O3] im2col layout (Cout, 9*Cin) with k = (dy*3+dx)*Cin + ci.
        wf = w * scale[:, None, None, None]
        return jnp.transpose(wf, (0, 2, 3, 1)).reshape(C, 9 * C).astype(w_dtype)

    def prep_b(b):
        return b.reshape(C, 1).astype(jnp.float32)

    masks = _halo_masks(H, W, ips)                         # [O2] built once, host-side

    # Layout plumbing only: flatten (images_per_step, H, W) onto the lane axis.
    x_steps = x.reshape(steps, ips, C, HW).transpose(0, 2, 1, 3).reshape(steps, C, L)

    kernel = functools.partial(_bottleneck_kernel, img_w=W, L=L, cin=C, cout=C,
                               add_residual=cat, use_mxu=use_mxu)

    itemsize_w = 2 if use_mxu else 4
    cost = pl.CostEstimate(                                # [O6]
        flops=2 * 2 * 9 * C * C * HW * N + 8 * C * HW * N,
        transcendentals=2 * C * HW * N,
        bytes_accessed=(2 * N * C * HW * 4                 # x in + out
                        + 2 * 9 * C * C * itemsize_w       # both weight sets
                        + 9 * L * 4 + 2 * C * 4))          # masks + biases

    out = pl.pallas_call(
        kernel,
        out_shape=jax.ShapeDtypeStruct((steps, C, L), x.dtype),
        grid_spec=pltpu.PrefetchScalarGridSpec(
            num_scalar_prefetch=0,
            grid=(steps,),                                 # [O5] 1 step (v5e/v6e) / N steps (v7x)
            in_specs=[
                pl.BlockSpec((1, C, L), lambda s: (s, 0, 0)),
                pl.BlockSpec((9, 1, L), lambda s: (0, 0, 0)),
                pl.BlockSpec((C, 9 * C), lambda s: (0, 0)),
                pl.BlockSpec((C, 1), lambda s: (0, 0)),
                pl.BlockSpec((C, 9 * C), lambda s: (0, 0)),
                pl.BlockSpec((C, 1), lambda s: (0, 0)),
            ],
            out_specs=pl.BlockSpec((1, C, L), lambda s: (s, 0, 0)),
        ),
        compiler_params=pltpu.CompilerParams(
            dimension_semantics=("parallel",),
            vmem_limit_bytes=32 * 1024 * 1024),
        cost_estimate=cost,
    )(x_steps, masks, prep_w(w1, s1), prep_b(b1), prep_w(w2, s2), prep_b(b2))

    return (out.reshape(steps, C, ips, HW)
               .transpose(0, 2, 1, 3)
               .reshape(N, C, H, W))


# --------------------------------------------------------------------------- #
# Params, reference and test
# --------------------------------------------------------------------------- #
def make_params(key, channels):
    """Deterministic params; BatchNorm2d(C, 0.001, 0.03) fused to eval scale/bias."""
    eps = 1e-3
    params = []
    for i in range(2):
        k = jax.random.fold_in(key, i)
        kw, kg, kb, km, kv = jax.random.split(k, 5)
        w = jax.random.normal(kw, (channels, channels, 3, 3), jnp.float32) * 0.1
        gamma = 1.0 + 0.1 * jax.random.normal(kg, (channels,), jnp.float32)
        beta = 0.1 * jax.random.normal(kb, (channels,), jnp.float32)
        run_mean = 0.1 * jax.random.normal(km, (channels,), jnp.float32)
        run_var = jnp.abs(jax.random.normal(kv, (channels,), jnp.float32)) + 0.5
        scale = gamma / jnp.sqrt(run_var + eps)
        bias = beta - run_mean * scale
        params.append((w, scale, bias))
    return params


def _reference(x, params, cat=True):
    """Plain-JAX reference (eval-mode BN) for correctness checking."""
    def block(h, p):
        w, scale, bias = p
        y = lax.conv_general_dilated(
            h, w, window_strides=(1, 1), padding="SAME",
            dimension_numbers=("NCHW", "OIHW", "NCHW"))
        y = y * scale.reshape(1, -1, 1, 1) + bias.reshape(1, -1, 1, 1)
        return y * jax.nn.sigmoid(y)

    h = block(x, params[0])
    h = block(h, params[1])
    return h + x if cat else h


if __name__ == "__main__":
    key = jax.random.PRNGKey(0)
    kx, kp = jax.random.split(key)

    N, C, H, W = 2, 4, 16, 16                     # NCHW, matches PyTorch (2,4,16,16)
    x = jax.random.normal(kx, (N, C, H, W), jnp.float32)
    params = make_params(kp, C)

    bottleneck_fn = jax.jit(functools.partial(bottleneck, cat=True))
    out = jax.block_until_ready(bottleneck_fn(x, params))

    ref = _reference(x, params, cat=True)
    assert out.shape == (N, C, H, W)
    assert jnp.allclose(out, ref, atol=1e-4, rtol=1e-4), "mismatch vs reference"

    print("KERNEL_OK")
</pallas_src>

<mosaic_0001>
module attributes {stable_mosaic.version = 11 : i64} {
  func.func @_bottleneck_kernel(%arg0: i32, %arg1: memref<1x4x512xf32, #tpu.memory_space<vmem>>, %arg2: memref<9x1x512xf32, #tpu.memory_space<vmem>>, %arg3: memref<4x36xf32, #tpu.memory_space<vmem>>, %arg4: memref<4x1xf32, #tpu.memory_space<vmem>>, %arg5: memref<4x36xf32, #tpu.memory_space<vmem>>, %arg6: memref<4x1xf32, #tpu.memory_space<vmem>>, %arg7: memref<1x4x512xf32, #tpu.memory_space<vmem>>) attributes {dimension_semantics = [#tpu.dimension_semantics<parallel>], iteration_bounds = array<i64: 1>, scalar_prefetch = 0 : i64, scratch_operands = 0 : i64, tpu.core_type = #tpu.core_type<tc>, window_params = [{transform_indices = @transform_0, window_bounds = array<i64: 1, 4, 512>}, {pipeline_mode = #tpu.pipeline_mode<synchronous>, transform_indices = @transform_1, window_bounds = array<i64: 9, 1, 512>}, {pipeline_mode = #tpu.pipeline_mode<synchronous>, transform_indices = @transform_2, window_bounds = array<i64: 4, 36>}, {pipeline_mode = #tpu.pipeline_mode<synchronous>, transform_indices = @transform_3, window_bounds = array<i64: 4, 1>}, {pipeline_mode = #tpu.pipeline_mode<synchronous>, transform_indices = @transform_4, window_bounds = array<i64: 4, 36>}, {pipeline_mode = #tpu.pipeline_mode<synchronous>, transform_indices = @transform_5, window_bounds = array<i64: 4, 1>}, {transform_indices = @transform_6, window_bounds = array<i64: 1, 4, 512>}]} {
    %c0 = arith.constant 0 : index
    %c0_0 = arith.constant 0 : index
    %c0_1 = arith.constant 0 : index
    %0 = vector.load %arg1[%c0, %c0_0, %c0_1] : memref<1x4x512xf32, #tpu.memory_space<vmem>>, vector<1x4x512xf32>
    %1 = vector.shape_cast %0 : vector<1x4x512xf32> to vector<4x512xf32>
    %c0_2 = arith.constant 0 : index
    %c0_3 = arith.constant 0 : index
    %c0_4 = arith.constant 0 : index
    %2 = vector.load %arg2[%c0_2, %c0_3, %c0_4] : memref<9x1x512xf32, #tpu.memory_space<vmem>>, vector<9x1x512xf32>
    %c17_i32 = arith.constant 17 : i32
    %3 = tpu.dynamic_rotate %1 by %c17_i32 dim 1 : vector<4x512xf32>, i32 -> vector<4x512xf32>
    %4 = vector.extract_strided_slice %2 {offsets = [0, 0, 0], sizes = [1, 1, 512], strides = [1, 1, 1]} : vector<9x1x512xf32> to vector<1x1x512xf32>
    %5 = vector.shape_cast %4 : vector<1x1x512xf32> to vector<1x512xf32>
    %6 = vector.broadcast %5 : vector<1x512xf32> to vector<4x512xf32>
    %7 = arith.mulf %3, %6 : vector<4x512xf32>
    %c16_i32 = arith.constant 16 : i32
    %8 = tpu.dynamic_rotate %1 by %c16_i32 dim 1 : vector<4x512xf32>, i32 -> vector<4x512xf32>
    %9 = vector.extract_strided_slice %2 {offsets = [1, 0, 0], sizes = [1, 1, 512], strides = [1, 1, 1]} : vector<9x1x512xf32> to vector<1x1x512xf32>
    %10 = vector.shape_cast %9 : vector<1x1x512xf32> to vector<1x512xf32>
    %11 = vector.broadcast %10 : vector<1x512xf32> to vector<4x512xf32>
    %12 = arith.mulf %8, %11 : vector<4x512xf32>
    %c15_i32 = arith.constant 15 : i32
    %13 = tpu.dynamic_rotate %1 by %c15_i32 dim 1 : vector<4x512xf32>, i32 -> vector<4x512xf32>
    %14 = vector.extract_strided_slice %2 {offsets = [2, 0, 0], sizes = [1, 1, 512], strides = [1, 1, 1]} : vector<9x1x512xf32> to vector<1x1x512xf32>
    %15 = vector.shape_cast %14 : vector<1x1x512xf32> to vector<1x512xf32>
    %16 = vector.broadcast %15 : vector<1x512xf32> to vector<4x512xf32>
    %17 = arith.mulf %13, %16 : vector<4x512xf32>
    %c1_i32 = arith.constant 1 : i32
    %18 = tpu.dynamic_rotate %1 by %c1_i32 dim 1 : vector<4x512xf32>, i32 -> vector<4x512xf32>
    %19 = vector.extract_strided_slice %2 {offsets = [3, 0, 0], sizes = [1, 1, 512], strides = [1, 1, 1]} : vector<9x1x512xf32> to vector<1x1x512xf32>
    %20 = vector.shape_cast %19 : vector<1x1x512xf32> to vector<1x512xf32>
    %21 = vector.broadcast %20 : vector<1x512xf32> to vector<4x512xf32>
    %22 = arith.mulf %18, %21 : vector<4x512xf32>
    %c511_i32 = arith.constant 511 : i32
    %23 = tpu.dynamic_rotate %1 by %c511_i32 dim 1 : vector<4x512xf32>, i32 -> vector<4x512xf32>
    %24 = vector.extract_strided_slice %2 {offsets = [5, 0, 0], sizes = [1, 1, 512], strides = [1, 1, 1]} : vector<9x1x512xf32> to vector<1x1x512xf32>
    %25 = vector.shape_cast %24 : vector<1x1x512xf32> to vector<1x512xf32>
    %26 = vector.broadcast %25 : vector<1x512xf32> to vector<4x512xf32>
    %27 = arith.mulf %23, %26 : vector<4x512xf32>
    %c497_i32 = arith.constant 497 : i32
    %28 = tpu.dynamic_rotate %1 by %c497_i32 dim 1 : vector<4x512xf32>, i32 -> vector<4x512xf32>
    %29 = vector.extract_strided_slice %2 {offsets = [6, 0, 0], sizes = [1, 1, 512], strides = [1, 1, 1]} : vector<9x1x512xf32> to vector<1x1x512xf32>
    %30 = vector.shape_cast %29 : vector<1x1x512xf32> to vector<1x512xf32>
    %31 = vector.broadcast %30 : vector<1x512xf32> to vector<4x512xf32>
    %32 = arith.mulf %28, %31 : vector<4x512xf32>
    %c496_i32 = arith.constant 496 : i32
    %33 = tpu.dynamic_rotate %1 by %c496_i32 dim 1 : vector<4x512xf32>, i32 -> vector<4x512xf32>
    %34 = vector.extract_strided_slice %2 {offsets = [7, 0, 0], sizes = [1, 1, 512], strides = [1, 1, 1]} : vector<9x1x512xf32> to vector<1x1x512xf32>
    %35 = vector.shape_cast %34 : vector<1x1x512xf32> to vector<1x512xf32>
    %36 = vector.broadcast %35 : vector<1x512xf32> to vector<4x512xf32>
    %37 = arith.mulf %33, %36 : vector<4x512xf32>
    %c495_i32 = arith.constant 495 : i32
    %38 = tpu.dynamic_rotate %1 by %c495_i32 dim 1 : vector<4x512xf32>, i32 -> vector<4x512xf32>
    %39 = vector.extract_strided_slice %2 {offsets = [8, 0, 0], sizes = [1, 1, 512], strides = [1, 1, 1]} : vector<9x1x512xf32> to vector<1x1x512xf32>
    %40 = vector.shape_cast %39 : vector<1x1x512xf32> to vector<1x512xf32>
    %41 = vector.broadcast %40 : vector<1x512xf32> to vector<4x512xf32>
    %42 = arith.mulf %38, %41 : vector<4x512xf32>
    %c0_5 = arith.constant 0 : index
    %c0_6 = arith.constant 0 : index
    %43 = vector.load %arg3[%c0_5, %c0_6] : memref<4x36xf32, #tpu.memory_space<vmem>>, vector<4x36xf32>
    %c0_7 = arith.constant 0 : index
    %c0_8 = arith.constant 0 : index
    %44 = vector.load %arg4[%c0_7, %c0_8] : memref<4x1xf32, #tpu.memory_space<vmem>>, vector<4x1xf32>
    %45 = vector.shape_cast %44 : vector<4x1xf32> to vector<4x1xf32>
    %46 = vector.broadcast %45 : vector<4x1xf32> to vector<4x512xf32>
    %47 = vector.extract_strided_slice %43 {offsets = [0, 0], sizes = [4, 1], strides = [1, 1]} : vector<4x36xf32> to vector<4x1xf32>
    %48 = vector.extract_strided_slice %7 {offsets = [0, 0], sizes = [1, 512], strides = [1, 1]} : vector<4x512xf32> to vector<1x512xf32>
    %49 = vector.broadcast %47 : vector<4x1xf32> to vector<4x512xf32>
    %50 = vector.broadcast %48 : vector<1x512xf32> to vector<4x512xf32>
    %51 = arith.mulf %49, %50 : vector<4x512xf32>
    %52 = arith.addf %46, %51 : vector<4x512xf32>
    %53 = vector.extract_strided_slice %43 {offsets = [0, 1], sizes = [4, 1], strides = [1, 1]} : vector<4x36xf32> to vector<4x1xf32>
    %54 = vector.extract_strided_slice %7 {offsets = [1, 0], sizes = [1, 512], strides = [1, 1]} : vector<4x512xf32> to vector<1x512xf32>
    %55 = vector.broadcast %53 : vector<4x1xf32> to vector<4x512xf32>
    %56 = vector.broadcast %54 : vector<1x512xf32> to vector<4x512xf32>
    %57 = arith.mulf %55, %56 : vector<4x512xf32>
    %58 = arith.addf %52, %57 : vector<4x512xf32>
    %59 = vector.extract_strided_slice %43 {offsets = [0, 2], sizes = [4, 1], strides = [1, 1]} : vector<4x36xf32> to vector<4x1xf32>
    %60 = vector.extract_strided_slice %7 {offsets = [2, 0], sizes = [1, 512], strides = [1, 1]} : vector<4x512xf32> to vector<1x512xf32>
    %61 = vector.broadcast %59 : vector<4x1xf32> to vector<4x512xf32>
    %62 = vector.broadcast %60 : vector<1x512xf32> to vector<4x512xf32>
    %63 = arith.mulf %61, %62 : vector<4x512xf32>
    %64 = arith.addf %58, %63 : vector<4x512xf32>
    %65 = vector.extract_strided_slice %43 {offsets = [0, 3], sizes = [4, 1], strides = [1, 1]} : vector<4x36xf32> to vector<4x1xf32>
    %66 = vector.extract_strided_slice %7 {offsets = [3, 0], sizes = [1, 512], strides = [1, 1]} : vector<4x512xf32> to vector<1x512xf32>
    %67 = vector.broadcast %65 : vector<4x1xf32> to vector<4x512xf32>
    %68 = vector.broadcast %66 : vector<1x512xf32> to vector<4x512xf32>
    %69 = arith.mulf %67, %68 : vector<4x512xf32>
    %70 = arith.addf %64, %69 : vector<4x512xf32>
    %71 = vector.extract_strided_slice %43 {offsets = [0, 4], sizes = [4, 1], strides = [1, 1]} : vector<4x36xf32> to vector<4x1xf32>
    %72 = vector.extract_strided_slice %12 {offsets = [0, 0], sizes = [1, 512], strides = [1, 1]} : vector<4x512xf32> to vector<1x512xf32>
    %73 = vector.broadcast %71 : vector<4x1xf32> to vector<4x512xf32>
    %74 = vector.broadcast %72 : vector<1x512xf32> to vector<4x512xf32>
    %75 = arith.mulf %73, %74 : vector<4x512xf32>
    %76 = arith.addf %70, %75 : vector<4x512xf32>
    %77 = vector.extract_strided_slice %43 {offsets = [0, 5], sizes = [4, 1], strides = [1, 1]} : vector<4x36xf32> to vector<4x1xf32>
    %78 = vector.extract_strided_slice %12 {offsets = [1, 0], sizes = [1, 512], strides = [1, 1]} : vector<4x512xf32> to vector<1x512xf32>
    %79 = vector.broadcast %77 : vector<4x1xf32> to vector<4x512xf32>
    %80 = vector.broadcast %78 : vector<1x512xf32> to vector<4x512xf32>
    %81 = arith.mulf %79, %80 : vector<4x512xf32>
    %82 = arith.addf %76, %81 : vector<4x512xf32>
    %83 = vector.extract_strided_slice %43 {offsets = [0, 6], sizes = [4, 1], strides = [1, 1]} : vector<4x36xf32> to vector<4x1xf32>
    %84 = vector.extract_strided_slice %12 {offsets = [2, 0], sizes = [1, 512], strides = [1, 1]} : vector<4x512xf32> to vector<1x512xf32>
    %85 = vector.broadcast %83 : vector<4x1xf32> to vector<4x512xf32>
    %86 = vector.broadcast %84 : vector<1x512xf32> to vector<4x512xf32>
    %87 = arith.mulf %85, %86 : vector<4x512xf32>
    %88 = arith.addf %82, %87 : vector<4x512xf32>
    %89 = vector.extract_strided_slice %43 {offsets = [0, 7], sizes = [4, 1], strides = [1, 1]} : vector<4x36xf32> to vector<4x1xf32>
    %90 = vector.extract_strided_slice %12 {offsets = [3, 0], sizes = [1, 512], strides = [1, 1]} : vector<4x512xf32> to vector<1x512xf32>
    %91 = vector.broadcast %89 : vector<4x1xf32> to vector<4x512xf32>
    %92 = vector.broadcast %90 : vector<1x512xf32> to vector<4x512xf32>
    %93 = arith.mulf %91, %92 : vector<4x512xf32>
    %94 = arith.addf %88, %93 : vector<4x512xf32>
    %95 = vector.extract_strided_slice %43 {offsets = [0, 8], sizes = [4, 1], strides = [1, 1]} : vector<4x36xf32> to vector<4x1xf32>
    %96 = vector.extract_strided_slice %17 {offsets = [0, 0], sizes = [1, 512], strides = [1, 1]} : vector<4x512xf32> to vector<1x512xf32>
    %97 = vector.broadcast %95 : vector<4x1xf32> to vector<4x512xf32>
    %98 = vector.broadcast %96 : vector<1x512xf32> to vector<4x512xf32>
    %99 = arith.mulf %97, %98 : vector<4x512xf32>
    %100 = arith.addf %94, %99 : vector<4x512xf32>
    %101 = vector.extract_strided_slice %43 {offsets = [0, 9], sizes = [4, 1], strides = [1, 1]} : vector<4x36xf32> to vector<4x1xf32>
    %102 = vector.extract_strided_slice %17 {offsets = [1, 0], sizes = [1, 512], strides = [1, 1]} : vector<4x512xf32> to vector<1x512xf32>
    %103 = vector.broadcast %101 : vector<4x1xf32> to vector<4x512xf32>
    %104 = vector.broadcast %102 : vector<1x512xf32> to vector<4x512xf32>
    %105 = arith.mulf %103, %104 : vector<4x512xf32>
    %106 = arith.addf %100, %105 : vector<4x512xf32>
    %107 = vector.extract_strided_slice %43 {offsets = [0, 10], sizes = [4, 1], strides = [1, 1]} : vector<4x36xf32> to vector<4x1xf32>
    %108 = vector.extract_strided_slice %17 {offsets = [2, 0], sizes = [1, 512], strides = [1, 1]} : vector<4x512xf32> to vector<1x512xf32>
    %109 = vector.broadcast %107 : vector<4x1xf32> to vector<4x512xf32>
    %110 = vector.broadcast %108 : vector<1x512xf32> to vector<4x512xf32>
    %111 = arith.mulf %109, %110 : vector<4x512xf32>
    %112 = arith.addf %106, %111 : vector<4x512xf32>
    %113 = vector.extract_strided_slice %43 {offsets = [0, 11], sizes = [4, 1], strides = [1, 1]} : vector<4x36xf32> to vector<4x1xf32>
    %114 = vector.extract_strided_slice %17 {offsets = [3, 0], sizes = [1, 512], strides = [1, 1]} : vector<4x512xf32> to vector<1x512xf32>
    %115 = vector.broadcast %113 : vector<4x1xf32> to vector<4x512xf32>
    %116 = vector.broadcast %114 : vector<1x512xf32> to vector<4x512xf32>
    %117 = arith.mulf %115, %116 : vector<4x512xf32>
    %118 = arith.addf %112, %117 : vector<4x512xf32>
    %119 = vector.extract_strided_slice %43 {offsets = [0, 12], sizes = [4, 1], strides = [1, 1]} : vector<4x36xf32> to vector<4x1xf32>
    %120 = vector.extract_strided_slice %22 {offsets = [0, 0], sizes = [1, 512], strides = [1, 1]} : vector<4x512xf32> to vector<1x512xf32>
    %121 = vector.broadcast %119 : vector<4x1xf32> to vector<4x512xf32>
    %122 = vector.broadcast %120 : vector<1x512xf32> to vector<4x512xf32>
    %123 = arith.mulf %121, %122 : vector<4x512xf32>
    %124 = arith.addf %118, %123 : vector<4x512xf32>
    %125 = vector.extract_strided_slice %43 {offsets = [0, 13], sizes = [4, 1], strides = [1, 1]} : vector<4x36xf32> to vector<4x1xf32>
    %126 = vector.extract_strided_slice %22 {offsets = [1, 0], sizes = [1, 512], strides = [1, 1]} : vector<4x512xf32> to vector<1x512xf32>
    %127 = vector.broadcast %125 : vector<4x1xf32> to vector<4x512xf32>
    %128 = vector.broadcast %126 : vector<1x512xf32> to vector<4x512xf32>
    %129 = arith.mulf %127, %128 : vector<4x512xf32>
    %130 = arith.addf %124, %129 : vector<4x512xf32>
    %131 = vector.extract_strided_slice %43 {offsets = [0, 14], sizes = [4, 1], strides = [1, 1]} : vector<4x36xf32> to vector<4x1xf32>
    %132 = vector.extract_strided_slice %22 {offsets = [2, 0], sizes = [1, 512], strides = [1, 1]} : vector<4x512xf32> to vector<1x512xf32>
    %133 = vector.broadcast %131 : vector<4x1xf32> to vector<4x512xf32>
    %134 = vector.broadcast %132 : vector<1x512xf32> to vector<4x512xf32>
    %135 = arith.mulf %133, %134 : vector<4x512xf32>
    %136 = arith.addf %130, %135 : vector<4x512xf32>
    %137 = vector.extract_strided_slice %43 {offsets = [0, 15], sizes = [4, 1], strides = [1, 1]} : vector<4x36xf32> to vector<4x1xf32>
    %138 = vector.extract_strided_slice %22 {offsets = [3, 0], sizes = [1, 512], strides = [1, 1]} : vector<4x512xf32> to vector<1x512xf32>
    %139 = vector.broadcast %137 : vector<4x1xf32> to vector<4x512xf32>
    %140 = vector.broadcast %138 : vector<1x512xf32> to vector<4x512xf32>
    %141 = arith.mulf %139, %140 : vector<4x512xf32>
    %142 = arith.addf %136, %141 : vector<4x512xf32>
    %143 = vector.extract_strided_slice %43 {offsets = [0, 16], sizes = [4, 1], strides = [1, 1]} : vector<4x36xf32> to vector<4x1xf32>
    %144 = vector.extract_strided_slice %1 {offsets = [0, 0], sizes = [1, 512], strides = [1, 1]} : vector<4x512xf32> to vector<1x512xf32>
    %145 = vector.broadcast %143 : vector<4x1xf32> to vector<4x512xf32>
    %146 = vector.broadcast %144 : vector<1x512xf32> to vector<4x512xf32>
    %147 = arith.mulf %145, %146 : vector<4x512xf32>
    %148 = arith.addf %142, %147 : vector<4x512xf32>
    %149 = vector.extract_strided_slice %43 {offsets = [0, 17], sizes = [4, 1], strides = [1, 1]} : vector<4x36xf32> to vector<4x1xf32>
    %150 = vector.extract_strided_slice %1 {offsets = [1, 0], sizes = [1, 512], strides = [1, 1]} : vector<4x512xf32> to vector<1x512xf32>
    %151 = vector.broadcast %149 : vector<4x1xf32> to vector<4x512xf32>
    %152 = vector.broadcast %150 : vector<1x512xf32> to vector<4x512xf32>
    %153 = arith.mulf %151, %152 : vector<4x512xf32>
    %154 = arith.addf %148, %153 : vector<4x512xf32>
    %155 = vector.extract_strided_slice %43 {offsets = [0, 18], sizes = [4, 1], strides = [1, 1]} : vector<4x36xf32> to vector<4x1xf32>
    %156 = vector.extract_strided_slice %1 {offsets = [2, 0], sizes = [1, 512], strides = [1, 1]} : vector<4x512xf32> to vector<1x512xf32>
    %157 = vector.broadcast %155 : vector<4x1xf32> to vector<4x512xf32>
    %158 = vector.broadcast %156 : vector<1x512xf32> to vector<4x512xf32>
    %159 = arith.mulf %157, %158 : vector<4x512xf32>
    %160 = arith.addf %154, %159 : vector<4x512xf32>
    %161 = vector.extract_strided_slice %43 {offsets = [0, 19], sizes = [4, 1], strides = [1, 1]} : vector<4x36xf32> to vector<4x1xf32>
    %162 = vector.extract_strided_slice %1 {offsets = [3, 0], sizes = [1, 512], strides = [1, 1]} : vector<4x512xf32> to vector<1x512xf32>
    %163 = vector.broadcast %161 : vector<4x1xf32> to vector<4x512xf32>
    %164 = vector.broadcast %162 : vector<1x512xf32> to vector<4x512xf32>
    %165 = arith.mulf %163, %164 : vector<4x512xf32>
    %166 = arith.addf %160, %165 : vector<4x512xf32>
    %167 = vector.extract_strided_slice %43 {offsets = [0, 20], sizes = [4, 1], strides = [1, 1]} : vector<4x36xf32> to vector<4x1xf32>
    %168 = vector.extract_strided_slice %27 {offsets = [0, 0], sizes = [1, 512], strides = [1, 1]} : vector<4x512xf32> to vector<1x512xf32>
    %169 = vector.broadcast %167 : vector<4x1xf32> to vector<4x512xf32>
    %170 = vector.broadcast %168 : vector<1x512xf32> to vector<4x512xf32>
    %171 = arith.mulf %169, %170 : vector<4x512xf32>
    %172 = arith.addf %166, %171 : vector<4x512xf32>
    %173 = vector.extract_strided_slice %43 {offsets = [0, 21], sizes = [4, 1], strides = [1, 1]} : vector<4x36xf32> to vector<4x1xf32>
    %174 = vector.extract_strided_slice %27 {offsets = [1, 0], sizes = [1, 512], strides = [1, 1]} : vector<4x512xf32> to vector<1x512xf32>
    %175 = vector.broadcast %173 : vector<4x1xf32> to vector<4x512xf32>
    %176 = vector.broadcast %174 : vector<1x512xf32> to vector<4x512xf32>
    %177 = arith.mulf %175, %176 : vector<4x512xf32>
    %178 = arith.addf %172, %177 : vector<4x512xf32>
    %179 = vector.extract_strided_slice %43 {offsets = [0, 22], sizes = [4, 1], strides = [1, 1]} : vector<4x36xf32> to vector<4x1xf32>
    %180 = vector.extract_strided_slice %27 {offsets = [2, 0], sizes = [1, 512], strides = [1, 1]} : vector<4x512xf32> to vector<1x512xf32>
    %181 = vector.broadcast %179 : vector<4x1xf32> to vector<4x512xf32>
    %182 = vector.broadcast %180 : vector<1x512xf32> to vector<4x512xf32>
    %183 = arith.mulf %181, %182 : vector<4x512xf32>
    %184 = arith.addf %178, %183 : vector<4x512xf32>
    %185 = vector.extract_strided_slice %43 {offsets = [0, 23], sizes = [4, 1], strides = [1, 1]} : vector<4x36xf32> to vector<4x1xf32>
    %186 = vector.extract_strided_slice %27 {offsets = [3, 0], sizes = [1, 512], strides = [1, 1]} : vector<4x512xf32> to vector<1x512xf32>
    %187 = vector.broadcast %185 : vector<4x1xf32> to vector<4x512xf32>
    %188 = vector.broadcast %186 : vector<1x512xf32> to vector<4x512xf32>
    %189 = arith.mulf %187, %188 : vector<4x512xf32>
    %190 = arith.addf %184, %189 : vector<4x512xf32>
    %191 = vector.extract_strided_slice %43 {offsets = [0, 24], sizes = [4, 1], strides = [1, 1]} : vector<4x36xf32> to vector<4x1xf32>
    %192 = vector.extract_strided_slice %32 {offsets = [0, 0], sizes = [1, 512], strides = [1, 1]} : vector<4x512xf32> to vector<1x512xf32>
    %193 = vector.broadcast %191 : vector<4x1xf32> to vector<4x512xf32>
    %194 = vector.broadcast %192 : vector<1x512xf32> to vector<4x512xf32>
    %195 = arith.mulf %193, %194 : vector<4x512xf32>
    %196 = arith.addf %190, %195 : vector<4x512xf32>
    %197 = vector.extract_strided_slice %43 {offsets = [0, 25], sizes = [4, 1], strides = [1, 1]} : vector<4x36xf32> to vector<4x1xf32>
    %198 = vector.extract_strided_slice %32 {offsets = [1, 0], sizes = [1, 512], strides = [1, 1]} : vector<4x512xf32> to vector<1x512xf32>
    %199 = vector.broadcast %197 : vector<4x1xf32> to vector<4x512xf32>
    %200 = vector.broadcast %198 : vector<1x512xf32> to vector<4x512xf32>
    %201 = arith.mulf %199, %200 : vector<4x512xf32>
    %202 = arith.addf %196, %201 : vector<4x512xf32>
    %203 = vector.extract_strided_slice %43 {offsets = [0, 26], sizes = [4, 1], strides = [1, 1]} : vector<4x36xf32> to vector<4x1xf32>
    %204 = vector.extract_strided_slice %32 {offsets = [2, 0], sizes = [1, 512], strides = [1, 1]} : vector<4x512xf32> to vector<1x512xf32>
    %205 = vector.broadcast %203 : vector<4x1xf32> to vector<4x512xf32>
    %206 = vector.broadcast %204 : vector<1x512xf32> to vector<4x512xf32>
    %207 = arith.mulf %205, %206 : vector<4x512xf32>
    %208 = arith.addf %202, %207 : vector<4x512xf32>
    %209 = vector.extract_strided_slice %43 {offsets = [0, 27], sizes = [4, 1], strides = [1, 1]} : vector<4x36xf32> to vector<4x1xf32>
    %210 = vector.extract_strided_slice %32 {offsets = [3, 0], sizes = [1, 512], strides = [1, 1]} : vector<4x512xf32> to vector<1x512xf32>
    %211 = vector.broadcast %209 : vector<4x1xf32> to vector<4x512xf32>
    %212 = vector.broadcast %210 : vector<1x512xf32> to vector<4x512xf32>
    %213 = arith.mulf %211, %212 : vector<4x512xf32>
    %214 = arith.addf %208, %213 : vector<4x512xf32>
    %215 = vector.extract_strided_slice %43 {offsets = [0, 28], sizes = [4, 1], strides = [1, 1]} : vector<4x36xf32> to vector<4x1xf32>
    %216 = vector.extract_strided_slice %37 {offsets = [0, 0], sizes = [1, 512], strides = [1, 1]} : vector<4x512xf32> to vector<1x512xf32>
    %217 = vector.broadcast %215 : vector<4x1xf32> to vector<4x512xf32>
    %218 = vector.broadcast %216 : vector<1x512xf32> to vector<4x512xf32>
    %219 = arith.mulf %217, %218 : vector<4x512xf32>
    %220 = arith.addf %214, %219 : vector<4x512xf32>
    %221 = vector.extract_strided_slice %43 {offsets = [0, 29], sizes = [4, 1], strides = [1, 1]} : vector<4x36xf32> to vector<4x1xf32>
    %222 = vector.extract_strided_slice %37 {offsets = [1, 0], sizes = [1, 512], strides = [1, 1]} : vector<4x512xf32> to vector<1x512xf32>
    %223 = vector.broadcast %221 : vector<4x1xf32> to vector<4x512xf32>
    %224 = vector.broadcast %222 : vector<1x512xf32> to vector<4x512xf32>
    %225 = arith.mulf %223, %224 : vector<4x512xf32>
    %226 = arith.addf %220, %225 : vector<4x512xf32>
    %227 = vector.extract_strided_slice %43 {offsets = [0, 30], sizes = [4, 1], strides = [1, 1]} : vector<4x36xf32> to vector<4x1xf32>
    %228 = vector.extract_strided_slice %37 {offsets = [2, 0], sizes = [1, 512], strides = [1, 1]} : vector<4x512xf32> to vector<1x512xf32>
    %229 = vector.broadcast %227 : vector<4x1xf32> to vector<4x512xf32>
    %230 = vector.broadcast %228 : vector<1x512xf32> to vector<4x512xf32>
    %231 = arith.mulf %229, %230 : vector<4x512xf32>
    %232 = arith.addf %226, %231 : vector<4x512xf32>
    %233 = vector.extract_strided_slice %43 {offsets = [0, 31], sizes = [4, 1], strides = [1, 1]} : vector<4x36xf32> to vector<4x1xf32>
    %234 = vector.extract_strided_slice %37 {offsets = [3, 0], sizes = [1, 512], strides = [1, 1]} : vector<4x512xf32> to vector<1x512xf32>
    %235 = vector.broadcast %233 : vector<4x1xf32> to vector<4x512xf32>
    %236 = vector.broadcast %234 : vector<1x512xf32> to vector<4x512xf32>
    %237 = arith.mulf %235, %236 : vector<4x512xf32>
    %238 = arith.addf %232, %237 : vector<4x512xf32>
    %239 = vector.extract_strided_slice %43 {offsets = [0, 32], sizes = [4, 1], strides = [1, 1]} : vector<4x36xf32> to vector<4x1xf32>
    %240 = vector.extract_strided_slice %42 {offsets = [0, 0], sizes = [1, 512], strides = [1, 1]} : vector<4x512xf32> to vector<1x512xf32>
    %241 = vector.broadcast %239 : vector<4x1xf32> to vector<4x512xf32>
    %242 = vector.broadcast %240 : vector<1x512xf32> to vector<4x512xf32>
    %243 = arith.mulf %241, %242 : vector<4x512xf32>
    %244 = arith.addf %238, %243 : vector<4x512xf32>
    %245 = vector.extract_strided_slice %43 {offsets = [0, 33], sizes = [4, 1], strides = [1, 1]} : vector<4x36xf32> to vector<4x1xf32>
    %246 = vector.extract_strided_slice %42 {offsets = [1, 0], sizes = [1, 512], strides = [1, 1]} : vector<4x512xf32> to vector<1x512xf32>
    %247 = vector.broadcast %245 : vector<4x1xf32> to vector<4x512xf32>
    %248 = vector.broadcast %246 : vector<1x512xf32> to vector<4x512xf32>
    %249 = arith.mulf %247, %248 : vector<4x512xf32>
    %250 = arith.addf %244, %249 : vector<4x512xf32>
    %251 = vector.extract_strided_slice %43 {offsets = [0, 34], sizes = [4, 1], strides = [1, 1]} : vector<4x36xf32> to vector<4x1xf32>
    %252 = vector.extract_strided_slice %42 {offsets = [2, 0], sizes = [1, 512], strides = [1, 1]} : vector<4x512xf32> to vector<1x512xf32>
    %253 = vector.broadcast %251 : vector<4x1xf32> to vector<4x512xf32>
    %254 = vector.broadcast %252 : vector<1x512xf32> to vector<4x512xf32>
    %255 = arith.mulf %253, %254 : vector<4x512xf32>
    %256 = arith.addf %250, %255 : vector<4x512xf32>
    %257 = vector.extract_strided_slice %43 {offsets = [0, 35], sizes = [4, 1], strides = [1, 1]} : vector<4x36xf32> to vector<4x1xf32>
    %258 = vector.extract_strided_slice %42 {offsets = [3, 0], sizes = [1, 512], strides = [1, 1]} : vector<4x512xf32> to vector<1x512xf32>
    %259 = vector.broadcast %257 : vector<4x1xf32> to vector<4x512xf32>
    %260 = vector.broadcast %258 : vector<1x512xf32> to vector<4x512xf32>
    %261 = arith.mulf %259, %260 : vector<4x512xf32>
    %262 = arith.addf %256, %261 : vector<4x512xf32>
    %263 = arith.negf %262 : vector<4x512xf32>
    %264 = math.exp %263 : vector<4x512xf32>
    %cst = arith.constant 1.000000e+00 : f32
    %265 = vector.broadcast %cst : f32 to vector<4x512xf32>
    %266 = arith.addf %265, %264 : vector<4x512xf32>
    %267 = arith.divf %265, %266 : vector<4x512xf32>
    %268 = arith.mulf %262, %267 : vector<4x512xf32>
    %c17_i32_9 = arith.constant 17 : i32
    %269 = tpu.dynamic_rotate %268 by %c17_i32_9 dim 1 : vector<4x512xf32>, i32 -> vector<4x512xf32>
    %270 = vector.extract_strided_slice %2 {offsets = [0, 0, 0], sizes = [1, 1, 512], strides = [1, 1, 1]} : vector<9x1x512xf32> to vector<1x1x512xf32>
    %271 = vector.shape_cast %270 : vector<1x1x512xf32> to vector<1x512xf32>
    %272 = vector.broadcast %271 : vector<1x512xf32> to vector<4x512xf32>
    %273 = arith.mulf %269, %272 : vector<4x512xf32>
    %c16_i32_10 = arith.constant 16 : i32
    %274 = tpu.dynamic_rotate %268 by %c16_i32_10 dim 1 : vector<4x512xf32>, i32 -> vector<4x512xf32>
    %275 = vector.extract_strided_slice %2 {offsets = [1, 0, 0], sizes = [1, 1, 512], strides = [1, 1, 1]} : vector<9x1x512xf32> to vector<1x1x512xf32>
    %276 = vector.shape_cast %275 : vector<1x1x512xf32> to vector<1x512xf32>
    %277 = vector.broadcast %276 : vector<1x512xf32> to vector<4x512xf32>
    %278 = arith.mulf %274, %277 : vector<4x512xf32>
    %c15_i32_11 = arith.constant 15 : i32
    %279 = tpu.dynamic_rotate %268 by %c15_i32_11 dim 1 : vector<4x512xf32>, i32 -> vector<4x512xf32>
    %280 = vector.extract_strided_slice %2 {offsets = [2, 0, 0], sizes = [1, 1, 512], strides = [1, 1, 1]} : vector<9x1x512xf32> to vector<1x1x512xf32>
    %281 = vector.shape_cast %280 : vector<1x1x512xf32> to vector<1x512xf32>
    %282 = vector.broadcast %281 : vector<1x512xf32> to vector<4x512xf32>
    %283 = arith.mulf %279, %282 : vector<4x512xf32>
    %c1_i32_12 = arith.constant 1 : i32
    %284 = tpu.dynamic_rotate %268 by %c1_i32_12 dim 1 : vector<4x512xf32>, i32 -> vector<4x512xf32>
    %285 = vector.extract_strided_slice %2 {offsets = [3, 0, 0], sizes = [1, 1, 512], strides = [1, 1, 1]} : vector<9x1x512xf32> to vector<1x1x512xf32>
    %286 = vector.shape_cast %285 : vector<1x1x512xf32> to vector<1x512xf32>
    %287 = vector.broadcast %286 : vector<1x512xf32> to vector<4x512xf32>
    %288 = arith.mulf %284, %287 : vector<4x512xf32>
    %c511_i32_13 = arith.constant 511 : i32
    %289 = tpu.dynamic_rotate %268 by %c511_i32_13 dim 1 : vector<4x512xf32>, i32 -> vector<4x512xf32>
    %290 = vector.extract_strided_slice %2 {offsets = [5, 0, 0], sizes = [1, 1, 512], strides = [1, 1, 1]} : vector<9x1x512xf32> to vector<1x1x512xf32>
    %291 = vector.shape_cast %290 : vector<1x1x512xf32> to vector<1x512xf32>
    %292 = vector.broadcast %291 : vector<1x512xf32> to vector<4x512xf32>
    %293 = arith.mulf %289, %292 : vector<4x512xf32>
    %c497_i32_14 = arith.constant 497 : i32
    %294 = tpu.dynamic_rotate %268 by %c497_i32_14 dim 1 : vector<4x512xf32>, i32 -> vector<4x512xf32>
    %295 = vector.extract_strided_slice %2 {offsets = [6, 0, 0], sizes = [1, 1, 512], strides = [1, 1, 1]} : vector<9x1x512xf32> to vector<1x1x512xf32>
    %296 = vector.shape_cast %295 : vector<1x1x512xf32> to vector<1x512xf32>
    %297 = vector.broadcast %296 : vector<1x512xf32> to vector<4x512xf32>
    %298 = arith.mulf %294, %297 : vector<4x512xf32>
    %c496_i32_15 = arith.constant 496 : i32
    %299 = tpu.dynamic_rotate %268 by %c496_i32_15 dim 1 : vector<4x512xf32>, i32 -> vector<4x512xf32>
    %300 = vector.extract_strided_slice %2 {offsets = [7, 0, 0], sizes = [1, 1, 512], strides = [1, 1, 1]} : vector<9x1x512xf32> to vector<1x1x512xf32>
    %301 = vector.shape_cast %300 : vector<1x1x512xf32> to vector<1x512xf32>
    %302 = vector.broadcast %301 : vector<1x512xf32> to vector<4x512xf32>
    %303 = arith.mulf %299, %302 : vector<4x512xf32>
    %c495_i32_16 = arith.constant 495 : i32
    %304 = tpu.dynamic_rotate %268 by %c495_i32_16 dim 1 : vector<4x512xf32>, i32 -> vector<4x512xf32>
    %305 = vector.extract_strided_slice %2 {offsets = [8, 0, 0], sizes = [1, 1, 512], strides = [1, 1, 1]} : vector<9x1x512xf32> to vector<1x1x512xf32>
    %306 = vector.shape_cast %305 : vector<1x1x512xf32> to vector<1x512xf32>
    %307 = vector.broadcast %306 : vector<1x512xf32> to vector<4x512xf32>
    %308 = arith.mulf %304, %307 : vector<4x512xf32>
    %c0_17 = arith.constant 0 : index
    %c0_18 = arith.constant 0 : index
    %309 = vector.load %arg5[%c0_17, %c0_18] : memref<4x36xf32, #tpu.memory_space<vmem>>, vector<4x36xf32>
    %c0_19 = arith.constant 0 : index
    %c0_20 = arith.constant 0 : index
    %310 = vector.load %arg6[%c0_19, %c0_20] : memref<4x1xf32, #tpu.memory_space<vmem>>, vector<4x1xf32>
    %311 = vector.shape_cast %310 : vector<4x1xf32> to vector<4x1xf32>
    %312 = vector.broadcast %311 : vector<4x1xf32> to vector<4x512xf32>
    %313 = vector.extract_strided_slice %309 {offsets = [0, 0], sizes = [4, 1], strides = [1, 1]} : vector<4x36xf32> to vector<4x1xf32>
    %314 = vector.extract_strided_slice %273 {offsets = [0, 0], sizes = [1, 512], strides = [1, 1]} : vector<4x512xf32> to vector<1x512xf32>
    %315 = vector.broadcast %313 : vector<4x1xf32> to vector<4x512xf32>
    %316 = vector.broadcast %314 : vector<1x512xf32> to vector<4x512xf32>
    %317 = arith.mulf %315, %316 : vector<4x512xf32>
    %318 = arith.addf %312, %317 : vector<4x512xf32>
    %319 = vector.extract_strided_slice %309 {offsets = [0, 1], sizes = [4, 1], strides = [1, 1]} : vector<4x36xf32> to vector<4x1xf32>
    %320 = vector.extract_strided_slice %273 {offsets = [1, 0], sizes = [1, 512], strides = [1, 1]} : vector<4x512xf32> to vector<1x512xf32>
    %321 = vector.broadcast %319 : vector<4x1xf32> to vector<4x512xf32>
    %322 = vector.broadcast %320 : vector<1x512xf32> to vector<4x512xf32>
    %323 = arith.mulf %321, %322 : vector<4x512xf32>
    %324 = arith.addf %318, %323 : vector<4x512xf32>
    %325 = vector.extract_strided_slice %309 {offsets = [0, 2], sizes = [4, 1], strides = [1, 1]} : vector<4x36xf32> to vector<4x1xf32>
    %326 = vector.extract_strided_slice %273 {offsets = [2, 0], sizes = [1, 512], strides = [1, 1]} : vector<4x512xf32> to vector<1x512xf32>
    %327 = vector.broadcast %325 : vector<4x1xf32> to vector<4x512xf32>
    %328 = vector.broadcast %326 : vector<1x512xf32> to vector<4x512xf32>
    %329 = arith.mulf %327, %328 : vector<4x512xf32>
    %330 = arith.addf %324, %329 : vector<4x512xf32>
    %331 = vector.extract_strided_slice %309 {offsets = [0, 3], sizes = [4, 1], strides = [1, 1]} : vector<4x36xf32> to vector<4x1xf32>
    %332 = vector.extract_strided_slice %273 {offsets = [3, 0], sizes = [1, 512], strides = [1, 1]} : vector<4x512xf32> to vector<1x512xf32>
    %333 = vector.broadcast %331 : vector<4x1xf32> to vector<4x512xf32>
    %334 = vector.broadcast %332 : vector<1x512xf32> to vector<4x512xf32>
    %335 = arith.mulf %333, %334 : vector<4x512xf32>
    %336 = arith.addf %330, %335 : vector<4x512xf32>
    %337 = vector.extract_strided_slice %309 {offsets = [0, 4], sizes = [4, 1], strides = [1, 1]} : vector<4x36xf32> to vector<4x1xf32>
    %338 = vector.extract_strided_slice %278 {offsets = [0, 0], sizes = [1, 512], strides = [1, 1]} : vector<4x512xf32> to vector<1x512xf32>
    %339 = vector.broadcast %337 : vector<4x1xf32> to vector<4x512xf32>
    %340 = vector.broadcast %338 : vector<1x512xf32> to vector<4x512xf32>
    %341 = arith.mulf %339, %340 : vector<4x512xf32>
    %342 = arith.addf %336, %341 : vector<4x512xf32>
    %343 = vector.extract_strided_slice %309 {offsets = [0, 5], sizes = [4, 1], strides = [1, 1]} : vector<4x36xf32> to vector<4x1xf32>
    %344 = vector.extract_strided_slice %278 {offsets = [1, 0], sizes = [1, 512], strides = [1, 1]} : vector<4x512xf32> to vector<1x512xf32>
    %345 = vector.broadcast %343 : vector<4x1xf32> to vector<4x512xf32>
    %346 = vector.broadcast %344 : vector<1x512xf32> to vector<4x512xf32>
    %347 = arith.mulf %345, %346 : vector<4x512xf32>
    %348 = arith.addf %342, %347 : vector<4x512xf32>
    %349 = vector.extract_strided_slice %309 {offsets = [0, 6], sizes = [4, 1], strides = [1, 1]} : vector<4x36xf32> to vector<4x1xf32>
    %350 = vector.extract_strided_slice %278 {offsets = [2, 0], sizes = [1, 512], strides = [1, 1]} : vector<4x512xf32> to vector<1x512xf32>
    %351 = vector.broadcast %349 : vector<4x1xf32> to vector<4x512xf32>
    %352 = vector.broadcast %350 : vector<1x512xf32> to vector<4x512xf32>
    %353 = arith.mulf %351, %352 : vector<4x512xf32>
    %354 = arith.addf %348, %353 : vector<4x512xf32>
    %355 = vector.extract_strided_slice %309 {offsets = [0, 7], sizes = [4, 1], strides = [1, 1]} : vector<4x36xf32> to vector<4x1xf32>
    %356 = vector.extract_strided_slice %278 {offsets = [3, 0], sizes = [1, 512], strides = [1, 1]} : vector<4x512xf32> to vector<1x512xf32>
    %357 = vector.broadcast %355 : vector<4x1xf32> to vector<4x512xf32>
    %358 = vector.broadcast %356 : vector<1x512xf32> to vector<4x512xf32>
    %359 = arith.mulf %357, %358 : vector<4x512xf32>
    %360 = arith.addf %354, %359 : vector<4x512xf32>
    %361 = vector.extract_strided_slice %309 {offsets = [0, 8], sizes = [4, 1], strides = [1, 1]} : vector<4x36xf32> to vector<4x1xf32>
    %362 = vector.extract_strided_slice %283 {offsets = [0, 0], sizes = [1, 512], strides = [1, 1]} : vector<4x512xf32> to vector<1x512xf32>
    %363 = vector.broadcast %361 : vector<4x1xf32> to vector<4x512xf32>
    %364 = vector.broadcast %362 : vector<1x512xf32> to vector<4x512xf32>
    %365 = arith.mulf %363, %364 : vector<4x512xf32>
    %366 = arith.addf %360, %365 : vector<4x512xf32>
    %367 = vector.extract_strided_slice %309 {offsets = [0, 9], sizes = [4, 1], strides = [1, 1]} : vector<4x36xf32> to vector<4x1xf32>
    %368 = vector.extract_strided_slice %283 {offsets = [1, 0], sizes = [1, 512], strides = [1, 1]} : vector<4x512xf32> to vector<1x512xf32>
    %369 = vector.broadcast %367 : vector<4x1xf32> to vector<4x512xf32>
    %370 = vector.broadcast %368 : vector<1x512xf32> to vector<4x512xf32>
    %371 = arith.mulf %369, %370 : vector<4x512xf32>
    %372 = arith.addf %366, %371 : vector<4x512xf32>
    %373 = vector.extract_strided_slice %309 {offsets = [0, 10], sizes = [4, 1], strides = [1, 1]} : vector<4x36xf32> to vector<4x1xf32>
    %374 = vector.extract_strided_slice %283 {offsets = [2, 0], sizes = [1, 512], strides = [1, 1]} : vector<4x512xf32> to vector<1x512xf32>
    %375 = vector.broadcast %373 : vector<4x1xf32> to vector<4x512xf32>
    %376 = vector.broadcast %374 : vector<1x512xf32> to vector<4x512xf32>
    %377 = arith.mulf %375, %376 : vector<4x512xf32>
    %378 = arith.addf %372, %377 : vector<4x512xf32>
    %379 = vector.extract_strided_slice %309 {offsets = [0, 11], sizes = [4, 1], strides = [1, 1]} : vector<4x36xf32> to vector<4x1xf32>
    %380 = vector.extract_strided_slice %283 {offsets = [3, 0], sizes = [1, 512], strides = [1, 1]} : vector<4x512xf32> to vector<1x512xf32>
    %381 = vector.broadcast %379 : vector<4x1xf32> to vector<4x512xf32>
    %382 = vector.broadcast %380 : vector<1x512xf32> to vector<4x512xf32>
    %383 = arith.mulf %381, %382 : vector<4x512xf32>
    %384 = arith.addf %378, %383 : vector<4x512xf32>
    %385 = vector.extract_strided_slice %309 {offsets = [0, 12], sizes = [4, 1], strides = [1, 1]} : vector<4x36xf32> to vector<4x1xf32>
    %386 = vector.extract_strided_slice %288 {offsets = [0, 0], sizes = [1, 512], strides = [1, 1]} : vector<4x512xf32> to vector<1x512xf32>
    %387 = vector.broadcast %385 : vector<4x1xf32> to vector<4x512xf32>
    %388 = vector.broadcast %386 : vector<1x512xf32> to vector<4x512xf32>
    %389 = arith.mulf %387, %388 : vector<4x512xf32>
    %390 = arith.addf %384, %389 : vector<4x512xf32>
    %391 = vector.extract_strided_slice %309 {offsets = [0, 13], sizes = [4, 1], strides = [1, 1]} : vector<4x36xf32> to vector<4x1xf32>
    %392 = vector.extract_strided_slice %288 {offsets = [1, 0], sizes = [1, 512], strides = [1, 1]} : vector<4x512xf32> to vector<1x512xf32>
    %393 = vector.broadcast %391 : vector<4x1xf32> to vector<4x512xf32>
    %394 = vector.broadcast %392 : vector<1x512xf32> to vector<4x512xf32>
    %395 = arith.mulf %393, %394 : vector<4x512xf32>
    %396 = arith.addf %390, %395 : vector<4x512xf32>
    %397 = vector.extract_strided_slice %309 {offsets = [0, 14], sizes = [4, 1], strides = [1, 1]} : vector<4x36xf32> to vector<4x1xf32>
    %398 = vector.extract_strided_slice %288 {offsets = [2, 0], sizes = [1, 512], strides = [1, 1]} : vector<4x512xf32> to vector<1x512xf32>
    %399 = vector.broadcast %397 : vector<4x1xf32> to vector<4x512xf32>
    %400 = vector.broadcast %398 : vector<1x512xf32> to vector<4x512xf32>
    %401 = arith.mulf %399, %400 : vector<4x512xf32>
    %402 = arith.addf %396, %401 : vector<4x512xf32>
    %403 = vector.extract_strided_slice %309 {offsets = [0, 15], sizes = [4, 1], strides = [1, 1]} : vector<4x36xf32> to vector<4x1xf32>
    %404 = vector.extract_strided_slice %288 {offsets = [3, 0], sizes = [1, 512], strides = [1, 1]} : vector<4x512xf32> to vector<1x512xf32>
    %405 = vector.broadcast %403 : vector<4x1xf32> to vector<4x512xf32>
    %406 = vector.broadcast %404 : vector<1x512xf32> to vector<4x512xf32>
    %407 = arith.mulf %405, %406 : vector<4x512xf32>
    %408 = arith.addf %402, %407 : vector<4x512xf32>
    %409 = vector.extract_strided_slice %309 {offsets = [0, 16], sizes = [4, 1], strides = [1, 1]} : vector<4x36xf32> to vector<4x1xf32>
    %410 = vector.extract_strided_slice %268 {offsets = [0, 0], sizes = [1, 512], strides = [1, 1]} : vector<4x512xf32> to vector<1x512xf32>
    %411 = vector.broadcast %409 : vector<4x1xf32> to vector<4x512xf32>
    %412 = vector.broadcast %410 : vector<1x512xf32> to vector<4x512xf32>
    %413 = arith.mulf %411, %412 : vector<4x512xf32>
    %414 = arith.addf %408, %413 : vector<4x512xf32>
    %415 = vector.extract_strided_slice %309 {offsets = [0, 17], sizes = [4, 1], strides = [1, 1]} : vector<4x36xf32> to vector<4x1xf32>
    %416 = vector.extract_strided_slice %268 {offsets = [1, 0], sizes = [1, 512], strides = [1, 1]} : vector<4x512xf32> to vector<1x512xf32>
    %417 = vector.broadcast %415 : vector<4x1xf32> to vector<4x512xf32>
    %418 = vector.broadcast %416 : vector<1x512xf32> to vector<4x512xf32>
    %419 = arith.mulf %417, %418 : vector<4x512xf32>
    %420 = arith.addf %414, %419 : vector<4x512xf32>
    %421 = vector.extract_strided_slice %309 {offsets = [0, 18], sizes = [4, 1], strides = [1, 1]} : vector<4x36xf32> to vector<4x1xf32>
    %422 = vector.extract_strided_slice %268 {offsets = [2, 0], sizes = [1, 512], strides = [1, 1]} : vector<4x512xf32> to vector<1x512xf32>
    %423 = vector.broadcast %421 : vector<4x1xf32> to vector<4x512xf32>
    %424 = vector.broadcast %422 : vector<1x512xf32> to vector<4x512xf32>
    %425 = arith.mulf %423, %424 : vector<4x512xf32>
    %426 = arith.addf %420, %425 : vector<4x512xf32>
    %427 = vector.extract_strided_slice %309 {offsets = [0, 19], sizes = [4, 1], strides = [1, 1]} : vector<4x36xf32> to vector<4x1xf32>
    %428 = vector.extract_strided_slice %268 {offsets = [3, 0], sizes = [1, 512], strides = [1, 1]} : vector<4x512xf32> to vector<1x512xf32>
    %429 = vector.broadcast %427 : vector<4x1xf32> to vector<4x512xf32>
    %430 = vector.broadcast %428 : vector<1x512xf32> to vector<4x512xf32>
    %431 = arith.mulf %429, %430 : vector<4x512xf32>
    %432 = arith.addf %426, %431 : vector<4x512xf32>
    %433 = vector.extract_strided_slice %309 {offsets = [0, 20], sizes = [4, 1], strides = [1, 1]} : vector<4x36xf32> to vector<4x1xf32>
    %434 = vector.extract_strided_slice %293 {offsets = [0, 0], sizes = [1, 512], strides = [1, 1]} : vector<4x512xf32> to vector<1x512xf32>
    %435 = vector.broadcast %433 : vector<4x1xf32> to vector<4x512xf32>
    %436 = vector.broadcast %434 : vector<1x512xf32> to vector<4x512xf32>
    %437 = arith.mulf %435, %436 : vector<4x512xf32>
    %438 = arith.addf %432, %437 : vector<4x512xf32>
    %439 = vector.extract_strided_slice %309 {offsets = [0, 21], sizes = [4, 1], strides = [1, 1]} : vector<4x36xf32> to vector<4x1xf32>
    %440 = vector.extract_strided_slice %293 {offsets = [1, 0], sizes = [1, 512], strides = [1, 1]} : vector<4x512xf32> to vector<1x512xf32>
    %441 = vector.broadcast %439 : vector<4x1xf32> to vector<4x512xf32>
    %442 = vector.broadcast %440 : vector<1x512xf32> to vector<4x512xf32>
    %443 = arith.mulf %441, %442 : vector<4x512xf32>
    %444 = arith.addf %438, %443 : vector<4x512xf32>
    %445 = vector.extract_strided_slice %309 {offsets = [0, 22], sizes = [4, 1], strides = [1, 1]} : vector<4x36xf32> to vector<4x1xf32>
    %446 = vector.extract_strided_slice %293 {offsets = [2, 0], sizes = [1, 512], strides = [1, 1]} : vector<4x512xf32> to vector<1x512xf32>
    %447 = vector.broadcast %445 : vector<4x1xf32> to vector<4x512xf32>
    %448 = vector.broadcast %446 : vector<1x512xf32> to vector<4x512xf32>
    %449 = arith.mulf %447, %448 : vector<4x512xf32>
    %450 = arith.addf %444, %449 : vector<4x512xf32>
    %451 = vector.extract_strided_slice %309 {offsets = [0, 23], sizes = [4, 1], strides = [1, 1]} : vector<4x36xf32> to vector<4x1xf32>
    %452 = vector.extract_strided_slice %293 {offsets = [3, 0], sizes = [1, 512], strides = [1, 1]} : vector<4x512xf32> to vector<1x512xf32>
    %453 = vector.broadcast %451 : vector<4x1xf32> to vector<4x512xf32>
    %454 = vector.broadcast %452 : vector<1x512xf32> to vector<4x512xf32>
    %455 = arith.mulf %453, %454 : vector<4x512xf32>
    %456 = arith.addf %450, %455 : vector<4x512xf32>
    %457 = vector.extract_strided_slice %309 {offsets = [0, 24], sizes = [4, 1], strides = [1, 1]} : vector<4x36xf32> to vector<4x1xf32>
    %458 = vector.extract_strided_slice %298 {offsets = [0, 0], sizes = [1, 512], strides = [1, 1]} : vector<4x512xf32> to vector<1x512xf32>
    %459 = vector.broadcast %457 : vector<4x1xf32> to vector<4x512xf32>
    %460 = vector.broadcast %458 : vector<1x512xf32> to vector<4x512xf32>
    %461 = arith.mulf %459, %460 : vector<4x512xf32>
    %462 = arith.addf %456, %461 : vector<4x512xf32>
    %463 = vector.extract_strided_slice %309 {offsets = [0, 25], sizes = [4, 1], strides = [1, 1]} : vector<4x36xf32> to vector<4x1xf32>
    %464 = vector.extract_strided_slice %298 {offsets = [1, 0], sizes = [1, 512], strides = [1, 1]} : vector<4x512xf32> to vector<1x512xf32>
    %465 = vector.broadcast %463 : vector<4x1xf32> to vector<4x512xf32>
    %466 = vector.broadcast %464 : vector<1x512xf32> to vector<4x512xf32>
    %467 = arith.mulf %465, %466 : vector<4x512xf32>
    %468 = arith.addf %462, %467 : vector<4x512xf32>
    %469 = vector.extract_strided_slice %309 {offsets = [0, 26], sizes = [4, 1], strides = [1, 1]} : vector<4x36xf32> to vector<4x1xf32>
    %470 = vector.extract_strided_slice %298 {offsets = [2, 0], sizes = [1, 512], strides = [1, 1]} : vector<4x512xf32> to vector<1x512xf32>
    %471 = vector.broadcast %469 : vector<4x1xf32> to vector<4x512xf32>
    %472 = vector.broadcast %470 : vector<1x512xf32> to vector<4x512xf32>
    %473 = arith.mulf %471, %472 : vector<4x512xf32>
    %474 = arith.addf %468, %473 : vector<4x512xf32>
    %475 = vector.extract_strided_slice %309 {offsets = [0, 27], sizes = [4, 1], strides = [1, 1]} : vector<4x36xf32> to vector<4x1xf32>
    %476 = vector.extract_strided_slice %298 {offsets = [3, 0], sizes = [1, 512], strides = [1, 1]} : vector<4x512xf32> to vector<1x512xf32>
    %477 = vector.broadcast %475 : vector<4x1xf32> to vector<4x512xf32>
    %478 = vector.broadcast %476 : vector<1x512xf32> to vector<4x512xf32>
    %479 = arith.mulf %477, %478 : vector<4x512xf32>
    %480 = arith.addf %474, %479 : vector<4x512xf32>
    %481 = vector.extract_strided_slice %309 {offsets = [0, 28], sizes = [4, 1], strides = [1, 1]} : vector<4x36xf32> to vector<4x1xf32>
    %482 = vector.extract_strided_slice %303 {offsets = [0, 0], sizes = [1, 512], strides = [1, 1]} : vector<4x512xf32> to vector<1x512xf32>
    %483 = vector.broadcast %481 : vector<4x1xf32> to vector<4x512xf32>
    %484 = vector.broadcast %482 : vector<1x512xf32> to vector<4x512xf32>
    %485 = arith.mulf %483, %484 : vector<4x512xf32>
    %486 = arith.addf %480, %485 : vector<4x512xf32>
    %487 = vector.extract_strided_slice %309 {offsets = [0, 29], sizes = [4, 1], strides = [1, 1]} : vector<4x36xf32> to vector<4x1xf32>
    %488 = vector.extract_strided_slice %303 {offsets = [1, 0], sizes = [1, 512], strides = [1, 1]} : vector<4x512xf32> to vector<1x512xf32>
    %489 = vector.broadcast %487 : vector<4x1xf32> to vector<4x512xf32>
    %490 = vector.broadcast %488 : vector<1x512xf32> to vector<4x512xf32>
    %491 = arith.mulf %489, %490 : vector<4x512xf32>
    %492 = arith.addf %486, %491 : vector<4x512xf32>
    %493 = vector.extract_strided_slice %309 {offsets = [0, 30], sizes = [4, 1], strides = [1, 1]} : vector<4x36xf32> to vector<4x1xf32>
    %494 = vector.extract_strided_slice %303 {offsets = [2, 0], sizes = [1, 512], strides = [1, 1]} : vector<4x512xf32> to vector<1x512xf32>
    %495 = vector.broadcast %493 : vector<4x1xf32> to vector<4x512xf32>
    %496 = vector.broadcast %494 : vector<1x512xf32> to vector<4x512xf32>
    %497 = arith.mulf %495, %496 : vector<4x512xf32>
    %498 = arith.addf %492, %497 : vector<4x512xf32>
    %499 = vector.extract_strided_slice %309 {offsets = [0, 31], sizes = [4, 1], strides = [1, 1]} : vector<4x36xf32> to vector<4x1xf32>
    %500 = vector.extract_strided_slice %303 {offsets = [3, 0], sizes = [1, 512], strides = [1, 1]} : vector<4x512xf32> to vector<1x512xf32>
    %501 = vector.broadcast %499 : vector<4x1xf32> to vector<4x512xf32>
    %502 = vector.broadcast %500 : vector<1x512xf32> to vector<4x512xf32>
    %503 = arith.mulf %501, %502 : vector<4x512xf32>
    %504 = arith.addf %498, %503 : vector<4x512xf32>
    %505 = vector.extract_strided_slice %309 {offsets = [0, 32], sizes = [4, 1], strides = [1, 1]} : vector<4x36xf32> to vector<4x1xf32>
    %506 = vector.extract_strided_slice %308 {offsets = [0, 0], sizes = [1, 512], strides = [1, 1]} : vector<4x512xf32> to vector<1x512xf32>
    %507 = vector.broadcast %505 : vector<4x1xf32> to vector<4x512xf32>
    %508 = vector.broadcast %506 : vector<1x512xf32> to vector<4x512xf32>
    %509 = arith.mulf %507, %508 : vector<4x512xf32>
    %510 = arith.addf %504, %509 : vector<4x512xf32>
    %511 = vector.extract_strided_slice %309 {offsets = [0, 33], sizes = [4, 1], strides = [1, 1]} : vector<4x36xf32> to vector<4x1xf32>
    %512 = vector.extract_strided_slice %308 {offsets = [1, 0], sizes = [1, 512], strides = [1, 1]} : vector<4x512xf32> to vector<1x512xf32>
    %513 = vector.broadcast %511 : vector<4x1xf32> to vector<4x512xf32>
    %514 = vector.broadcast %512 : vector<1x512xf32> to vector<4x512xf32>
    %515 = arith.mulf %513, %514 : vector<4x512xf32>
    %516 = arith.addf %510, %515 : vector<4x512xf32>
    %517 = vector.extract_strided_slice %309 {offsets = [0, 34], sizes = [4, 1], strides = [1, 1]} : vector<4x36xf32> to vector<4x1xf32>
    %518 = vector.extract_strided_slice %308 {offsets = [2, 0], sizes = [1, 512], strides = [1, 1]} : vector<4x512xf32> to vector<1x512xf32>
    %519 = vector.broadcast %517 : vector<4x1xf32> to vector<4x512xf32>
    %520 = vector.broadcast %518 : vector<1x512xf32> to vector<4x512xf32>
    %521 = arith.mulf %519, %520 : vector<4x512xf32>
    %522 = arith.addf %516, %521 : vector<4x512xf32>
    %523 = vector.extract_strided_slice %309 {offsets = [0, 35], sizes = [4, 1], strides = [1, 1]} : vector<4x36xf32> to vector<4x1xf32>
    %524 = vector.extract_strided_slice %308 {offsets = [3, 0], sizes = [1, 512], strides = [1, 1]} : vector<4x512xf32> to vector<1x512xf32>
    %525 = vector.broadcast %523 : vector<4x1xf32> to vector<4x512xf32>
    %526 = vector.broadcast %524 : vector<1x512xf32> to vector<4x512xf32>
    %527 = arith.mulf %525, %526 : vector<4x512xf32>
    %528 = arith.addf %522, %527 : vector<4x512xf32>
    %529 = arith.negf %528 : vector<4x512xf32>
    %530 = math.exp %529 : vector<4x512xf32>
    %cst_21 = arith.constant 1.000000e+00 : f32
    %531 = vector.broadcast %cst_21 : f32 to vector<4x512xf32>
    %532 = arith.addf %531, %530 : vector<4x512xf32>
    %533 = arith.divf %531, %532 : vector<4x512xf32>
    %534 = arith.mulf %528, %533 : vector<4x512xf32>
    %535 = arith.addf %534, %1 : vector<4x512xf32>
    %c0_22 = arith.constant 0 : index
    %c0_23 = arith.constant 0 : index
    %c0_24 = arith.constant 0 : index
    %536 = vector.load %arg7[%c0_22, %c0_23, %c0_24] : memref<1x4x512xf32, #tpu.memory_space<vmem>>, vector<1x4x512xf32>
    %537 = vector.shape_cast %536 : vector<1x4x512xf32> to vector<4x512xf32>
    %538 = vector.shape_cast %535 : vector<4x512xf32> to vector<1x4x512xf32>
    tpu.vector_store %arg7[%c0_22, %c0_23, %c0_24], %538 {strides = array<i32>} : memref<1x4x512xf32, #tpu.memory_space<vmem>>, vector<1x4x512xf32>,
    return
  }
  func.func @transform_0(%arg0: i32) -> (i32, i32, i32) {
    %c0_i32 = arith.constant 0 : i32
    %c0_i32_0 = arith.constant 0 : i32
    %c0_i32_1 = arith.constant 0 : i32
    return %arg0, %c0_i32, %c0_i32_0 : i32, i32, i32
  }
  func.func @transform_1(%arg0: i32) -> (i32, i32, i32) {
    %c0_i32 = arith.constant 0 : i32
    %c0_i32_0 = arith.constant 0 : i32
    %c0_i32_1 = arith.constant 0 : i32
    %c0_i32_2 = arith.constant 0 : i32
    return %c0_i32, %c0_i32_0, %c0_i32_1 : i32, i32, i32
  }
  func.func @transform_2(%arg0: i32) -> (i32, i32) {
    %c0_i32 = arith.constant 0 : i32
    %c0_i32_0 = arith.constant 0 : i32
    %c0_i32_1 = arith.constant 0 : i32
    return %c0_i32, %c0_i32_0 : i32, i32
  }
  func.func @transform_3(%arg0: i32) -> (i32, i32) {
    %c0_i32 = arith.constant 0 : i32
    %c0_i32_0 = arith.constant 0 : i32
    %c0_i32_1 = arith.constant 0 : i32
    return %c0_i32, %c0_i32_0 : i32, i32
  }
  func.func @transform_4(%arg0: i32) -> (i32, i32) {
    %c0_i32 = arith.constant 0 : i32
    %c0_i32_0 = arith.constant 0 : i32
    %c0_i32_1 = arith.constant 0 : i32
    return %c0_i32, %c0_i32_0 : i32, i32
  }
  func.func @transform_5(%arg0: i32) -> (i32, i32) {
    %c0_i32 = arith.constant 0 : i32
    %c0_i32_0 = arith.constant 0 : i32
    %c0_i32_1 = arith.constant 0 : i32
    return %c0_i32, %c0_i32_0 : i32, i32
  }
  func.func @transform_6(%arg0: i32) -> (i32, i32, i32) {
    %c0_i32 = arith.constant 0 : i32
    %c0_i32_0 = arith.constant 0 : i32
    %c0_i32_1 = arith.constant 0 : i32
    return %arg0, %c0_i32, %c0_i32_0 : i32, i32, i32
  }
}

</mosaic_0001>

<llo_original>
// kernel: bottleneck.1
$region0: #{bottleneck.1}
  #allocation0 [shape = 'u32[]', space=smem, size = 0x4, offset = 0x4, fixed_abs, tag = 'smem constant byte address 0x4 - core index']
  #allocation1 [shape = 'u32[144,128]{1,0:T(1,128)}', space=vmem, size = 0x12000, scoped, tag = 'internal scratch']
  %s0 = inlined_call_operand.vmem [shape: f32[1,4,512], index: 0, kind: input, shape index: {}]
  %s1 = inlined_call_operand.vmem [shape: f32[9,1,512], index: 1, kind: input, shape index: {}]
  %s2 = inlined_call_operand.vmem [shape: f32[4,36], index: 2, kind: input, shape index: {}]
  %s3 = inlined_call_operand.vmem [shape: f32[4,1], index: 3, kind: input, shape index: {}]
  %s4 = inlined_call_operand.vmem [shape: f32[4,36], index: 4, kind: input, shape index: {}]
  %s5 = inlined_call_operand.vmem [shape: f32[4,1], index: 5, kind: input, shape index: {}]
  %s6 = inlined_call_operand.vmem [shape: f32[1,4,512], index: 6, kind: output, shape index: {}]
  %s7 = sld [smem:[#allocation0]]
  $region34: #{bottleneck.1} parent=0
    _
  %s9 = ssub.s32 1, %s7
  %s10 = scalar_select 0, %s9, %s7
  // Predicated region
  $region2: #{bottleneck.1} parent=0 // pred_check
    _
  $region3: #{bottleneck.1} parent=0 // pred_check_branch
    %12 = sbr.rel (0) target = $region5
  $region4: #{bottleneck.1} parent=0 // pred_region
    _
  $region5: #{bottleneck.1} parent=0 // pred_fallthru
    _
  // Predicated region
  $region6: #{bottleneck.1} parent=0 // pred_check
    _
  $region7: #{bottleneck.1} parent=0 // pred_check_branch
    %14 = sbr.rel (0) target = $region9
  $region8: #{bottleneck.1} parent=0 // pred_region
    _
  $region9: #{bottleneck.1} parent=0 // pred_fallthru
    _
  // Predicated region
  $region10: #{bottleneck.1} parent=0 // pred_check
    _
  $region11: #{bottleneck.1} parent=0 // pred_check_branch
    %16 = sbr.rel (0) target = $region13
  $region12: #{bottleneck.1} parent=0 // pred_region
    _
  $region13: #{bottleneck.1} parent=0 // pred_fallthru
    _
  // Predicated region
  $region14: #{bottleneck.1} parent=0 // pred_check
    _
  $region15: #{bottleneck.1} parent=0 // pred_check_branch
    %18 = sbr.rel (0) target = $region17
  $region16: #{bottleneck.1} parent=0 // pred_region
    _
  $region17: #{bottleneck.1} parent=0 // pred_fallthru
    _
  // Predicated region
  $region18: #{bottleneck.1} parent=0 // pred_check
    _
  $region19: #{bottleneck.1} parent=0 // pred_check_branch
    %20 = sbr.rel (0) target = $region21
  $region20: #{bottleneck.1} parent=0 // pred_region
    _
  $region21: #{bottleneck.1} parent=0 // pred_fallthru
    _
  // Predicated region
  $region22: #{bottleneck.1} parent=0 // pred_check
    _
  $region23: #{bottleneck.1} parent=0 // pred_check_branch
    %22 = sbr.rel (0) target = $region25
  $region24: #{bottleneck.1} parent=0 // pred_region
    _
  $region25: #{bottleneck.1} parent=0 // pred_fallthru
    _
  %v23 = vld [vmem:[%s0] sm:$0xff]
  %v24 = vld [vmem:[%s0 + $0x8] sm:$0xff]
  %v25 = vld [vmem:[%s1] sm:$0xf]
  %v26 = vld [vmem:[%s1 + $0x4] sm:$0xf]
  %v27 = vld [vmem:[%s1 + $0x8] sm:$0xf]
  %v28 = vld [vmem:[%s1 + $0xc] sm:$0xf]
  %v29 = vld [vmem:[%s1 + $0x14] sm:$0xf]
  %v30 = vld [vmem:[%s1 + $0x18] sm:$0xf]
  %v31 = vld [vmem:[%s1 + $0x1c] sm:$0xf]
  %v32 = vld [vmem:[%s1 + $0x20] sm:$0xf]
  %v35 = vcombine.high %v23, %v23
  %v36 = vcombine.high %v24, %v24
  %39 = vrot.lane.b32.xlu0 %v23, 17
  %v40 = vpop.permute.xlu0 %39
  %41 = vrot.lane.b32.xlu0 %v35, 17
  %v42 = vpop.permute.xlu0 %41
  %43 = vrot.lane.b32.xlu0 %v24, 17
  %v44 = vpop.permute.xlu0 %43
  %45 = vrot.lane.b32.xlu0 %v36, 17
  %v46 = vpop.permute.xlu0 %45
  %v47 = vlaneseq
  %v48 = vand.u32 %v47, 127
  %vm49 = vcmp.lt.s32.totalorder %v48, 17
  %v50 = vsel %vm49, %v44, %v46
  %v51 = vsel %vm49, %v42, %v44
  %v52 = vsel %vm49, %v40, %v42
  %v53 = vsel %vm49, %v46, %v40
  %v55 = vlaneseq
  %v56 = vshrl.u32 %v55, 7
  %v57 = vsub.s32 0, %v56
  %v58 = vrot.slane %v25, %v57
  %v59 = vlaneseq
  %v60 = vshrl.u32 %v59, 7
  %v61 = vsub.s32 1, %v60
  %v62 = vrot.slane %v25, %v61
  %v63 = vlaneseq
  %v64 = vshrl.u32 %v63, 7
  %v65 = vsub.s32 2, %v64
  %v66 = vrot.slane %v25, %v65
  %v67 = vlaneseq
  %v68 = vshrl.u32 %v67, 7
  %v69 = vsub.s32 3, %v68
  %v70 = vrot.slane %v25, %v69
  %v75 = vmul.f32 %v53, %v58
  %v76 = vmul.f32 %v52, %v62
  %v77 = vmul.f32 %v51, %v66
  %v78 = vmul.f32 %v50, %v70
  %79 = vrot.lane.b32.xlu0 %v23, 16
  %v80 = vpop.permute.xlu0 %79
  %81 = vrot.lane.b32.xlu0 %v35, 16
  %v82 = vpop.permute.xlu0 %81
  %83 = vrot.lane.b32.xlu0 %v24, 16
  %v84 = vpop.permute.xlu0 %83
  %85 = vrot.lane.b32.xlu0 %v36, 16
  %v86 = vpop.permute.xlu0 %85
  %vm87 = vcmp.lt.s32.totalorder %v48, 16
  %v88 = vsel %vm87, %v84, %v86
  %v89 = vsel %vm87, %v82, %v84
  %v90 = vsel %vm87, %v80, %v82
  %v91 = vsel %vm87, %v86, %v80
  %v93 = vlaneseq
  %v94 = vshrl.u32 %v93, 7
  %v95 = vsub.s32 0, %v94
  %v96 = vrot.slane %v26, %v95
  %v97 = vlaneseq
  %v98 = vshrl.u32 %v97, 7
  %v99 = vsub.s32 1, %v98
  %v100 = vrot.slane %v26, %v99
  %v101 = vlaneseq
  %v102 = vshrl.u32 %v101, 7
  %v103 = vsub.s32 2, %v102
  %v104 = vrot.slane %v26, %v103
  %v105 = vlaneseq
  %v106 = vshrl.u32 %v105, 7
  %v107 = vsub.s32 3, %v106
  %v108 = vrot.slane %v26, %v107
  %v113 = vmul.f32 %v91, %v96
  %v114 = vmul.f32 %v90, %v100
  %v115 = vmul.f32 %v89, %v104
  %v116 = vmul.f32 %v88, %v108
  %117 = vrot.lane.b32.xlu0 %v23, 15
  %v118 = vpop.permute.xlu0 %117
  %119 = vrot.lane.b32.xlu0 %v35, 15
  %v120 = vpop.permute.xlu0 %119
  %121 = vrot.lane.b32.xlu0 %v24, 15
  %v122 = vpop.permute.xlu0 %121
  %123 = vrot.lane.b32.xlu0 %v36, 15
  %v124 = vpop.permute.xlu0 %123
  %vm125 = vcmp.lt.s32.totalorder %v48, 15
  %v126 = vsel %vm125, %v122, %v124
  %v127 = vsel %vm125, %v120, %v122
  %v128 = vsel %vm125, %v118, %v120
  %v129 = vsel %vm125, %v124, %v118
  %v131 = vlaneseq
  %v132 = vshrl.u32 %v131, 7
  %v133 = vsub.s32 0, %v132
  %v134 = vrot.slane %v27, %v133
  %v135 = vlaneseq
  %v136 = vshrl.u32 %v135, 7
  %v137 = vsub.s32 1, %v136
  %v138 = vrot.slane %v27, %v137
  %v139 = vlaneseq
  %v140 = vshrl.u32 %v139, 7
  %v141 = vsub.s32 2, %v140
  %v142 = vrot.slane %v27, %v141
  %v143 = vlaneseq
  %v144 = vshrl.u32 %v143, 7
  %v145 = vsub.s32 3, %v144
  %v146 = vrot.slane %v27, %v145
  %v151 = vmul.f32 %v129, %v134
  %v152 = vmul.f32 %v128, %v138
  %v153 = vmul.f32 %v127, %v142
  %v154 = vmul.f32 %v126, %v146
  %155 = vrot.lane.b32.xlu0 %v23, 1
  %v156 = vpop.permute.xlu0 %155
  %157 = vrot.lane.b32.xlu0 %v35, 1
  %v158 = vpop.permute.xlu0 %157
  %159 = vrot.lane.b32.xlu0 %v24, 1
  %v160 = vpop.permute.xlu0 %159
  %161 = vrot.lane.b32.xlu0 %v36, 1
  %v162 = vpop.permute.xlu0 %161
  %vm163 = vcmp.lt.s32.totalorder %v48, 1
  %v164 = vsel %vm163, %v160, %v162
  %v165 = vsel %vm163, %v158, %v160
  %v166 = vsel %vm163, %v156, %v158
  %v167 = vsel %vm163, %v162, %v156
  %v169 = vlaneseq
  %v170 = vshrl.u32 %v169, 7
  %v171 = vsub.s32 0, %v170
  %v172 = vrot.slane %v28, %v171
  %v173 = vlaneseq
  %v174 = vshrl.u32 %v173, 7
  %v175 = vsub.s32 1, %v174
  %v176 = vrot.slane %v28, %v175
  %v177 = vlaneseq
  %v178 = vshrl.u32 %v177, 7
  %v179 = vsub.s32 2, %v178
  %v180 = vrot.slane %v28, %v179
  %v181 = vlaneseq
  %v182 = vshrl.u32 %v181, 7
  %v183 = vsub.s32 3, %v182
  %v184 = vrot.slane %v28, %v183
  %v189 = vmul.f32 %v167, %v172
  %v190 = vmul.f32 %v166, %v176
  %v191 = vmul.f32 %v165, %v180
  %v192 = vmul.f32 %v164, %v184
  %193 = vrot.lane.b32.xlu0 %v23, 127
  %v194 = vpop.permute.xlu0 %193
  %195 = vrot.lane.b32.xlu0 %v35, 127
  %v196 = vpop.permute.xlu0 %195
  %197 = vrot.lane.b32.xlu0 %v24, 127
  %v198 = vpop.permute.xlu0 %197
  %199 = vrot.lane.b32.xlu0 %v36, 127
  %v200 = vpop.permute.xlu0 %199
  %vm201 = vcmp.lt.s32.totalorder %v48, 127
  %v202 = vsel %vm201, %v198, %v200
  %v203 = vsel %vm201, %v196, %v198
  %v204 = vsel %vm201, %v194, %v196
  %v205 = vsel %vm201, %v200, %v194
  %v207 = vlaneseq
  %v208 = vshrl.u32 %v207, 7
  %v209 = vsub.s32 0, %v208
  %v210 = vrot.slane %v29, %v209
  %v211 = vlaneseq
  %v212 = vshrl.u32 %v211, 7
  %v213 = vsub.s32 1, %v212
  %v214 = vrot.slane %v29, %v213
  %v215 = vlaneseq
  %v216 = vshrl.u32 %v215, 7
  %v217 = vsub.s32 2, %v216
  %v218 = vrot.slane %v29, %v217
  %v219 = vlaneseq
  %v220 = vshrl.u32 %v219, 7
  %v221 = vsub.s32 3, %v220
  %v222 = vrot.slane %v29, %v221
  %v227 = vmul.f32 %v204, %v210
  %v228 = vmul.f32 %v203, %v214
  %v229 = vmul.f32 %v202, %v218
  %v230 = vmul.f32 %v205, %v222
  %231 = vrot.lane.b32.xlu0 %v23, 113
  %v232 = vpop.permute.xlu0 %231
  %233 = vrot.lane.b32.xlu0 %v35, 113
  %v234 = vpop.permute.xlu0 %233
  %235 = vrot.lane.b32.xlu0 %v24, 113
  %v236 = vpop.permute.xlu0 %235
  %237 = vrot.lane.b32.xlu0 %v36, 113
  %v238 = vpop.permute.xlu0 %237
  %vm239 = vcmp.lt.s32.totalorder %v48, 113
  %v240 = vsel %vm239, %v236, %v238
  %v241 = vsel %vm239, %v234, %v236
  %v242 = vsel %vm239, %v232, %v234
  %v243 = vsel %vm239, %v238, %v232
  %v245 = vlaneseq
  %v246 = vshrl.u32 %v245, 7
  %v247 = vsub.s32 0, %v246
  %v248 = vrot.slane %v30, %v247
  %v249 = vlaneseq
  %v250 = vshrl.u32 %v249, 7
  %v251 = vsub.s32 1, %v250
  %v252 = vrot.slane %v30, %v251
  %v253 = vlaneseq
  %v254 = vshrl.u32 %v253, 7
  %v255 = vsub.s32 2, %v254
  %v256 = vrot.slane %v30, %v255
  %v257 = vlaneseq
  %v258 = vshrl.u32 %v257, 7
  %v259 = vsub.s32 3, %v258
  %v260 = vrot.slane %v30, %v259
  %v265 = vmul.f32 %v242, %v248
  %v266 = vmul.f32 %v241, %v252
  %v267 = vmul.f32 %v240, %v256
  %v268 = vmul.f32 %v243, %v260
  %269 = vrot.lane.b32.xlu0 %v23, 112
  %v270 = vpop.permute.xlu0 %269
  %271 = vrot.lane.b32.xlu0 %v35, 112
  %v272 = vpop.permute.xlu0 %271
  %273 = vrot.lane.b32.xlu0 %v24, 112
  %v274 = vpop.permute.xlu0 %273
  %275 = vrot.lane.b32.xlu0 %v36, 112
  %v276 = vpop.permute.xlu0 %275
  %vm277 = vcmp.lt.s32.totalorder %v48, 112
  %v278 = vsel %vm277, %v274, %v276
  %v279 = vsel %vm277, %v272, %v274
  %v280 = vsel %vm277, %v270, %v272
  %v281 = vsel %vm277, %v276, %v270
  %v283 = vlaneseq
  %v284 = vshrl.u32 %v283, 7
  %v285 = vsub.s32 0, %v284
  %v286 = vrot.slane %v31, %v285
  %v287 = vlaneseq
  %v288 = vshrl.u32 %v287, 7
  %v289 = vsub.s32 1, %v288
  %v290 = vrot.slane %v31, %v289
  %v291 = vlaneseq
  %v292 = vshrl.u32 %v291, 7
  %v293 = vsub.s32 2, %v292
  %v294 = vrot.slane %v31, %v293
  %v295 = vlaneseq
  %v296 = vshrl.u32 %v295, 7
  %v297 = vsub.s32 3, %v296
  %v298 = vrot.slane %v31, %v297
  %v303 = vmul.f32 %v280, %v286
  %v304 = vmul.f32 %v279, %v290
  %v305 = vmul.f32 %v278, %v294
  %v306 = vmul.f32 %v281, %v298
  %307 = vrot.lane.b32.xlu0 %v23, 111
  %v308 = vpop.permute.xlu0 %307
  %309 = vrot.lane.b32.xlu0 %v35, 111
  %v310 = vpop.permute.xlu0 %309
  %311 = vrot.lane.b32.xlu0 %v24, 111
  %v312 = vpop.permute.xlu0 %311
  %313 = vrot.lane.b32.xlu0 %v36, 111
  %v314 = vpop.permute.xlu0 %313
  %vm315 = vcmp.lt.s32.totalorder %v48, 111
  %v316 = vsel %vm315, %v312, %v314
  %v317 = vsel %vm315, %v310, %v312
  %v318 = vsel %vm315, %v308, %v310
  %v319 = vsel %vm315, %v314, %v308
  %v321 = vlaneseq
  %v322 = vshrl.u32 %v321, 7
  %v323 = vsub.s32 0, %v322
  %v324 = vrot.slane %v32, %v323
  %v325 = vlaneseq
  %v326 = vshrl.u32 %v325, 7
  %v327 = vsub.s32 1, %v326
  %v328 = vrot.slane %v32, %v327
  %v329 = vlaneseq
  %v330 = vshrl.u32 %v329, 7
  %v331 = vsub.s32 2, %v330
  %v332 = vrot.slane %v32, %v331
  %v333 = vlaneseq
  %v334 = vshrl.u32 %v333, 7
  %v335 = vsub.s32 3, %v334
  %v336 = vrot.slane %v32, %v335
  %v341 = vmul.f32 %v318, %v324
  %v342 = vmul.f32 %v317, %v328
  %v343 = vmul.f32 %v316, %v332
  %v344 = vmul.f32 %v319, %v336
  %v345 = vld [vmem:[%s2] sm:$0xf]
  %v346 = vld [vmem:[%s3] sm:$0xf]
  %348 = vset.pattern.permute.xlu0 0
  %349 = vperm.xlu0 %348, %v346
  %v350 = vpop.permute.xlu0 %349
  %353 = vset.pattern.permute.xlu0 0
  %354 = vperm.xlu0 %353, %v345
  %v355 = vpop.permute.xlu0 %354
  %v357 = vlaneseq
  %v358 = vshrl.u32 %v357, 7
  %v359 = vsub.s32 0, %v358
  %v360 = vrot.slane %v75, %v359
  %v361 = vlaneseq
  %v362 = vshrl.u32 %v361, 7
  %v363 = vsub.s32 0, %v362
  %v364 = vrot.slane %v76, %v363
  %v365 = vlaneseq
  %v366 = vshrl.u32 %v365, 7
  %v367 = vsub.s32 0, %v366
  %v368 = vrot.slane %v77, %v367
  %v369 = vlaneseq
  %v370 = vshrl.u32 %v369, 7
  %v371 = vsub.s32 0, %v370
  %v372 = vrot.slane %v78, %v371
  %v373 = vmul.f32 %v355, %v360
  %v374 = vmul.f32 %v355, %v364
  %v375 = vmul.f32 %v355, %v368
  %v376 = vmul.f32 %v355, %v372
  %v377 = vadd.f32 %v350, %v373
  %v378 = vadd.f32 %v350, %v374
  %v379 = vadd.f32 %v350, %v375
  %v380 = vadd.f32 %v350, %v376
  %381 = vset.pattern.permute.xlu0 1
  %382 = vperm.xlu0 %381, %v345
  %v383 = vpop.permute.xlu0 %382
  %v385 = vlaneseq
  %v386 = vshrl.u32 %v385, 7
  %v387 = vsub.s32 1, %v386
  %v388 = vrot.slane %v75, %v387
  %v389 = vlaneseq
  %v390 = vshrl.u32 %v389, 7
  %v391 = vsub.s32 1, %v390
  %v392 = vrot.slane %v76, %v391
  %v393 = vlaneseq
  %v394 = vshrl.u32 %v393, 7
  %v395 = vsub.s32 1, %v394
  %v396 = vrot.slane %v77, %v395
  %v397 = vlaneseq
  %v398 = vshrl.u32 %v397, 7
  %v399 = vsub.s32 1, %v398
  %v400 = vrot.slane %v78, %v399
  %v401 = vmul.f32 %v383, %v388
  %v402 = vmul.f32 %v383, %v392
  %v403 = vmul.f32 %v383, %v396
  %v404 = vmul.f32 %v383, %v400
  %v405 = vadd.f32 %v377, %v401
  %v406 = vadd.f32 %v378, %v402
  %v407 = vadd.f32 %v379, %v403
  %v408 = vadd.f32 %v380, %v404
  %409 = vset.pattern.permute.xlu0 2
  %410 = vperm.xlu0 %409, %v345
  %v411 = vpop.permute.xlu0 %410
  %v413 = vlaneseq
  %v414 = vshrl.u32 %v413, 7
  %v415 = vsub.s32 2, %v414
  %v416 = vrot.slane %v75, %v415
  %v417 = vlaneseq
  %v418 = vshrl.u32 %v417, 7
  %v419 = vsub.s32 2, %v418
  %v420 = vrot.slane %v76, %v419
  %v421 = vlaneseq
  %v422 = vshrl.u32 %v421, 7
  %v423 = vsub.s32 2, %v422
  %v424 = vrot.slane %v77, %v423
  %v425 = vlaneseq
  %v426 = vshrl.u32 %v425, 7
  %v427 = vsub.s32 2, %v426
  %v428 = vrot.slane %v78, %v427
  %v429 = vmul.f32 %v411, %v416
  %v430 = vmul.f32 %v411, %v420
  %v431 = vmul.f32 %v411, %v424
  %v432 = vmul.f32 %v411, %v428
  %v433 = vadd.f32 %v405, %v429
  %v434 = vadd.f32 %v406, %v430
  %v435 = vadd.f32 %v407, %v431
  %v436 = vadd.f32 %v408, %v432
  %437 = vset.pattern.permute.xlu0 3
  %438 = vperm.xlu0 %437, %v345
  %v439 = vpop.permute.xlu0 %438
  %v441 = vlaneseq
  %v442 = vshrl.u32 %v441, 7
  %v443 = vsub.s32 3, %v442
  %v444 = vrot.slane %v75, %v443
  %v445 = vlaneseq
  %v446 = vshrl.u32 %v445, 7
  %v447 = vsub.s32 3, %v446
  %v448 = vrot.slane %v76, %v447
  %v449 = vlaneseq
  %v450 = vshrl.u32 %v449, 7
  %v451 = vsub.s32 3, %v450
  %v452 = vrot.slane %v77, %v451
  %v453 = vlaneseq
  %v454 = vshrl.u32 %v453, 7
  %v455 = vsub.s32 3, %v454
  %v456 = vrot.slane %v78, %v455
  %v457 = vmul.f32 %v439, %v444
  %v458 = vmul.f32 %v439, %v448
  %v459 = vmul.f32 %v439, %v452
  %v460 = vmul.f32 %v439, %v456
  %v461 = vadd.f32 %v433, %v457
  %v462 = vadd.f32 %v434, %v458
  %v463 = vadd.f32 %v435, %v459
  %v464 = vadd.f32 %v436, %v460
  %465 = vset.pattern.permute.xlu0 4
  %466 = vperm.xlu0 %465, %v345
  %v467 = vpop.permute.xlu0 %466
  %v469 = vlaneseq
  %v470 = vshrl.u32 %v469, 7
  %v471 = vsub.s32 0, %v470
  %v472 = vrot.slane %v113, %v471
  %v473 = vlaneseq
  %v474 = vshrl.u32 %v473, 7
  %v475 = vsub.s32 0, %v474
  %v476 = vrot.slane %v114, %v475
  %v477 = vlaneseq
  %v478 = vshrl.u32 %v477, 7
  %v479 = vsub.s32 0, %v478
  %v480 = vrot.slane %v115, %v479
  %v481 = vlaneseq
  %v482 = vshrl.u32 %v481, 7
  %v483 = vsub.s32 0, %v482
  %v484 = vrot.slane %v116, %v483
  %v485 = vmul.f32 %v467, %v472
  %v486 = vmul.f32 %v467, %v476
  %v487 = vmul.f32 %v467, %v480
  %v488 = vmul.f32 %v467, %v484
  %v489 = vadd.f32 %v461, %v485
  %v490 = vadd.f32 %v462, %v486
  %v491 = vadd.f32 %v463, %v487
  %v492 = vadd.f32 %v464, %v488
  %493 = vset.pattern.permute.xlu0 5
  %494 = vperm.xlu0 %493, %v345
  %v495 = vpop.permute.xlu0 %494
  %v497 = vlaneseq
  %v498 = vshrl.u32 %v497, 7
  %v499 = vsub.s32 1, %v498
  %v500 = vrot.slane %v113, %v499
  %v501 = vlaneseq
  %v502 = vshrl.u32 %v501, 7
  %v503 = vsub.s32 1, %v502
  %v504 = vrot.slane %v114, %v503
  %v505 = vlaneseq
  %v506 = vshrl.u32 %v505, 7
  %v507 = vsub.s32 1, %v506
  %v508 = vrot.slane %v115, %v507
  %v509 = vlaneseq
  %v510 = vshrl.u32 %v509, 7
  %v511 = vsub.s32 1, %v510
  %v512 = vrot.slane %v116, %v511
  %v513 = vmul.f32 %v495, %v500
  %v514 = vmul.f32 %v495, %v504
  %v515 = vmul.f32 %v495, %v508
  %v516 = vmul.f32 %v495, %v512
  %v517 = vadd.f32 %v489, %v513
  %v518 = vadd.f32 %v490, %v514
  %v519 = vadd.f32 %v491, %v515
  %v520 = vadd.f32 %v492, %v516
  %521 = vset.pattern.permute.xlu0 6
  %522 = vperm.xlu0 %521, %v345
  %v523 = vpop.permute.xlu0 %522
  %v525 = vlaneseq
  %v526 = vshrl.u32 %v525, 7
  %v527 = vsub.s32 2, %v526
  %v528 = vrot.slane %v113, %v527
  %v529 = vlaneseq
  %v530 = vshrl.u32 %v529, 7
  %v531 = vsub.s32 2, %v530
  %v532 = vrot.slane %v114, %v531
  %v533 = vlaneseq
  %v534 = vshrl.u32 %v533, 7
  %v535 = vsub.s32 2, %v534
  %v536 = vrot.slane %v115, %v535
  %v537 = vlaneseq
  %v538 = vshrl.u32 %v537, 7
  %v539 = vsub.s32 2, %v538
  %v540 = vrot.slane %v116, %v539
  %v541 = vmul.f32 %v523, %v528
  %v542 = vmul.f32 %v523, %v532
  %v543 = vmul.f32 %v523, %v536
  %v544 = vmul.f32 %v523, %v540
  %v545 = vadd.f32 %v517, %v541
  %v546 = vadd.f32 %v518, %v542
  %v547 = vadd.f32 %v519, %v543
  %v548 = vadd.f32 %v520, %v544
  %549 = vset.pattern.permute.xlu0 7
  %550 = vperm.xlu0 %549, %v345
  %v551 = vpop.permute.xlu0 %550
  %v553 = vlaneseq
  %v554 = vshrl.u32 %v553, 7
  %v555 = vsub.s32 3, %v554
  %v556 = vrot.slane %v113, %v555
  %v557 = vlaneseq
  %v558 = vshrl.u32 %v557, 7
  %v559 = vsub.s32 3, %v558
  %v560 = vrot.slane %v114, %v559
  %v561 = vlaneseq
  %v562 = vshrl.u32 %v561, 7
  %v563 = vsub.s32 3, %v562
  %v564 = vrot.slane %v115, %v563
  %v565 = vlaneseq
  %v566 = vshrl.u32 %v565, 7
  %v567 = vsub.s32 3, %v566
  %v568 = vrot.slane %v116, %v567
  %v569 = vmul.f32 %v551, %v556
  %v570 = vmul.f32 %v551, %v560
  %v571 = vmul.f32 %v551, %v564
  %v572 = vmul.f32 %v551, %v568
  %v573 = vadd.f32 %v545, %v569
  %v574 = vadd.f32 %v546, %v570
  %v575 = vadd.f32 %v547, %v571
  %v576 = vadd.f32 %v548, %v572
  %577 = vset.pattern.permute.xlu0 8
  %578 = vperm.xlu0 %577, %v345
  %v579 = vpop.permute.xlu0 %578
  %v581 = vlaneseq
  %v582 = vshrl.u32 %v581, 7
  %v583 = vsub.s32 0, %v582
  %v584 = vrot.slane %v151, %v583
  %v585 = vlaneseq
  %v586 = vshrl.u32 %v585, 7
  %v587 = vsub.s32 0, %v586
  %v588 = vrot.slane %v152, %v587
  %v589 = vlaneseq
  %v590 = vshrl.u32 %v589, 7
  %v591 = vsub.s32 0, %v590
  %v592 = vrot.slane %v153, %v591
  %v593 = vlaneseq
  %v594 = vshrl.u32 %v593, 7
  %v595 = vsub.s32 0, %v594
  %v596 = vrot.slane %v154, %v595
  %v597 = vmul.f32 %v579, %v584
  %v598 = vmul.f32 %v579, %v588
  %v599 = vmul.f32 %v579, %v592
  %v600 = vmul.f32 %v579, %v596
  %v601 = vadd.f32 %v573, %v597
  %v602 = vadd.f32 %v574, %v598
  %v603 = vadd.f32 %v575, %v599
  %v604 = vadd.f32 %v576, %v600
  %605 = vset.pattern.permute.xlu0 9
  %606 = vperm.xlu0 %605, %v345
  %v607 = vpop.permute.xlu0 %606
  %v609 = vlaneseq
  %v610 = vshrl.u32 %v609, 7
  %v611 = vsub.s32 1, %v610
  %v612 = vrot.slane %v151, %v611
  %v613 = vlaneseq
  %v614 = vshrl.u32 %v613, 7
  %v615 = vsub.s32 1, %v614
  %v616 = vrot.slane %v152, %v615
  %v617 = vlaneseq
  %v618 = vshrl.u32 %v617, 7
  %v619 = vsub.s32 1, %v618
  %v620 = vrot.slane %v153, %v619
  %v621 = vlaneseq
  %v622 = vshrl.u32 %v621, 7
  %v623 = vsub.s32 1, %v622
  %v624 = vrot.slane %v154, %v623
  %v625 = vmul.f32 %v607, %v612
  %v626 = vmul.f32 %v607, %v616
  %v627 = vmul.f32 %v607, %v620
  %v628 = vmul.f32 %v607, %v624
  %v629 = vadd.f32 %v601, %v625
  %v630 = vadd.f32 %v602, %v626
  %v631 = vadd.f32 %v603, %v627
  %v632 = vadd.f32 %v604, %v628
  %633 = vset.pattern.permute.xlu0 10
  %634 = vperm.xlu0 %633, %v345
  %v635 = vpop.permute.xlu0 %634
  %v637 = vlaneseq
  %v638 = vshrl.u32 %v637, 7
  %v639 = vsub.s32 2, %v638
  %v640 = vrot.slane %v151, %v639
  %v641 = vlaneseq
  %v642 = vshrl.u32 %v641, 7
  %v643 = vsub.s32 2, %v642
  %v644 = vrot.slane %v152, %v643
  %v645 = vlaneseq
  %v646 = vshrl.u32 %v645, 7
  %v647 = vsub.s32 2, %v646
  %v648 = vrot.slane %v153, %v647
  %v649 = vlaneseq
  %v650 = vshrl.u32 %v649, 7
  %v651 = vsub.s32 2, %v650
  %v652 = vrot.slane %v154, %v651
  %v653 = vmul.f32 %v635, %v640
  %v654 = vmul.f32 %v635, %v644
  %v655 = vmul.f32 %v635, %v648
  %v656 = vmul.f32 %v635, %v652
  %v657 = vadd.f32 %v629, %v653
  %v658 = vadd.f32 %v630, %v654
  %v659 = vadd.f32 %v631, %v655
  %v660 = vadd.f32 %v632, %v656
  %661 = vset.pattern.permute.xlu0 11
  %662 = vperm.xlu0 %661, %v345
  %v663 = vpop.permute.xlu0 %662
  %v665 = vlaneseq
  %v666 = vshrl.u32 %v665, 7
  %v667 = vsub.s32 3, %v666
  %v668 = vrot.slane %v151, %v667
  %v669 = vlaneseq
  %v670 = vshrl.u32 %v669, 7
  %v671 = vsub.s32 3, %v670
  %v672 = vrot.slane %v152, %v671
  %v673 = vlaneseq
  %v674 = vshrl.u32 %v673, 7
  %v675 = vsub.s32 3, %v674
  %v676 = vrot.slane %v153, %v675
  %v677 = vlaneseq
  %v678 = vshrl.u32 %v677, 7
  %v679 = vsub.s32 3, %v678
  %v680 = vrot.slane %v154, %v679
  %v681 = vmul.f32 %v663, %v668
  %v682 = vmul.f32 %v663, %v672
  %v683 = vmul.f32 %v663, %v676
  %v684 = vmul.f32 %v663, %v680
  %v685 = vadd.f32 %v657, %v681
  %v686 = vadd.f32 %v658, %v682
  %v687 = vadd.f32 %v659, %v683
  %v688 = vadd.f32 %v660, %v684
  %689 = vset.pattern.permute.xlu0 12
  %690 = vperm.xlu0 %689, %v345
  %v691 = vpop.permute.xlu0 %690
  %v693 = vlaneseq
  %v694 = vshrl.u32 %v693, 7
  %v695 = vsub.s32 0, %v694
  %v696 = vrot.slane %v189, %v695
  %v697 = vlaneseq
  %v698 = vshrl.u32 %v697, 7
  %v699 = vsub.s32 0, %v698
  %v700 = vrot.slane %v190, %v699
  %v701 = vlaneseq
  %v702 = vshrl.u32 %v701, 7
  %v703 = vsub.s32 0, %v702
  %v704 = vrot.slane %v191, %v703
  %v705 = vlaneseq
  %v706 = vshrl.u32 %v705, 7
  %v707 = vsub.s32 0, %v706
  %v708 = vrot.slane %v192, %v707
  %v709 = vmul.f32 %v691, %v696
  %v710 = vmul.f32 %v691, %v700
  %v711 = vmul.f32 %v691, %v704
  %v712 = vmul.f32 %v691, %v708
  %v713 = vadd.f32 %v685, %v709
  %v714 = vadd.f32 %v686, %v710
  %v715 = vadd.f32 %v687, %v711
  %v716 = vadd.f32 %v688, %v712
  %717 = vset.pattern.permute.xlu0 13
  %718 = vperm.xlu0 %717, %v345
  %v719 = vpop.permute.xlu0 %718
  %v721 = vlaneseq
  %v722 = vshrl.u32 %v721, 7
  %v723 = vsub.s32 1, %v722
  %v724 = vrot.slane %v189, %v723
  %v725 = vlaneseq
  %v726 = vshrl.u32 %v725, 7
  %v727 = vsub.s32 1, %v726
  %v728 = vrot.slane %v190, %v727
  %v729 = vlaneseq
  %v730 = vshrl.u32 %v729, 7
  %v731 = vsub.s32 1, %v730
  %v732 = vrot.slane %v191, %v731
  %v733 = vlaneseq
  %v734 = vshrl.u32 %v733, 7
  %v735 = vsub.s32 1, %v734
  %v736 = vrot.slane %v192, %v735
  %v737 = vmul.f32 %v719, %v724
  %v738 = vmul.f32 %v719, %v728
  %v739 = vmul.f32 %v719, %v732
  %v740 = vmul.f32 %v719, %v736
  %v741 = vadd.f32 %v713, %v737
  %v742 = vadd.f32 %v714, %v738
  %v743 = vadd.f32 %v715, %v739
  %v744 = vadd.f32 %v716, %v740
  %745 = vset.pattern.permute.xlu0 14
  %746 = vperm.xlu0 %745, %v345
  %v747 = vpop.permute.xlu0 %746
  %v749 = vlaneseq
  %v750 = vshrl.u32 %v749, 7
  %v751 = vsub.s32 2, %v750
  %v752 = vrot.slane %v189, %v751
  %v753 = vlaneseq
  %v754 = vshrl.u32 %v753, 7
  %v755 = vsub.s32 2, %v754
  %v756 = vrot.slane %v190, %v755
  %v757 = vlaneseq
  %v758 = vshrl.u32 %v757, 7
  %v759 = vsub.s32 2, %v758
  %v760 = vrot.slane %v191, %v759
  %v761 = vlaneseq
  %v762 = vshrl.u32 %v761, 7
  %v763 = vsub.s32 2, %v762
  %v764 = vrot.slane %v192, %v763
  %v765 = vmul.f32 %v747, %v752
  %v766 = vmul.f32 %v747, %v756
  %v767 = vmul.f32 %v747, %v760
  %v768 = vmul.f32 %v747, %v764
  %v769 = vadd.f32 %v741, %v765
  %v770 = vadd.f32 %v742, %v766
  %v771 = vadd.f32 %v743, %v767
  %v772 = vadd.f32 %v744, %v768
  %773 = vset.pattern.permute.xlu0 15
  %774 = vperm.xlu0 %773, %v345
  %v775 = vpop.permute.xlu0 %774
  %v777 = vlaneseq
  %v778 = vshrl.u32 %v777, 7
  %v779 = vsub.s32 3, %v778
  %v780 = vrot.slane %v189, %v779
  %v781 = vlaneseq
  %v782 = vshrl.u32 %v781, 7
  %v783 = vsub.s32 3, %v782
  %v784 = vrot.slane %v190, %v783
  %v785 = vlaneseq
  %v786 = vshrl.u32 %v785, 7
  %v787 = vsub.s32 3, %v786
  %v788 = vrot.slane %v191, %v787
  %v789 = vlaneseq
  %v790 = vshrl.u32 %v789, 7
  %v791 = vsub.s32 3, %v790
  %v792 = vrot.slane %v192, %v791
  %v793 = vmul.f32 %v775, %v780
  %v794 = vmul.f32 %v775, %v784
  %v795 = vmul.f32 %v775, %v788
  %v796 = vmul.f32 %v775, %v792
  %v797 = vadd.f32 %v769, %v793
  %v798 = vadd.f32 %v770, %v794
  %v799 = vadd.f32 %v771, %v795
  %v800 = vadd.f32 %v772, %v796
  %801 = vset.pattern.permute.xlu0 16
  %802 = vperm.xlu0 %801, %v345
  %v803 = vpop.permute.xlu0 %802
  %v805 = vlaneseq
  %v806 = vshrl.u32 %v805, 7
  %v807 = vsub.s32 0, %v806
  %v808 = vrot.slane %v23, %v807
  %v809 = vlaneseq
  %v810 = vshrl.u32 %v809, 7
  %v811 = vsub.s32 4, %v810
  %v812 = vrot.slane %v23, %v811
  %v813 = vlaneseq
  %v814 = vshrl.u32 %v813, 7
  %v815 = vsub.s32 0, %v814
  %v816 = vrot.slane %v24, %v815
  %v817 = vlaneseq
  %v818 = vshrl.u32 %v817, 7
  %v819 = vsub.s32 4, %v818
  %v820 = vrot.slane %v24, %v819
  %v825 = vlaneseq
  %v826 = vshrl.u32 %v825, 7
  %v827 = vsub.s32 0, %v826
  %v828 = vrot.slane %v808, %v827
  %v829 = vlaneseq
  %v830 = vshrl.u32 %v829, 7
  %v831 = vsub.s32 0, %v830
  %v832 = vrot.slane %v812, %v831
  %v833 = vlaneseq
  %v834 = vshrl.u32 %v833, 7
  %v835 = vsub.s32 0, %v834
  %v836 = vrot.slane %v816, %v835
  %v837 = vlaneseq
  %v838 = vshrl.u32 %v837, 7
  %v839 = vsub.s32 0, %v838
  %v840 = vrot.slane %v820, %v839
  %v841 = vmul.f32 %v803, %v828
  %v842 = vmul.f32 %v803, %v832
  %v843 = vmul.f32 %v803, %v836
  %v844 = vmul.f32 %v803, %v840
  %v845 = vadd.f32 %v797, %v841
  %v846 = vadd.f32 %v798, %v842
  %v847 = vadd.f32 %v799, %v843
  %v848 = vadd.f32 %v800, %v844
  %849 = vset.pattern.permute.xlu0 17
  %850 = vperm.xlu0 %849, %v345
  %v851 = vpop.permute.xlu0 %850
  %v853 = vlaneseq
  %v854 = vshrl.u32 %v853, 7
  %v855 = vsub.s32 1, %v854
  %v856 = vrot.slane %v23, %v855
  %v857 = vlaneseq
  %v858 = vshrl.u32 %v857, 7
  %v859 = vsub.s32 5, %v858
  %v860 = vrot.slane %v23, %v859
  %v861 = vlaneseq
  %v862 = vshrl.u32 %v861, 7
  %v863 = vsub.s32 1, %v862
  %v864 = vrot.slane %v24, %v863
  %v865 = vlaneseq
  %v866 = vshrl.u32 %v865, 7
  %v867 = vsub.s32 5, %v866
  %v868 = vrot.slane %v24, %v867
  %v873 = vlaneseq
  %v874 = vshrl.u32 %v873, 7
  %v875 = vsub.s32 1, %v874
  %v876 = vrot.slane %v856, %v875
  %v877 = vlaneseq
  %v878 = vshrl.u32 %v877, 7
  %v879 = vsub.s32 1, %v878
  %v880 = vrot.slane %v860, %v879
  %v881 = vlaneseq
  %v882 = vshrl.u32 %v881, 7
  %v883 = vsub.s32 1, %v882
  %v884 = vrot.slane %v864, %v883
  %v885 = vlaneseq
  %v886 = vshrl.u32 %v885, 7
  %v887 = vsub.s32 1, %v886
  %v888 = vrot.slane %v868, %v887
  %v889 = vmul.f32 %v851, %v876
  %v890 = vmul.f32 %v851, %v880
  %v891 = vmul.f32 %v851, %v884
  %v892 = vmul.f32 %v851, %v888
  %v893 = vadd.f32 %v845, %v889
  %v894 = vadd.f32 %v846, %v890
  %v895 = vadd.f32 %v847, %v891
  %v896 = vadd.f32 %v848, %v892
  %897 = vset.pattern.permute.xlu0 18
  %898 = vperm.xlu0 %897, %v345
  %v899 = vpop.permute.xlu0 %898
  %v901 = vlaneseq
  %v902 = vshrl.u32 %v901, 7
  %v903 = vsub.s32 2, %v902
  %v904 = vrot.slane %v23, %v903
  %v905 = vlaneseq
  %v906 = vshrl.u32 %v905, 7
  %v907 = vsub.s32 6, %v906
  %v908 = vrot.slane %v23, %v907
  %v909 = vlaneseq
  %v910 = vshrl.u32 %v909, 7
  %v911 = vsub.s32 2, %v910
  %v912 = vrot.slane %v24, %v911
  %v913 = vlaneseq
  %v914 = vshrl.u32 %v913, 7
  %v915 = vsub.s32 6, %v914
  %v916 = vrot.slane %v24, %v915
  %v921 = vlaneseq
  %v922 = vshrl.u32 %v921, 7
  %v923 = vsub.s32 2, %v922
  %v924 = vrot.slane %v904, %v923
  %v925 = vlaneseq
  %v926 = vshrl.u32 %v925, 7
  %v927 = vsub.s32 2, %v926
  %v928 = vrot.slane %v908, %v927
  %v929 = vlaneseq
  %v930 = vshrl.u32 %v929, 7
  %v931 = vsub.s32 2, %v930
  %v932 = vrot.slane %v912, %v931
  %v933 = vlaneseq
  %v934 = vshrl.u32 %v933, 7
  %v935 = vsub.s32 2, %v934
  %v936 = vrot.slane %v916, %v935
  %v937 = vmul.f32 %v899, %v924
  %v938 = vmul.f32 %v899, %v928
  %v939 = vmul.f32 %v899, %v932
  %v940 = vmul.f32 %v899, %v936
  %v941 = vadd.f32 %v893, %v937
  %v942 = vadd.f32 %v894, %v938
  %v943 = vadd.f32 %v895, %v939
  %v944 = vadd.f32 %v896, %v940
  %945 = vset.pattern.permute.xlu0 19
  %946 = vperm.xlu0 %945, %v345
  %v947 = vpop.permute.xlu0 %946
  %v949 = vlaneseq
  %v950 = vshrl.u32 %v949, 7
  %v951 = vsub.s32 3, %v950
  %v952 = vrot.slane %v23, %v951
  %v953 = vlaneseq
  %v954 = vshrl.u32 %v953, 7
  %v955 = vsub.s32 7, %v954
  %v956 = vrot.slane %v23, %v955
  %v957 = vlaneseq
  %v958 = vshrl.u32 %v957, 7
  %v959 = vsub.s32 3, %v958
  %v960 = vrot.slane %v24, %v959
  %v961 = vlaneseq
  %v962 = vshrl.u32 %v961, 7
  %v963 = vsub.s32 7, %v962
  %v964 = vrot.slane %v24, %v963
  %v969 = vlaneseq
  %v970 = vshrl.u32 %v969, 7
  %v971 = vsub.s32 3, %v970
  %v972 = vrot.slane %v952, %v971
  %v973 = vlaneseq
  %v974 = vshrl.u32 %v973, 7
  %v975 = vsub.s32 3, %v974
  %v976 = vrot.slane %v956, %v975
  %v977 = vlaneseq
  %v978 = vshrl.u32 %v977, 7
  %v979 = vsub.s32 3, %v978
  %v980 = vrot.slane %v960, %v979
  %v981 = vlaneseq
  %v982 = vshrl.u32 %v981, 7
  %v983 = vsub.s32 3, %v982
  %v984 = vrot.slane %v964, %v983
  %v985 = vmul.f32 %v947, %v972
  %v986 = vmul.f32 %v947, %v976
  %v987 = vmul.f32 %v947, %v980
  %v988 = vmul.f32 %v947, %v984
  %v989 = vadd.f32 %v941, %v985
  %v990 = vadd.f32 %v942, %v986
  %v991 = vadd.f32 %v943, %v987
  %v992 = vadd.f32 %v944, %v988
  %993 = vset.pattern.permute.xlu0 20
  %994 = vperm.xlu0 %993, %v345
  %v995 = vpop.permute.xlu0 %994
  %v997 = vlaneseq
  %v998 = vshrl.u32 %v997, 7
  %v999 = vsub.s32 0, %v998
  %v1000 = vrot.slane %v227, %v999
  %v1001 = vlaneseq
  %v1002 = vshrl.u32 %v1001, 7
  %v1003 = vsub.s32 0, %v1002
  %v1004 = vrot.slane %v228, %v1003
  %v1005 = vlaneseq
  %v1006 = vshrl.u32 %v1005, 7
  %v1007 = vsub.s32 0, %v1006
  %v1008 = vrot.slane %v229, %v1007
  %v1009 = vlaneseq
  %v1010 = vshrl.u32 %v1009, 7
  %v1011 = vsub.s32 0, %v1010
  %v1012 = vrot.slane %v230, %v1011
  %v1013 = vmul.f32 %v995, %v1000
  %v1014 = vmul.f32 %v995, %v1004
  %v1015 = vmul.f32 %v995, %v1008
  %v1016 = vmul.f32 %v995, %v1012
  %v1017 = vadd.f32 %v989, %v1013
  %v1018 = vadd.f32 %v990, %v1014
  %v1019 = vadd.f32 %v991, %v1015
  %v1020 = vadd.f32 %v992, %v1016
  %1021 = vset.pattern.permute.xlu0 21
  %1022 = vperm.xlu0 %1021, %v345
  %v1023 = vpop.permute.xlu0 %1022
  %v1025 = vlaneseq
  %v1026 = vshrl.u32 %v1025, 7
  %v1027 = vsub.s32 1, %v1026
  %v1028 = vrot.slane %v227, %v1027
  %v1029 = vlaneseq
  %v1030 = vshrl.u32 %v1029, 7
  %v1031 = vsub.s32 1, %v1030
  %v1032 = vrot.slane %v228, %v1031
  %v1033 = vlaneseq
  %v1034 = vshrl.u32 %v1033, 7
  %v1035 = vsub.s32 1, %v1034
  %v1036 = vrot.slane %v229, %v1035
  %v1037 = vlaneseq
  %v1038 = vshrl.u32 %v1037, 7
  %v1039 = vsub.s32 1, %v1038
  %v1040 = vrot.slane %v230, %v1039
  %v1041 = vmul.f32 %v1023, %v1028
  %v1042 = vmul.f32 %v1023, %v1032
  %v1043 = vmul.f32 %v1023, %v1036
  %v1044 = vmul.f32 %v1023, %v1040
  %v1045 = vadd.f32 %v1017, %v1041
  %v1046 = vadd.f32 %v1018, %v1042
  %v1047 = vadd.f32 %v1019, %v1043
  %v1048 = vadd.f32 %v1020, %v1044
  %1049 = vset.pattern.permute.xlu0 22
  %1050 = vperm.xlu0 %1049, %v345
  %v1051 = vpop.permute.xlu0 %1050
  %v1053 = vlaneseq
  %v1054 = vshrl.u32 %v1053, 7
  %v1055 = vsub.s32 2, %v1054
  %v1056 = vrot.slane %v227, %v1055
  %v1057 = vlaneseq
  %v1058 = vshrl.u32 %v1057, 7
  %v1059 = vsub.s32 2, %v1058
  %v1060 = vrot.slane %v228, %v1059
  %v1061 = vlaneseq
  %v1062 = vshrl.u32 %v1061, 7
  %v1063 = vsub.s32 2, %v1062
  %v1064 = vrot.slane %v229, %v1063
  %v1065 = vlaneseq
  %v1066 = vshrl.u32 %v1065, 7
  %v1067 = vsub.s32 2, %v1066
  %v1068 = vrot.slane %v230, %v1067
  %v1069 = vmul.f32 %v1051, %v1056
  %v1070 = vmul.f32 %v1051, %v1060
  %v1071 = vmul.f32 %v1051, %v1064
  %v1072 = vmul.f32 %v1051, %v1068
  %v1073 = vadd.f32 %v1045, %v1069
  %v1074 = vadd.f32 %v1046, %v1070
  %v1075 = vadd.f32 %v1047, %v1071
  %v1076 = vadd.f32 %v1048, %v1072
  %1077 = vset.pattern.permute.xlu0 23
  %1078 = vperm.xlu0 %1077, %v345
  %v1079 = vpop.permute.xlu0 %1078
  %v1081 = vlaneseq
  %v1082 = vshrl.u32 %v1081, 7
  %v1083 = vsub.s32 3, %v1082
  %v1084 = vrot.slane %v227, %v1083
  %v1085 = vlaneseq
  %v1086 = vshrl.u32 %v1085, 7
  %v1087 = vsub.s32 3, %v1086
  %v1088 = vrot.slane %v228, %v1087
  %v1089 = vlaneseq
  %v1090 = vshrl.u32 %v1089, 7
  %v1091 = vsub.s32 3, %v1090
  %v1092 = vrot.slane %v229, %v1091
  %v1093 = vlaneseq
  %v1094 = vshrl.u32 %v1093, 7
  %v1095 = vsub.s32 3, %v1094
  %v1096 = vrot.slane %v230, %v1095
  %v1097 = vmul.f32 %v1079, %v1084
  %v1098 = vmul.f32 %v1079, %v1088
  %v1099 = vmul.f32 %v1079, %v1092
  %v1100 = vmul.f32 %v1079, %v1096
  %v1101 = vadd.f32 %v1073, %v1097
  %v1102 = vadd.f32 %v1074, %v1098
  %v1103 = vadd.f32 %v1075, %v1099
  %v1104 = vadd.f32 %v1076, %v1100
  %1105 = vset.pattern.permute.xlu0 24
  %1106 = vperm.xlu0 %1105, %v345
  %v1107 = vpop.permute.xlu0 %1106
  %v1109 = vlaneseq
  %v1110 = vshrl.u32 %v1109, 7
  %v1111 = vsub.s32 0, %v1110
  %v1112 = vrot.slane %v265, %v1111
  %v1113 = vlaneseq
  %v1114 = vshrl.u32 %v1113, 7
  %v1115 = vsub.s32 0, %v1114
  %v1116 = vrot.slane %v266, %v1115
  %v1117 = vlaneseq
  %v1118 = vshrl.u32 %v1117, 7
  %v1119 = vsub.s32 0, %v1118
  %v1120 = vrot.slane %v267, %v1119
  %v1121 = vlaneseq
  %v1122 = vshrl.u32 %v1121, 7
  %v1123 = vsub.s32 0, %v1122
  %v1124 = vrot.slane %v268, %v1123
  %v1125 = vmul.f32 %v1107, %v1112
  %v1126 = vmul.f32 %v1107, %v1116
  %v1127 = vmul.f32 %v1107, %v1120
  %v1128 = vmul.f32 %v1107, %v1124
  %v1129 = vadd.f32 %v1101, %v1125
  %v1130 = vadd.f32 %v1102, %v1126
  %v1131 = vadd.f32 %v1103, %v1127
  %v1132 = vadd.f32 %v1104, %v1128
  %1133 = vset.pattern.permute.xlu0 25
  %1134 = vperm.xlu0 %1133, %v345
  %v1135 = vpop.permute.xlu0 %1134
  %v1137 = vlaneseq
  %v1138 = vshrl.u32 %v1137, 7
  %v1139 = vsub.s32 1, %v1138
  %v1140 = vrot.slane %v265, %v1139
  %v1141 = vlaneseq
  %v1142 = vshrl.u32 %v1141, 7
  %v1143 = vsub.s32 1, %v1142
  %v1144 = vrot.slane %v266, %v1143
  %v1145 = vlaneseq
  %v1146 = vshrl.u32 %v1145, 7
  %v1147 = vsub.s32 1, %v1146
  %v1148 = vrot.slane %v267, %v1147
  %v1149 = vlaneseq
  %v1150 = vshrl.u32 %v1149, 7
  %v1151 = vsub.s32 1, %v1150
  %v1152 = vrot.slane %v268, %v1151
  %v1153 = vmul.f32 %v1135, %v1140
  %v1154 = vmul.f32 %v1135, %v1144
  %v1155 = vmul.f32 %v1135, %v1148
  %v1156 = vmul.f32 %v1135, %v1152
  %v1157 = vadd.f32 %v1129, %v1153
  %v1158 = vadd.f32 %v1130, %v1154
  %v1159 = vadd.f32 %v1131, %v1155
  %v1160 = vadd.f32 %v1132, %v1156
  %1161 = vset.pattern.permute.xlu0 26
  %1162 = vperm.xlu0 %1161, %v345
  %v1163 = vpop.permute.xlu0 %1162
  %v1165 = vlaneseq
  %v1166 = vshrl.u32 %v1165, 7
  %v1167 = vsub.s32 2, %v1166
  %v1168 = vrot.slane %v265, %v1167
  %v1169 = vlaneseq
  %v1170 = vshrl.u32 %v1169, 7
  %v1171 = vsub.s32 2, %v1170
  %v1172 = vrot.slane %v266, %v1171
  %v1173 = vlaneseq
  %v1174 = vshrl.u32 %v1173, 7
  %v1175 = vsub.s32 2, %v1174
  %v1176 = vrot.slane %v267, %v1175
  %v1177 = vlaneseq
  %v1178 = vshrl.u32 %v1177, 7
  %v1179 = vsub.s32 2, %v1178
  %v1180 = vrot.slane %v268, %v1179
  %v1181 = vmul.f32 %v1163, %v1168
  %v1182 = vmul.f32 %v1163, %v1172
  %v1183 = vmul.f32 %v1163, %v1176
  %v1184 = vmul.f32 %v1163, %v1180
  %v1185 = vadd.f32 %v1157, %v1181
  %v1186 = vadd.f32 %v1158, %v1182
  %v1187 = vadd.f32 %v1159, %v1183
  %v1188 = vadd.f32 %v1160, %v1184
  %1189 = vset.pattern.permute.xlu0 27
  %1190 = vperm.xlu0 %1189, %v345
  %v1191 = vpop.permute.xlu0 %1190
  %v1193 = vlaneseq
  %v1194 = vshrl.u32 %v1193, 7
  %v1195 = vsub.s32 3, %v1194
  %v1196 = vrot.slane %v265, %v1195
  %v1197 = vlaneseq
  %v1198 = vshrl.u32 %v1197, 7
  %v1199 = vsub.s32 3, %v1198
  %v1200 = vrot.slane %v266, %v1199
  %v1201 = vlaneseq
  %v1202 = vshrl.u32 %v1201, 7
  %v1203 = vsub.s32 3, %v1202
  %v1204 = vrot.slane %v267, %v1203
  %v1205 = vlaneseq
  %v1206 = vshrl.u32 %v1205, 7
  %v1207 = vsub.s32 3, %v1206
  %v1208 = vrot.slane %v268, %v1207
  %v1209 = vmul.f32 %v1191, %v1196
  %v1210 = vmul.f32 %v1191, %v1200
  %v1211 = vmul.f32 %v1191, %v1204
  %v1212 = vmul.f32 %v1191, %v1208
  %v1213 = vadd.f32 %v1185, %v1209
  %v1214 = vadd.f32 %v1186, %v1210
  %v1215 = vadd.f32 %v1187, %v1211
  %v1216 = vadd.f32 %v1188, %v1212
  %1217 = vset.pattern.permute.xlu0 28
  %1218 = vperm.xlu0 %1217, %v345
  %v1219 = vpop.permute.xlu0 %1218
  %v1221 = vlaneseq
  %v1222 = vshrl.u32 %v1221, 7
  %v1223 = vsub.s32 0, %v1222
  %v1224 = vrot.slane %v303, %v1223
  %v1225 = vlaneseq
  %v1226 = vshrl.u32 %v1225, 7
  %v1227 = vsub.s32 0, %v1226
  %v1228 = vrot.slane %v304, %v1227
  %v1229 = vlaneseq
  %v1230 = vshrl.u32 %v1229, 7
  %v1231 = vsub.s32 0, %v1230
  %v1232 = vrot.slane %v305, %v1231
  %v1233 = vlaneseq
  %v1234 = vshrl.u32 %v1233, 7
  %v1235 = vsub.s32 0, %v1234
  %v1236 = vrot.slane %v306, %v1235
  %v1237 = vmul.f32 %v1219, %v1224
  %v1238 = vmul.f32 %v1219, %v1228
  %v1239 = vmul.f32 %v1219, %v1232
  %v1240 = vmul.f32 %v1219, %v1236
  %v1241 = vadd.f32 %v1213, %v1237
  %v1242 = vadd.f32 %v1214, %v1238
  %v1243 = vadd.f32 %v1215, %v1239
  %v1244 = vadd.f32 %v1216, %v1240
  %1245 = vset.pattern.permute.xlu0 29
  %1246 = vperm.xlu0 %1245, %v345
  %v1247 = vpop.permute.xlu0 %1246
  %v1249 = vlaneseq
  %v1250 = vshrl.u32 %v1249, 7
  %v1251 = vsub.s32 1, %v1250
  %v1252 = vrot.slane %v303, %v1251
  %v1253 = vlaneseq
  %v1254 = vshrl.u32 %v1253, 7
  %v1255 = vsub.s32 1, %v1254
  %v1256 = vrot.slane %v304, %v1255
  %v1257 = vlaneseq
  %v1258 = vshrl.u32 %v1257, 7
  %v1259 = vsub.s32 1, %v1258
  %v1260 = vrot.slane %v305, %v1259
  %v1261 = vlaneseq
  %v1262 = vshrl.u32 %v1261, 7
  %v1263 = vsub.s32 1, %v1262
  %v1264 = vrot.slane %v306, %v1263
  %v1265 = vmul.f32 %v1247, %v1252
  %v1266 = vmul.f32 %v1247, %v1256
  %v1267 = vmul.f32 %v1247, %v1260
  %v1268 = vmul.f32 %v1247, %v1264
  %v1269 = vadd.f32 %v1241, %v1265
  %v1270 = vadd.f32 %v1242, %v1266
  %v1271 = vadd.f32 %v1243, %v1267
  %v1272 = vadd.f32 %v1244, %v1268
  %1273 = vset.pattern.permute.xlu0 30
  %1274 = vperm.xlu0 %1273, %v345
  %v1275 = vpop.permute.xlu0 %1274
  %v1277 = vlaneseq
  %v1278 = vshrl.u32 %v1277, 7
  %v1279 = vsub.s32 2, %v1278
  %v1280 = vrot.slane %v303, %v1279
  %v1281 = vlaneseq
  %v1282 = vshrl.u32 %v1281, 7
  %v1283 = vsub.s32 2, %v1282
  %v1284 = vrot.slane %v304, %v1283
  %v1285 = vlaneseq
  %v1286 = vshrl.u32 %v1285, 7
  %v1287 = vsub.s32 2, %v1286
  %v1288 = vrot.slane %v305, %v1287
  %v1289 = vlaneseq
  %v1290 = vshrl.u32 %v1289, 7
  %v1291 = vsub.s32 2, %v1290
  %v1292 = vrot.slane %v306, %v1291
  %v1293 = vmul.f32 %v1275, %v1280
  %v1294 = vmul.f32 %v1275, %v1284
  %v1295 = vmul.f32 %v1275, %v1288
  %v1296 = vmul.f32 %v1275, %v1292
  %v1297 = vadd.f32 %v1269, %v1293
  %v1298 = vadd.f32 %v1270, %v1294
  %v1299 = vadd.f32 %v1271, %v1295
  %v1300 = vadd.f32 %v1272, %v1296
  %1301 = vset.pattern.permute.xlu0 31
  %1302 = vperm.xlu0 %1301, %v345
  %v1303 = vpop.permute.xlu0 %1302
  %v1305 = vlaneseq
  %v1306 = vshrl.u32 %v1305, 7
  %v1307 = vsub.s32 3, %v1306
  %v1308 = vrot.slane %v303, %v1307
  %v1309 = vlaneseq
  %v1310 = vshrl.u32 %v1309, 7
  %v1311 = vsub.s32 3, %v1310
  %v1312 = vrot.slane %v304, %v1311
  %v1313 = vlaneseq
  %v1314 = vshrl.u32 %v1313, 7
  %v1315 = vsub.s32 3, %v1314
  %v1316 = vrot.slane %v305, %v1315
  %v1317 = vlaneseq
  %v1318 = vshrl.u32 %v1317, 7
  %v1319 = vsub.s32 3, %v1318
  %v1320 = vrot.slane %v306, %v1319
  %v1321 = vmul.f32 %v1303, %v1308
  %v1322 = vmul.f32 %v1303, %v1312
  %v1323 = vmul.f32 %v1303, %v1316
  %v1324 = vmul.f32 %v1303, %v1320
  %v1325 = vadd.f32 %v1297, %v1321
  %v1326 = vadd.f32 %v1298, %v1322
  %v1327 = vadd.f32 %v1299, %v1323
  %v1328 = vadd.f32 %v1300, %v1324
  %1329 = vset.pattern.permute.xlu0 32
  %1330 = vperm.xlu0 %1329, %v345
  %v1331 = vpop.permute.xlu0 %1330
  %v1333 = vlaneseq
  %v1334 = vshrl.u32 %v1333, 7
  %v1335 = vsub.s32 0, %v1334
  %v1336 = vrot.slane %v341, %v1335
  %v1337 = vlaneseq
  %v1338 = vshrl.u32 %v1337, 7
  %v1339 = vsub.s32 0, %v1338
  %v1340 = vrot.slane %v342, %v1339
  %v1341 = vlaneseq
  %v1342 = vshrl.u32 %v1341, 7
  %v1343 = vsub.s32 0, %v1342
  %v1344 = vrot.slane %v343, %v1343
  %v1345 = vlaneseq
  %v1346 = vshrl.u32 %v1345, 7
  %v1347 = vsub.s32 0, %v1346
  %v1348 = vrot.slane %v344, %v1347
  %v1349 = vmul.f32 %v1331, %v1336
  %v1350 = vmul.f32 %v1331, %v1340
  %v1351 = vmul.f32 %v1331, %v1344
  %v1352 = vmul.f32 %v1331, %v1348
  %v1353 = vadd.f32 %v1325, %v1349
  %v1354 = vadd.f32 %v1326, %v1350
  %v1355 = vadd.f32 %v1327, %v1351
  %v1356 = vadd.f32 %v1328, %v1352
  %1357 = vset.pattern.permute.xlu0 33
  %1358 = vperm.xlu0 %1357, %v345
  %v1359 = vpop.permute.xlu0 %1358
  %v1361 = vlaneseq
  %v1362 = vshrl.u32 %v1361, 7
  %v1363 = vsub.s32 1, %v1362
  %v1364 = vrot.slane %v341, %v1363
  %v1365 = vlaneseq
  %v1366 = vshrl.u32 %v1365, 7
  %v1367 = vsub.s32 1, %v1366
  %v1368 = vrot.slane %v342, %v1367
  %v1369 = vlaneseq
  %v1370 = vshrl.u32 %v1369, 7
  %v1371 = vsub.s32 1, %v1370
  %v1372 = vrot.slane %v343, %v1371
  %v1373 = vlaneseq
  %v1374 = vshrl.u32 %v1373, 7
  %v1375 = vsub.s32 1, %v1374
  %v1376 = vrot.slane %v344, %v1375
  %v1377 = vmul.f32 %v1359, %v1364
  %v1378 = vmul.f32 %v1359, %v1368
  %v1379 = vmul.f32 %v1359, %v1372
  %v1380 = vmul.f32 %v1359, %v1376
  %v1381 = vadd.f32 %v1353, %v1377
  %v1382 = vadd.f32 %v1354, %v1378
  %v1383 = vadd.f32 %v1355, %v1379
  %v1384 = vadd.f32 %v1356, %v1380
  %1385 = vset.pattern.permute.xlu0 34
  %1386 = vperm.xlu0 %1385, %v345
  %v1387 = vpop.permute.xlu0 %1386
  %v1389 = vlaneseq
  %v1390 = vshrl.u32 %v1389, 7
  %v1391 = vsub.s32 2, %v1390
  %v1392 = vrot.slane %v341, %v1391
  %v1393 = vlaneseq
  %v1394 = vshrl.u32 %v1393, 7
  %v1395 = vsub.s32 2, %v1394
  %v1396 = vrot.slane %v342, %v1395
  %v1397 = vlaneseq
  %v1398 = vshrl.u32 %v1397, 7
  %v1399 = vsub.s32 2, %v1398
  %v1400 = vrot.slane %v343, %v1399
  %v1401 = vlaneseq
  %v1402 = vshrl.u32 %v1401, 7
  %v1403 = vsub.s32 2, %v1402
  %v1404 = vrot.slane %v344, %v1403
  %v1405 = vmul.f32 %v1387, %v1392
  %v1406 = vmul.f32 %v1387, %v1396
  %v1407 = vmul.f32 %v1387, %v1400
  %v1408 = vmul.f32 %v1387, %v1404
  %v1409 = vadd.f32 %v1381, %v1405
  %v1410 = vadd.f32 %v1382, %v1406
  %v1411 = vadd.f32 %v1383, %v1407
  %v1412 = vadd.f32 %v1384, %v1408
  %1413 = vset.pattern.permute.xlu0 35
  %1414 = vperm.xlu0 %1413, %v345
  %v1415 = vpop.permute.xlu0 %1414
  %v1417 = vlaneseq
  %v1418 = vshrl.u32 %v1417, 7
  %v1419 = vsub.s32 3, %v1418
  %v1420 = vrot.slane %v341, %v1419
  %v1421 = vlaneseq
  %v1422 = vshrl.u32 %v1421, 7
  %v1423 = vsub.s32 3, %v1422
  %v1424 = vrot.slane %v342, %v1423
  %v1425 = vlaneseq
  %v1426 = vshrl.u32 %v1425, 7
  %v1427 = vsub.s32 3, %v1426
  %v1428 = vrot.slane %v343, %v1427
  %v1429 = vlaneseq
  %v1430 = vshrl.u32 %v1429, 7
  %v1431 = vsub.s32 3, %v1430
  %v1432 = vrot.slane %v344, %v1431
  %v1433 = vmul.f32 %v1415, %v1420
  %v1434 = vmul.f32 %v1415, %v1424
  %v1435 = vmul.f32 %v1415, %v1428
  %v1436 = vmul.f32 %v1415, %v1432
  %v1437 = vadd.f32 %v1409, %v1433
  %v1438 = vadd.f32 %v1410, %v1434
  %v1439 = vadd.f32 %v1411, %v1435
  %v1440 = vadd.f32 %v1412, %v1436
  %v1441 = vxor.u32 %v1437, 2147483648
  %v1442 = vxor.u32 %v1438, 2147483648
  %v1443 = vxor.u32 %v1439, 2147483648
  %v1444 = vxor.u32 %v1440, 2147483648
  %v1445 = vmul.f32 %v1441, 1.442695
  %v1446 = vpow.pop %v1445
  %v1447 = vmul.f32 %v1442, 1.442695
  %v1448 = vpow.pop %v1447
  %v1449 = vmul.f32 %v1443, 1.442695
  %v1450 = vpow.pop %v1449
  %v1451 = vmul.f32 %v1444, 1.442695
  %v1452 = vpow.pop %v1451
  %v1453 = vadd.f32 %v1446, 1.0
  %v1454 = vadd.f32 %v1448, 1.0
  %v1455 = vadd.f32 %v1450, 1.0
  %v1456 = vadd.f32 %v1452, 1.0
  %v1457 = vrcp.pop %v1453
  %v1458 = vmul.f32 1.0, %v1457
  %v1459 = vrcp.pop %v1454
  %v1460 = vmul.f32 1.0, %v1459
  %v1461 = vrcp.pop %v1455
  %v1462 = vmul.f32 1.0, %v1461
  %v1463 = vrcp.pop %v1456
  %v1464 = vmul.f32 1.0, %v1463
  %v1465 = vmul.f32 %v1437, %v1458
  %v1466 = vmul.f32 %v1438, %v1460
  %v1467 = vmul.f32 %v1439, %v1462
  %v1468 = vmul.f32 %v1440, %v1464
  %1469 = vrot.lane.b32.xlu0 %v1465, 17
  %v1470 = vpop.permute.xlu0 %1469
  %1471 = vrot.lane.b32.xlu0 %v1466, 17
  %v1472 = vpop.permute.xlu0 %1471
  %1473 = vrot.lane.b32.xlu0 %v1467, 17
  %v1474 = vpop.permute.xlu0 %1473
  %1475 = vrot.lane.b32.xlu0 %v1468, 17
  %v1476 = vpop.permute.xlu0 %1475
  %v1477 = vsel %vm49, %v1474, %v1476
  %v1478 = vsel %vm49, %v1472, %v1474
  %v1479 = vsel %vm49, %v1470, %v1472
  %v1480 = vsel %vm49, %v1476, %v1470
  %v1481 = vmul.f32 %v1480, %v58
  %v1482 = vmul.f32 %v1479, %v62
  %v1483 = vmul.f32 %v1478, %v66
  %v1484 = vmul.f32 %v1477, %v70
  %1485 = vrot.lane.b32.xlu0 %v1465, 16
  %v1486 = vpop.permute.xlu0 %1485
  %1487 = vrot.lane.b32.xlu0 %v1466, 16
  %v1488 = vpop.permute.xlu0 %1487
  %1489 = vrot.lane.b32.xlu0 %v1467, 16
  %v1490 = vpop.permute.xlu0 %1489
  %1491 = vrot.lane.b32.xlu0 %v1468, 16
  %v1492 = vpop.permute.xlu0 %1491
  %v1493 = vsel %vm87, %v1490, %v1492
  %v1494 = vsel %vm87, %v1488, %v1490
  %v1495 = vsel %vm87, %v1486, %v1488
  %v1496 = vsel %vm87, %v1492, %v1486
  %v1497 = vmul.f32 %v1496, %v96
  %v1498 = vmul.f32 %v1495, %v100
  %v1499 = vmul.f32 %v1494, %v104
  %v1500 = vmul.f32 %v1493, %v108
  %1501 = vrot.lane.b32.xlu0 %v1465, 15
  %v1502 = vpop.permute.xlu0 %1501
  %1503 = vrot.lane.b32.xlu0 %v1466, 15
  %v1504 = vpop.permute.xlu0 %1503
  %1505 = vrot.lane.b32.xlu0 %v1467, 15
  %v1506 = vpop.permute.xlu0 %1505
  %1507 = vrot.lane.b32.xlu0 %v1468, 15
  %v1508 = vpop.permute.xlu0 %1507
  %v1509 = vsel %vm125, %v1506, %v1508
  %v1510 = vsel %vm125, %v1504, %v1506
  %v1511 = vsel %vm125, %v1502, %v1504
  %v1512 = vsel %vm125, %v1508, %v1502
  %v1513 = vmul.f32 %v1512, %v134
  %v1514 = vmul.f32 %v1511, %v138
  %v1515 = vmul.f32 %v1510, %v142
  %v1516 = vmul.f32 %v1509, %v146
  %1517 = vrot.lane.b32.xlu0 %v1465, 1
  %v1518 = vpop.permute.xlu0 %1517
  %1519 = vrot.lane.b32.xlu0 %v1466, 1
  %v1520 = vpop.permute.xlu0 %1519
  %1521 = vrot.lane.b32.xlu0 %v1467, 1
  %v1522 = vpop.permute.xlu0 %1521
  %1523 = vrot.lane.b32.xlu0 %v1468, 1
  %v1524 = vpop.permute.xlu0 %1523
  %v1525 = vsel %vm163, %v1522, %v1524
  %v1526 = vsel %vm163, %v1520, %v1522
  %v1527 = vsel %vm163, %v1518, %v1520
  %v1528 = vsel %vm163, %v1524, %v1518
  %v1529 = vmul.f32 %v1528, %v172
  %v1530 = vmul.f32 %v1527, %v176
  %v1531 = vmul.f32 %v1526, %v180
  %v1532 = vmul.f32 %v1525, %v184
  %1533 = vrot.lane.b32.xlu0 %v1465, 127
  %v1534 = vpop.permute.xlu0 %1533
  %1535 = vrot.lane.b32.xlu0 %v1466, 127
  %v1536 = vpop.permute.xlu0 %1535
  %1537 = vrot.lane.b32.xlu0 %v1467, 127
  %v1538 = vpop.permute.xlu0 %1537
  %1539 = vrot.lane.b32.xlu0 %v1468, 127
  %v1540 = vpop.permute.xlu0 %1539
  %v1541 = vsel %vm201, %v1538, %v1540
  %v1542 = vsel %vm201, %v1536, %v1538
  %v1543 = vsel %vm201, %v1534, %v1536
  %v1544 = vsel %vm201, %v1540, %v1534
  %v1545 = vmul.f32 %v1543, %v210
  %v1546 = vmul.f32 %v1542, %v214
  %v1547 = vmul.f32 %v1541, %v218
  %v1548 = vmul.f32 %v1544, %v222
  %1549 = vrot.lane.b32.xlu0 %v1465, 113
  %v1550 = vpop.permute.xlu0 %1549
  %1551 = vrot.lane.b32.xlu0 %v1466, 113
  %v1552 = vpop.permute.xlu0 %1551
  %1553 = vrot.lane.b32.xlu0 %v1467, 113
  %v1554 = vpop.permute.xlu0 %1553
  %1555 = vrot.lane.b32.xlu0 %v1468, 113
  %v1556 = vpop.permute.xlu0 %1555
  %v1557 = vsel %vm239, %v1554, %v1556
  %v1558 = vsel %vm239, %v1552, %v1554
  %v1559 = vsel %vm239, %v1550, %v1552
  %v1560 = vsel %vm239, %v1556, %v1550
  %v1561 = vmul.f32 %v1559, %v248
  %v1562 = vmul.f32 %v1558, %v252
  %v1563 = vmul.f32 %v1557, %v256
  %v1564 = vmul.f32 %v1560, %v260
  %1565 = vrot.lane.b32.xlu0 %v1465, 112
  %v1566 = vpop.permute.xlu0 %1565
  %1567 = vrot.lane.b32.xlu0 %v1466, 112
  %v1568 = vpop.permute.xlu0 %1567
  %1569 = vrot.lane.b32.xlu0 %v1467, 112
  %v1570 = vpop.permute.xlu0 %1569
  %1571 = vrot.lane.b32.xlu0 %v1468, 112
  %v1572 = vpop.permute.xlu0 %1571
  %v1573 = vsel %vm277, %v1570, %v1572
  %v1574 = vsel %vm277, %v1568, %v1570
  %v1575 = vsel %vm277, %v1566, %v1568
  %v1576 = vsel %vm277, %v1572, %v1566
  %v1577 = vmul.f32 %v1575, %v286
  %v1578 = vmul.f32 %v1574, %v290
  %v1579 = vmul.f32 %v1573, %v294
  %v1580 = vmul.f32 %v1576, %v298
  %1581 = vrot.lane.b32.xlu0 %v1465, 111
  %v1582 = vpop.permute.xlu0 %1581
  %1583 = vrot.lane.b32.xlu0 %v1466, 111
  %v1584 = vpop.permute.xlu0 %1583
  %1585 = vrot.lane.b32.xlu0 %v1467, 111
  %v1586 = vpop.permute.xlu0 %1585
  %1587 = vrot.lane.b32.xlu0 %v1468, 111
  %v1588 = vpop.permute.xlu0 %1587
  %v1589 = vsel %vm315, %v1586, %v1588
  %v1590 = vsel %vm315, %v1584, %v1586
  %v1591 = vsel %vm315, %v1582, %v1584
  %v1592 = vsel %vm315, %v1588, %v1582
  %v1593 = vmul.f32 %v1591, %v324
  %v1594 = vmul.f32 %v1590, %v328
  %v1595 = vmul.f32 %v1589, %v332
  %v1596 = vmul.f32 %v1592, %v336
  %v1597 = vld [vmem:[%s4] sm:$0xf]
  %v1598 = vld [vmem:[%s5] sm:$0xf]
  %1600 = vset.pattern.permute.xlu0 0
  %1601 = vperm.xlu0 %1600, %v1598
  %v1602 = vpop.permute.xlu0 %1601
  %1605 = vset.pattern.permute.xlu0 0
  %1606 = vperm.xlu0 %1605, %v1597
  %v1607 = vpop.permute.xlu0 %1606
  %v1609 = vlaneseq
  %v1610 = vshrl.u32 %v1609, 7
  %v1611 = vsub.s32 0, %v1610
  %v1612 = vrot.slane %v1481, %v1611
  %v1613 = vlaneseq
  %v1614 = vshrl.u32 %v1613, 7
  %v1615 = vsub.s32 0, %v1614
  %v1616 = vrot.slane %v1482, %v1615
  %v1617 = vlaneseq
  %v1618 = vshrl.u32 %v1617, 7
  %v1619 = vsub.s32 0, %v1618
  %v1620 = vrot.slane %v1483, %v1619
  %v1621 = vlaneseq
  %v1622 = vshrl.u32 %v1621, 7
  %v1623 = vsub.s32 0, %v1622
  %v1624 = vrot.slane %v1484, %v1623
  %v1625 = vmul.f32 %v1607, %v1612
  %v1626 = vmul.f32 %v1607, %v1616
  %v1627 = vmul.f32 %v1607, %v1620
  %v1628 = vmul.f32 %v1607, %v1624
  %v1629 = vadd.f32 %v1602, %v1625
  %v1630 = vadd.f32 %v1602, %v1626
  %v1631 = vadd.f32 %v1602, %v1627
  %v1632 = vadd.f32 %v1602, %v1628
  %1633 = vset.pattern.permute.xlu0 1
  %1634 = vperm.xlu0 %1633, %v1597
  %v1635 = vpop.permute.xlu0 %1634
  %v1637 = vlaneseq
  %v1638 = vshrl.u32 %v1637, 7
  %v1639 = vsub.s32 1, %v1638
  %v1640 = vrot.slane %v1481, %v1639
  %v1641 = vlaneseq
  %v1642 = vshrl.u32 %v1641, 7
  %v1643 = vsub.s32 1, %v1642
  %v1644 = vrot.slane %v1482, %v1643
  %v1645 = vlaneseq
  %v1646 = vshrl.u32 %v1645, 7
  %v1647 = vsub.s32 1, %v1646
  %v1648 = vrot.slane %v1483, %v1647
  %v1649 = vlaneseq
  %v1650 = vshrl.u32 %v1649, 7
  %v1651 = vsub.s32 1, %v1650
  %v1652 = vrot.slane %v1484, %v1651
  %v1653 = vmul.f32 %v1635, %v1640
  %v1654 = vmul.f32 %v1635, %v1644
  %v1655 = vmul.f32 %v1635, %v1648
  %v1656 = vmul.f32 %v1635, %v1652
  %v1657 = vadd.f32 %v1629, %v1653
  %v1658 = vadd.f32 %v1630, %v1654
  %v1659 = vadd.f32 %v1631, %v1655
  %v1660 = vadd.f32 %v1632, %v1656
  %1661 = vset.pattern.permute.xlu0 2
  %1662 = vperm.xlu0 %1661, %v1597
  %v1663 = vpop.permute.xlu0 %1662
  %v1665 = vlaneseq
  %v1666 = vshrl.u32 %v1665, 7
  %v1667 = vsub.s32 2, %v1666
  %v1668 = vrot.slane %v1481, %v1667
  %v1669 = vlaneseq
  %v1670 = vshrl.u32 %v1669, 7
  %v1671 = vsub.s32 2, %v1670
  %v1672 = vrot.slane %v1482, %v1671
  %v1673 = vlaneseq
  %v1674 = vshrl.u32 %v1673, 7
  %v1675 = vsub.s32 2, %v1674
  %v1676 = vrot.slane %v1483, %v1675
  %v1677 = vlaneseq
  %v1678 = vshrl.u32 %v1677, 7
  %v1679 = vsub.s32 2, %v1678
  %v1680 = vrot.slane %v1484, %v1679
  %v1681 = vmul.f32 %v1663, %v1668
  %v1682 = vmul.f32 %v1663, %v1672
  %v1683 = vmul.f32 %v1663, %v1676
  %v1684 = vmul.f32 %v1663, %v1680
  %v1685 = vadd.f32 %v1657, %v1681
  %v1686 = vadd.f32 %v1658, %v1682
  %v1687 = vadd.f32 %v1659, %v1683
  %v1688 = vadd.f32 %v1660, %v1684
  %1689 = vset.pattern.permute.xlu0 3
  %1690 = vperm.xlu0 %1689, %v1597
  %v1691 = vpop.permute.xlu0 %1690
  %v1693 = vlaneseq
  %v1694 = vshrl.u32 %v1693, 7
  %v1695 = vsub.s32 3, %v1694
  %v1696 = vrot.slane %v1481, %v1695
  %v1697 = vlaneseq
  %v1698 = vshrl.u32 %v1697, 7
  %v1699 = vsub.s32 3, %v1698
  %v1700 = vrot.slane %v1482, %v1699
  %v1701 = vlaneseq
  %v1702 = vshrl.u32 %v1701, 7
  %v1703 = vsub.s32 3, %v1702
  %v1704 = vrot.slane %v1483, %v1703
  %v1705 = vlaneseq
  %v1706 = vshrl.u32 %v1705, 7
  %v1707 = vsub.s32 3, %v1706
  %v1708 = vrot.slane %v1484, %v1707
  %v1709 = vmul.f32 %v1691, %v1696
  %v1710 = vmul.f32 %v1691, %v1700
  %v1711 = vmul.f32 %v1691, %v1704
  %v1712 = vmul.f32 %v1691, %v1708
  %v1713 = vadd.f32 %v1685, %v1709
  %v1714 = vadd.f32 %v1686, %v1710
  %v1715 = vadd.f32 %v1687, %v1711
  %v1716 = vadd.f32 %v1688, %v1712
  %1717 = vset.pattern.permute.xlu0 4
  %1718 = vperm.xlu0 %1717, %v1597
  %v1719 = vpop.permute.xlu0 %1718
  %v1721 = vlaneseq
  %v1722 = vshrl.u32 %v1721, 7
  %v1723 = vsub.s32 0, %v1722
  %v1724 = vrot.slane %v1497, %v1723
  %v1725 = vlaneseq
  %v1726 = vshrl.u32 %v1725, 7
  %v1727 = vsub.s32 0, %v1726
  %v1728 = vrot.slane %v1498, %v1727
  %v1729 = vlaneseq
  %v1730 = vshrl.u32 %v1729, 7
  %v1731 = vsub.s32 0, %v1730
  %v1732 = vrot.slane %v1499, %v1731
  %v1733 = vlaneseq
  %v1734 = vshrl.u32 %v1733, 7
  %v1735 = vsub.s32 0, %v1734
  %v1736 = vrot.slane %v1500, %v1735
  %v1737 = vmul.f32 %v1719, %v1724
  %v1738 = vmul.f32 %v1719, %v1728
  %v1739 = vmul.f32 %v1719, %v1732
  %v1740 = vmul.f32 %v1719, %v1736
  %v1741 = vadd.f32 %v1713, %v1737
  %v1742 = vadd.f32 %v1714, %v1738
  %v1743 = vadd.f32 %v1715, %v1739
  %v1744 = vadd.f32 %v1716, %v1740
  %1745 = vset.pattern.permute.xlu0 5
  %1746 = vperm.xlu0 %1745, %v1597
  %v1747 = vpop.permute.xlu0 %1746
  %v1749 = vlaneseq
  %v1750 = vshrl.u32 %v1749, 7
  %v1751 = vsub.s32 1, %v1750
  %v1752 = vrot.slane %v1497, %v1751
  %v1753 = vlaneseq
  %v1754 = vshrl.u32 %v1753, 7
  %v1755 = vsub.s32 1, %v1754
  %v1756 = vrot.slane %v1498, %v1755
  %v1757 = vlaneseq
  %v1758 = vshrl.u32 %v1757, 7
  %v1759 = vsub.s32 1, %v1758
  %v1760 = vrot.slane %v1499, %v1759
  %v1761 = vlaneseq
  %v1762 = vshrl.u32 %v1761, 7
  %v1763 = vsub.s32 1, %v1762
  %v1764 = vrot.slane %v1500, %v1763
  %v1765 = vmul.f32 %v1747, %v1752
  %v1766 = vmul.f32 %v1747, %v1756
  %v1767 = vmul.f32 %v1747, %v1760
  %v1768 = vmul.f32 %v1747, %v1764
  %v1769 = vadd.f32 %v1741, %v1765
  %v1770 = vadd.f32 %v1742, %v1766
  %v1771 = vadd.f32 %v1743, %v1767
  %v1772 = vadd.f32 %v1744, %v1768
  %1773 = vset.pattern.permute.xlu0 6
  %1774 = vperm.xlu0 %1773, %v1597
  %v1775 = vpop.permute.xlu0 %1774
  %v1777 = vlaneseq
  %v1778 = vshrl.u32 %v1777, 7
  %v1779 = vsub.s32 2, %v1778
  %v1780 = vrot.slane %v1497, %v1779
  %v1781 = vlaneseq
  %v1782 = vshrl.u32 %v1781, 7
  %v1783 = vsub.s32 2, %v1782
  %v1784 = vrot.slane %v1498, %v1783
  %v1785 = vlaneseq
  %v1786 = vshrl.u32 %v1785, 7
  %v1787 = vsub.s32 2, %v1786
  %v1788 = vrot.slane %v1499, %v1787
  %v1789 = vlaneseq
  %v1790 = vshrl.u32 %v1789, 7
  %v1791 = vsub.s32 2, %v1790
  %v1792 = vrot.slane %v1500, %v1791
  %v1793 = vmul.f32 %v1775, %v1780
  %v1794 = vmul.f32 %v1775, %v1784
  %v1795 = vmul.f32 %v1775, %v1788
  %v1796 = vmul.f32 %v1775, %v1792
  %v1797 = vadd.f32 %v1769, %v1793
  %v1798 = vadd.f32 %v1770, %v1794
  %v1799 = vadd.f32 %v1771, %v1795
  %v1800 = vadd.f32 %v1772, %v1796
  %1801 = vset.pattern.permute.xlu0 7
  %1802 = vperm.xlu0 %1801, %v1597
  %v1803 = vpop.permute.xlu0 %1802
  %v1805 = vlaneseq
  %v1806 = vshrl.u32 %v1805, 7
  %v1807 = vsub.s32 3, %v1806
  %v1808 = vrot.slane %v1497, %v1807
  %v1809 = vlaneseq
  %v1810 = vshrl.u32 %v1809, 7
  %v1811 = vsub.s32 3, %v1810
  %v1812 = vrot.slane %v1498, %v1811
  %v1813 = vlaneseq
  %v1814 = vshrl.u32 %v1813, 7
  %v1815 = vsub.s32 3, %v1814
  %v1816 = vrot.slane %v1499, %v1815
  %v1817 = vlaneseq
  %v1818 = vshrl.u32 %v1817, 7
  %v1819 = vsub.s32 3, %v1818
  %v1820 = vrot.slane %v1500, %v1819
  %v1821 = vmul.f32 %v1803, %v1808
  %v1822 = vmul.f32 %v1803, %v1812
  %v1823 = vmul.f32 %v1803, %v1816
  %v1824 = vmul.f32 %v1803, %v1820
  %v1825 = vadd.f32 %v1797, %v1821
  %v1826 = vadd.f32 %v1798, %v1822
  %v1827 = vadd.f32 %v1799, %v1823
  %v1828 = vadd.f32 %v1800, %v1824
  %1829 = vset.pattern.permute.xlu0 8
  %1830 = vperm.xlu0 %1829, %v1597
  %v1831 = vpop.permute.xlu0 %1830
  %v1833 = vlaneseq
  %v1834 = vshrl.u32 %v1833, 7
  %v1835 = vsub.s32 0, %v1834
  %v1836 = vrot.slane %v1513, %v1835
  %v1837 = vlaneseq
  %v1838 = vshrl.u32 %v1837, 7
  %v1839 = vsub.s32 0, %v1838
  %v1840 = vrot.slane %v1514, %v1839
  %v1841 = vlaneseq
  %v1842 = vshrl.u32 %v1841, 7
  %v1843 = vsub.s32 0, %v1842
  %v1844 = vrot.slane %v1515, %v1843
  %v1845 = vlaneseq
  %v1846 = vshrl.u32 %v1845, 7
  %v1847 = vsub.s32 0, %v1846
  %v1848 = vrot.slane %v1516, %v1847
  %v1849 = vmul.f32 %v1831, %v1836
  %v1850 = vmul.f32 %v1831, %v1840
  %v1851 = vmul.f32 %v1831, %v1844
  %v1852 = vmul.f32 %v1831, %v1848
  %v1853 = vadd.f32 %v1825, %v1849
  %v1854 = vadd.f32 %v1826, %v1850
  %v1855 = vadd.f32 %v1827, %v1851
  %v1856 = vadd.f32 %v1828, %v1852
  %1857 = vset.pattern.permute.xlu0 9
  %1858 = vperm.xlu0 %1857, %v1597
  %v1859 = vpop.permute.xlu0 %1858
  %v1861 = vlaneseq
  %v1862 = vshrl.u32 %v1861, 7
  %v1863 = vsub.s32 1, %v1862
  %v1864 = vrot.slane %v1513, %v1863
  %v1865 = vlaneseq
  %v1866 = vshrl.u32 %v1865, 7
  %v1867 = vsub.s32 1, %v1866
  %v1868 = vrot.slane %v1514, %v1867
  %v1869 = vlaneseq
  %v1870 = vshrl.u32 %v1869, 7
  %v1871 = vsub.s32 1, %v1870
  %v1872 = vrot.slane %v1515, %v1871
  %v1873 = vlaneseq
  %v1874 = vshrl.u32 %v1873, 7
  %v1875 = vsub.s32 1, %v1874
  %v1876 = vrot.slane %v1516, %v1875
  %v1877 = vmul.f32 %v1859, %v1864
  %v1878 = vmul.f32 %v1859, %v1868
  %v1879 = vmul.f32 %v1859, %v1872
  %v1880 = vmul.f32 %v1859, %v1876
  %v1881 = vadd.f32 %v1853, %v1877
  %v1882 = vadd.f32 %v1854, %v1878
  %v1883 = vadd.f32 %v1855, %v1879
  %v1884 = vadd.f32 %v1856, %v1880
  %1885 = vset.pattern.permute.xlu0 10
  %1886 = vperm.xlu0 %1885, %v1597
  %v1887 = vpop.permute.xlu0 %1886
  %v1889 = vlaneseq
  %v1890 = vshrl.u32 %v1889, 7
  %v1891 = vsub.s32 2, %v1890
  %v1892 = vrot.slane %v1513, %v1891
  %v1893 = vlaneseq
  %v1894 = vshrl.u32 %v1893, 7
  %v1895 = vsub.s32 2, %v1894
  %v1896 = vrot.slane %v1514, %v1895
  %v1897 = vlaneseq
  %v1898 = vshrl.u32 %v1897, 7
  %v1899 = vsub.s32 2, %v1898
  %v1900 = vrot.slane %v1515, %v1899
  %v1901 = vlaneseq
  %v1902 = vshrl.u32 %v1901, 7
  %v1903 = vsub.s32 2, %v1902
  %v1904 = vrot.slane %v1516, %v1903
  %v1905 = vmul.f32 %v1887, %v1892
  %v1906 = vmul.f32 %v1887, %v1896
  %v1907 = vmul.f32 %v1887, %v1900
  %v1908 = vmul.f32 %v1887, %v1904
  %v1909 = vadd.f32 %v1881, %v1905
  %v1910 = vadd.f32 %v1882, %v1906
  %v1911 = vadd.f32 %v1883, %v1907
  %v1912 = vadd.f32 %v1884, %v1908
  %1913 = vset.pattern.permute.xlu0 11
  %1914 = vperm.xlu0 %1913, %v1597
  %v1915 = vpop.permute.xlu0 %1914
  %v1917 = vlaneseq
  %v1918 = vshrl.u32 %v1917, 7
  %v1919 = vsub.s32 3, %v1918
  %v1920 = vrot.slane %v1513, %v1919
  %v1921 = vlaneseq
  %v1922 = vshrl.u32 %v1921, 7
  %v1923 = vsub.s32 3, %v1922
  %v1924 = vrot.slane %v1514, %v1923
  %v1925 = vlaneseq
  %v1926 = vshrl.u32 %v1925, 7
  %v1927 = vsub.s32 3, %v1926
  %v1928 = vrot.slane %v1515, %v1927
  %v1929 = vlaneseq
  %v1930 = vshrl.u32 %v1929, 7
  %v1931 = vsub.s32 3, %v1930
  %v1932 = vrot.slane %v1516, %v1931
  %v1933 = vmul.f32 %v1915, %v1920
  %v1934 = vmul.f32 %v1915, %v1924
  %v1935 = vmul.f32 %v1915, %v1928
  %v1936 = vmul.f32 %v1915, %v1932
  %v1937 = vadd.f32 %v1909, %v1933
  %v1938 = vadd.f32 %v1910, %v1934
  %v1939 = vadd.f32 %v1911, %v1935
  %v1940 = vadd.f32 %v1912, %v1936
  %1941 = vset.pattern.permute.xlu0 12
  %1942 = vperm.xlu0 %1941, %v1597
  %v1943 = vpop.permute.xlu0 %1942
  %v1945 = vlaneseq
  %v1946 = vshrl.u32 %v1945, 7
  %v1947 = vsub.s32 0, %v1946
  %v1948 = vrot.slane %v1529, %v1947
  %v1949 = vlaneseq
  %v1950 = vshrl.u32 %v1949, 7
  %v1951 = vsub.s32 0, %v1950
  %v1952 = vrot.slane %v1530, %v1951
  %v1953 = vlaneseq
  %v1954 = vshrl.u32 %v1953, 7
  %v1955 = vsub.s32 0, %v1954
  %v1956 = vrot.slane %v1531, %v1955
  %v1957 = vlaneseq
  %v1958 = vshrl.u32 %v1957, 7
  %v1959 = vsub.s32 0, %v1958
  %v1960 = vrot.slane %v1532, %v1959
  %v1961 = vmul.f32 %v1943, %v1948
  %v1962 = vmul.f32 %v1943, %v1952
  %v1963 = vmul.f32 %v1943, %v1956
  %v1964 = vmul.f32 %v1943, %v1960
  %v1965 = vadd.f32 %v1937, %v1961
  %v1966 = vadd.f32 %v1938, %v1962
  %v1967 = vadd.f32 %v1939, %v1963
  %v1968 = vadd.f32 %v1940, %v1964
  %1969 = vset.pattern.permute.xlu0 13
  %1970 = vperm.xlu0 %1969, %v1597
  %v1971 = vpop.permute.xlu0 %1970
  %v1973 = vlaneseq
  %v1974 = vshrl.u32 %v1973, 7
  %v1975 = vsub.s32 1, %v1974
  %v1976 = vrot.slane %v1529, %v1975
  %v1977 = vlaneseq
  %v1978 = vshrl.u32 %v1977, 7
  %v1979 = vsub.s32 1, %v1978
  %v1980 = vrot.slane %v1530, %v1979
  %v1981 = vlaneseq
  %v1982 = vshrl.u32 %v1981, 7
  %v1983 = vsub.s32 1, %v1982
  %v1984 = vrot.slane %v1531, %v1983
  %v1985 = vlaneseq
  %v1986 = vshrl.u32 %v1985, 7
  %v1987 = vsub.s32 1, %v1986
  %v1988 = vrot.slane %v1532, %v1987
  %v1989 = vmul.f32 %v1971, %v1976
  %v1990 = vmul.f32 %v1971, %v1980
  %v1991 = vmul.f32 %v1971, %v1984
  %v1992 = vmul.f32 %v1971, %v1988
  %v1993 = vadd.f32 %v1965, %v1989
  %v1994 = vadd.f32 %v1966, %v1990
  %v1995 = vadd.f32 %v1967, %v1991
  %v1996 = vadd.f32 %v1968, %v1992
  %1997 = vset.pattern.permute.xlu0 14
  %1998 = vperm.xlu0 %1997, %v1597
  %v1999 = vpop.permute.xlu0 %1998
  %v2001 = vlaneseq
  %v2002 = vshrl.u32 %v2001, 7
  %v2003 = vsub.s32 2, %v2002
  %v2004 = vrot.slane %v1529, %v2003
  %v2005 = vlaneseq
  %v2006 = vshrl.u32 %v2005, 7
  %v2007 = vsub.s32 2, %v2006
  %v2008 = vrot.slane %v1530, %v2007
  %v2009 = vlaneseq
  %v2010 = vshrl.u32 %v2009, 7
  %v2011 = vsub.s32 2, %v2010
  %v2012 = vrot.slane %v1531, %v2011
  %v2013 = vlaneseq
  %v2014 = vshrl.u32 %v2013, 7
  %v2015 = vsub.s32 2, %v2014
  %v2016 = vrot.slane %v1532, %v2015
  %v2017 = vmul.f32 %v1999, %v2004
  %v2018 = vmul.f32 %v1999, %v2008
  %v2019 = vmul.f32 %v1999, %v2012
  %v2020 = vmul.f32 %v1999, %v2016
  %v2021 = vadd.f32 %v1993, %v2017
  %v2022 = vadd.f32 %v1994, %v2018
  %v2023 = vadd.f32 %v1995, %v2019
  %v2024 = vadd.f32 %v1996, %v2020
  %2025 = vset.pattern.permute.xlu0 15
  %2026 = vperm.xlu0 %2025, %v1597
  %v2027 = vpop.permute.xlu0 %2026
  %v2029 = vlaneseq
  %v2030 = vshrl.u32 %v2029, 7
  %v2031 = vsub.s32 3, %v2030
  %v2032 = vrot.slane %v1529, %v2031
  %v2033 = vlaneseq
  %v2034 = vshrl.u32 %v2033, 7
  %v2035 = vsub.s32 3, %v2034
  %v2036 = vrot.slane %v1530, %v2035
  %v2037 = vlaneseq
  %v2038 = vshrl.u32 %v2037, 7
  %v2039 = vsub.s32 3, %v2038
  %v2040 = vrot.slane %v1531, %v2039
  %v2041 = vlaneseq
  %v2042 = vshrl.u32 %v2041, 7
  %v2043 = vsub.s32 3, %v2042
  %v2044 = vrot.slane %v1532, %v2043
  %v2045 = vmul.f32 %v2027, %v2032
  %v2046 = vmul.f32 %v2027, %v2036
  %v2047 = vmul.f32 %v2027, %v2040
  %v2048 = vmul.f32 %v2027, %v2044
  %v2049 = vadd.f32 %v2021, %v2045
  %v2050 = vadd.f32 %v2022, %v2046
  %v2051 = vadd.f32 %v2023, %v2047
  %v2052 = vadd.f32 %v2024, %v2048
  %2053 = vset.pattern.permute.xlu0 16
  %2054 = vperm.xlu0 %2053, %v1597
  %v2055 = vpop.permute.xlu0 %2054
  %v2057 = vlaneseq
  %v2058 = vshrl.u32 %v2057, 7
  %v2059 = vsub.s32 0, %v2058
  %v2060 = vrot.slane %v1465, %v2059
  %v2061 = vlaneseq
  %v2062 = vshrl.u32 %v2061, 7
  %v2063 = vsub.s32 0, %v2062
  %v2064 = vrot.slane %v1466, %v2063
  %v2065 = vlaneseq
  %v2066 = vshrl.u32 %v2065, 7
  %v2067 = vsub.s32 0, %v2066
  %v2068 = vrot.slane %v1467, %v2067
  %v2069 = vlaneseq
  %v2070 = vshrl.u32 %v2069, 7
  %v2071 = vsub.s32 0, %v2070
  %v2072 = vrot.slane %v1468, %v2071
  %v2073 = vmul.f32 %v2055, %v2060
  %v2074 = vmul.f32 %v2055, %v2064
  %v2075 = vmul.f32 %v2055, %v2068
  %v2076 = vmul.f32 %v2055, %v2072
  %v2077 = vadd.f32 %v2049, %v2073
  %v2078 = vadd.f32 %v2050, %v2074
  %v2079 = vadd.f32 %v2051, %v2075
  %v2080 = vadd.f32 %v2052, %v2076
  %2081 = vset.pattern.permute.xlu0 17
  %2082 = vperm.xlu0 %2081, %v1597
  %v2083 = vpop.permute.xlu0 %2082
  %v2085 = vlaneseq
  %v2086 = vshrl.u32 %v2085, 7
  %v2087 = vsub.s32 1, %v2086
  %v2088 = vrot.slane %v1465, %v2087
  %v2089 = vlaneseq
  %v2090 = vshrl.u32 %v2089, 7
  %v2091 = vsub.s32 1, %v2090
  %v2092 = vrot.slane %v1466, %v2091
  %v2093 = vlaneseq
  %v2094 = vshrl.u32 %v2093, 7
  %v2095 = vsub.s32 1, %v2094
  %v2096 = vrot.slane %v1467, %v2095
  %v2097 = vlaneseq
  %v2098 = vshrl.u32 %v2097, 7
  %v2099 = vsub.s32 1, %v2098
  %v2100 = vrot.slane %v1468, %v2099
  %v2101 = vmul.f32 %v2083, %v2088
  %v2102 = vmul.f32 %v2083, %v2092
  %v2103 = vmul.f32 %v2083, %v2096
  %v2104 = vmul.f32 %v2083, %v2100
  %v2105 = vadd.f32 %v2077, %v2101
  %v2106 = vadd.f32 %v2078, %v2102
  %v2107 = vadd.f32 %v2079, %v2103
  %v2108 = vadd.f32 %v2080, %v2104
  %2109 = vset.pattern.permute.xlu0 18
  %2110 = vperm.xlu0 %2109, %v1597
  %v2111 = vpop.permute.xlu0 %2110
  %v2113 = vlaneseq
  %v2114 = vshrl.u32 %v2113, 7
  %v2115 = vsub.s32 2, %v2114
  %v2116 = vrot.slane %v1465, %v2115
  %v2117 = vlaneseq
  %v2118 = vshrl.u32 %v2117, 7
  %v2119 = vsub.s32 2, %v2118
  %v2120 = vrot.slane %v1466, %v2119
  %v2121 = vlaneseq
  %v2122 = vshrl.u32 %v2121, 7
  %v2123 = vsub.s32 2, %v2122
  %v2124 = vrot.slane %v1467, %v2123
  %v2125 = vlaneseq
  %v2126 = vshrl.u32 %v2125, 7
  %v2127 = vsub.s32 2, %v2126
  %v2128 = vrot.slane %v1468, %v2127
  %v2129 = vmul.f32 %v2111, %v2116
  %v2130 = vmul.f32 %v2111, %v2120
  %v2131 = vmul.f32 %v2111, %v2124
  %v2132 = vmul.f32 %v2111, %v2128
  %v2133 = vadd.f32 %v2105, %v2129
  %v2134 = vadd.f32 %v2106, %v2130
  %v2135 = vadd.f32 %v2107, %v2131
  %v2136 = vadd.f32 %v2108, %v2132
  %2137 = vset.pattern.permute.xlu0 19
  %2138 = vperm.xlu0 %2137, %v1597
  %v2139 = vpop.permute.xlu0 %2138
  %v2141 = vlaneseq
  %v2142 = vshrl.u32 %v2141, 7
  %v2143 = vsub.s32 3, %v2142
  %v2144 = vrot.slane %v1465, %v2143
  %v2145 = vlaneseq
  %v2146 = vshrl.u32 %v2145, 7
  %v2147 = vsub.s32 3, %v2146
  %v2148 = vrot.slane %v1466, %v2147
  %v2149 = vlaneseq
  %v2150 = vshrl.u32 %v2149, 7
  %v2151 = vsub.s32 3, %v2150
  %v2152 = vrot.slane %v1467, %v2151
  %v2153 = vlaneseq
  %v2154 = vshrl.u32 %v2153, 7
  %v2155 = vsub.s32 3, %v2154
  %v2156 = vrot.slane %v1468, %v2155
  %v2157 = vmul.f32 %v2139, %v2144
  %v2158 = vmul.f32 %v2139, %v2148
  %v2159 = vmul.f32 %v2139, %v2152
  %v2160 = vmul.f32 %v2139, %v2156
  %v2161 = vadd.f32 %v2133, %v2157
  %v2162 = vadd.f32 %v2134, %v2158
  %v2163 = vadd.f32 %v2135, %v2159
  %v2164 = vadd.f32 %v2136, %v2160
  %2165 = vset.pattern.permute.xlu0 20
  %2166 = vperm.xlu0 %2165, %v1597
  %v2167 = vpop.permute.xlu0 %2166
  %v2169 = vlaneseq
  %v2170 = vshrl.u32 %v2169, 7
  %v2171 = vsub.s32 0, %v2170
  %v2172 = vrot.slane %v1545, %v2171
  %v2173 = vlaneseq
  %v2174 = vshrl.u32 %v2173, 7
  %v2175 = vsub.s32 0, %v2174
  %v2176 = vrot.slane %v1546, %v2175
  %v2177 = vlaneseq
  %v2178 = vshrl.u32 %v2177, 7
  %v2179 = vsub.s32 0, %v2178
  %v2180 = vrot.slane %v1547, %v2179
  %v2181 = vlaneseq
  %v2182 = vshrl.u32 %v2181, 7
  %v2183 = vsub.s32 0, %v2182
  %v2184 = vrot.slane %v1548, %v2183
  %v2185 = vmul.f32 %v2167, %v2172
  %v2186 = vmul.f32 %v2167, %v2176
  %v2187 = vmul.f32 %v2167, %v2180
  %v2188 = vmul.f32 %v2167, %v2184
  %v2189 = vadd.f32 %v2161, %v2185
  %v2190 = vadd.f32 %v2162, %v2186
  %v2191 = vadd.f32 %v2163, %v2187
  %v2192 = vadd.f32 %v2164, %v2188
  %2193 = vset.pattern.permute.xlu0 21
  %2194 = vperm.xlu0 %2193, %v1597
  %v2195 = vpop.permute.xlu0 %2194
  %v2197 = vlaneseq
  %v2198 = vshrl.u32 %v2197, 7
  %v2199 = vsub.s32 1, %v2198
  %v2200 = vrot.slane %v1545, %v2199
  %v2201 = vlaneseq
  %v2202 = vshrl.u32 %v2201, 7
  %v2203 = vsub.s32 1, %v2202
  %v2204 = vrot.slane %v1546, %v2203
  %v2205 = vlaneseq
  %v2206 = vshrl.u32 %v2205, 7
  %v2207 = vsub.s32 1, %v2206
  %v2208 = vrot.slane %v1547, %v2207
  %v2209 = vlaneseq
  %v2210 = vshrl.u32 %v2209, 7
  %v2211 = vsub.s32 1, %v2210
  %v2212 = vrot.slane %v1548, %v2211
  %v2213 = vmul.f32 %v2195, %v2200
  %v2214 = vmul.f32 %v2195, %v2204
  %v2215 = vmul.f32 %v2195, %v2208
  %v2216 = vmul.f32 %v2195, %v2212
  %v2217 = vadd.f32 %v2189, %v2213
  %v2218 = vadd.f32 %v2190, %v2214
  %v2219 = vadd.f32 %v2191, %v2215
  %v2220 = vadd.f32 %v2192, %v2216
  %2221 = vset.pattern.permute.xlu0 22
  %2222 = vperm.xlu0 %2221, %v1597
  %v2223 = vpop.permute.xlu0 %2222
  %v2225 = vlaneseq
  %v2226 = vshrl.u32 %v2225, 7
  %v2227 = vsub.s32 2, %v2226
  %v2228 = vrot.slane %v1545, %v2227
  %v2229 = vlaneseq
  %v2230 = vshrl.u32 %v2229, 7
  %v2231 = vsub.s32 2, %v2230
  %v2232 = vrot.slane %v1546, %v2231
  %v2233 = vlaneseq
  %v2234 = vshrl.u32 %v2233, 7
  %v2235 = vsub.s32 2, %v2234
  %v2236 = vrot.slane %v1547, %v2235
  %v2237 = vlaneseq
  %v2238 = vshrl.u32 %v2237, 7
  %v2239 = vsub.s32 2, %v2238
  %v2240 = vrot.slane %v1548, %v2239
  %v2241 = vmul.f32 %v2223, %v2228
  %v2242 = vmul.f32 %v2223, %v2232
  %v2243 = vmul.f32 %v2223, %v2236
  %v2244 = vmul.f32 %v2223, %v2240
  %v2245 = vadd.f32 %v2217, %v2241
  %v2246 = vadd.f32 %v2218, %v2242
  %v2247 = vadd.f32 %v2219, %v2243
  %v2248 = vadd.f32 %v2220, %v2244
  %2249 = vset.pattern.permute.xlu0 23
  %2250 = vperm.xlu0 %2249, %v1597
  %v2251 = vpop.permute.xlu0 %2250
  %v2253 = vlaneseq
  %v2254 = vshrl.u32 %v2253, 7
  %v2255 = vsub.s32 3, %v2254
  %v2256 = vrot.slane %v1545, %v2255
  %v2257 = vlaneseq
  %v2258 = vshrl.u32 %v2257, 7
  %v2259 = vsub.s32 3, %v2258
  %v2260 = vrot.slane %v1546, %v2259
  %v2261 = vlaneseq
  %v2262 = vshrl.u32 %v2261, 7
  %v2263 = vsub.s32 3, %v2262
  %v2264 = vrot.slane %v1547, %v2263
  %v2265 = vlaneseq
  %v2266 = vshrl.u32 %v2265, 7
  %v2267 = vsub.s32 3, %v2266
  %v2268 = vrot.slane %v1548, %v2267
  %v2269 = vmul.f32 %v2251, %v2256
  %v2270 = vmul.f32 %v2251, %v2260
  %v2271 = vmul.f32 %v2251, %v2264
  %v2272 = vmul.f32 %v2251, %v2268
  %v2273 = vadd.f32 %v2245, %v2269
  %v2274 = vadd.f32 %v2246, %v2270
  %v2275 = vadd.f32 %v2247, %v2271
  %v2276 = vadd.f32 %v2248, %v2272
  %2277 = vset.pattern.permute.xlu0 24
  %2278 = vperm.xlu0 %2277, %v1597
  %v2279 = vpop.permute.xlu0 %2278
  %v2281 = vlaneseq
  %v2282 = vshrl.u32 %v2281, 7
  %v2283 = vsub.s32 0, %v2282
  %v2284 = vrot.slane %v1561, %v2283
  %v2285 = vlaneseq
  %v2286 = vshrl.u32 %v2285, 7
  %v2287 = vsub.s32 0, %v2286
  %v2288 = vrot.slane %v1562, %v2287
  %v2289 = vlaneseq
  %v2290 = vshrl.u32 %v2289, 7
  %v2291 = vsub.s32 0, %v2290
  %v2292 = vrot.slane %v1563, %v2291
  %v2293 = vlaneseq
  %v2294 = vshrl.u32 %v2293, 7
  %v2295 = vsub.s32 0, %v2294
  %v2296 = vrot.slane %v1564, %v2295
  %v2297 = vmul.f32 %v2279, %v2284
  %v2298 = vmul.f32 %v2279, %v2288
  %v2299 = vmul.f32 %v2279, %v2292
  %v2300 = vmul.f32 %v2279, %v2296
  %v2301 = vadd.f32 %v2273, %v2297
  %v2302 = vadd.f32 %v2274, %v2298
  %v2303 = vadd.f32 %v2275, %v2299
  %v2304 = vadd.f32 %v2276, %v2300
  %2305 = vset.pattern.permute.xlu0 25
  %2306 = vperm.xlu0 %2305, %v1597
  %v2307 = vpop.permute.xlu0 %2306
  %v2309 = vlaneseq
  %v2310 = vshrl.u32 %v2309, 7
  %v2311 = vsub.s32 1, %v2310
  %v2312 = vrot.slane %v1561, %v2311
  %v2313 = vlaneseq
  %v2314 = vshrl.u32 %v2313, 7
  %v2315 = vsub.s32 1, %v2314
  %v2316 = vrot.slane %v1562, %v2315
  %v2317 = vlaneseq
  %v2318 = vshrl.u32 %v2317, 7
  %v2319 = vsub.s32 1, %v2318
  %v2320 = vrot.slane %v1563, %v2319
  %v2321 = vlaneseq
  %v2322 = vshrl.u32 %v2321, 7
  %v2323 = vsub.s32 1, %v2322
  %v2324 = vrot.slane %v1564, %v2323
  %v2325 = vmul.f32 %v2307, %v2312
  %v2326 = vmul.f32 %v2307, %v2316
  %v2327 = vmul.f32 %v2307, %v2320
  %v2328 = vmul.f32 %v2307, %v2324
  %v2329 = vadd.f32 %v2301, %v2325
  %v2330 = vadd.f32 %v2302, %v2326
  %v2331 = vadd.f32 %v2303, %v2327
  %v2332 = vadd.f32 %v2304, %v2328
  %2333 = vset.pattern.permute.xlu0 26
  %2334 = vperm.xlu0 %2333, %v1597
  %v2335 = vpop.permute.xlu0 %2334
  %v2337 = vlaneseq
  %v2338 = vshrl.u32 %v2337, 7
  %v2339 = vsub.s32 2, %v2338
  %v2340 = vrot.slane %v1561, %v2339
  %v2341 = vlaneseq
  %v2342 = vshrl.u32 %v2341, 7
  %v2343 = vsub.s32 2, %v2342
  %v2344 = vrot.slane %v1562, %v2343
  %v2345 = vlaneseq
  %v2346 = vshrl.u32 %v2345, 7
  %v2347 = vsub.s32 2, %v2346
  %v2348 = vrot.slane %v1563, %v2347
  %v2349 = vlaneseq
  %v2350 = vshrl.u32 %v2349, 7
  %v2351 = vsub.s32 2, %v2350
  %v2352 = vrot.slane %v1564, %v2351
  %v2353 = vmul.f32 %v2335, %v2340
  %v2354 = vmul.f32 %v2335, %v2344
  %v2355 = vmul.f32 %v2335, %v2348
  %v2356 = vmul.f32 %v2335, %v2352
  %v2357 = vadd.f32 %v2329, %v2353
  %v2358 = vadd.f32 %v2330, %v2354
  %v2359 = vadd.f32 %v2331, %v2355
  %v2360 = vadd.f32 %v2332, %v2356
  %2361 = vset.pattern.permute.xlu0 27
  %2362 = vperm.xlu0 %2361, %v1597
  %v2363 = vpop.permute.xlu0 %2362
  %v2365 = vlaneseq
  %v2366 = vshrl.u32 %v2365, 7
  %v2367 = vsub.s32 3, %v2366
  %v2368 = vrot.slane %v1561, %v2367
  %v2369 = vlaneseq
  %v2370 = vshrl.u32 %v2369, 7
  %v2371 = vsub.s32 3, %v2370
  %v2372 = vrot.slane %v1562, %v2371
  %v2373 = vlaneseq
  %v2374 = vshrl.u32 %v2373, 7
  %v2375 = vsub.s32 3, %v2374
  %v2376 = vrot.slane %v1563, %v2375
  %v2377 = vlaneseq
  %v2378 = vshrl.u32 %v2377, 7
  %v2379 = vsub.s32 3, %v2378
  %v2380 = vrot.slane %v1564, %v2379
  %v2381 = vmul.f32 %v2363, %v2368
  %v2382 = vmul.f32 %v2363, %v2372
  %v2383 = vmul.f32 %v2363, %v2376
  %v2384 = vmul.f32 %v2363, %v2380
  %v2385 = vadd.f32 %v2357, %v2381
  %v2386 = vadd.f32 %v2358, %v2382
  %v2387 = vadd.f32 %v2359, %v2383
  %v2388 = vadd.f32 %v2360, %v2384
  %2389 = vset.pattern.permute.xlu0 28
  %2390 = vperm.xlu0 %2389, %v1597
  %v2391 = vpop.permute.xlu0 %2390
  %v2393 = vlaneseq
  %v2394 = vshrl.u32 %v2393, 7
  %v2395 = vsub.s32 0, %v2394
  %v2396 = vrot.slane %v1577, %v2395
  %v2397 = vlaneseq
  %v2398 = vshrl.u32 %v2397, 7
  %v2399 = vsub.s32 0, %v2398
  %v2400 = vrot.slane %v1578, %v2399
  %v2401 = vlaneseq
  %v2402 = vshrl.u32 %v2401, 7
  %v2403 = vsub.s32 0, %v2402
  %v2404 = vrot.slane %v1579, %v2403
  %v2405 = vlaneseq
  %v2406 = vshrl.u32 %v2405, 7
  %v2407 = vsub.s32 0, %v2406
  %v2408 = vrot.slane %v1580, %v2407
  %v2409 = vmul.f32 %v2391, %v2396
  %v2410 = vmul.f32 %v2391, %v2400
  %v2411 = vmul.f32 %v2391, %v2404
  %v2412 = vmul.f32 %v2391, %v2408
  %v2413 = vadd.f32 %v2385, %v2409
  %v2414 = vadd.f32 %v2386, %v2410
  %v2415 = vadd.f32 %v2387, %v2411
  %v2416 = vadd.f32 %v2388, %v2412
  %2417 = vset.pattern.permute.xlu0 29
  %2418 = vperm.xlu0 %2417, %v1597
  %v2419 = vpop.permute.xlu0 %2418
  %v2421 = vlaneseq
  %v2422 = vshrl.u32 %v2421, 7
  %v2423 = vsub.s32 1, %v2422
  %v2424 = vrot.slane %v1577, %v2423
  %v2425 = vlaneseq
  %v2426 = vshrl.u32 %v2425, 7
  %v2427 = vsub.s32 1, %v2426
  %v2428 = vrot.slane %v1578, %v2427
  %v2429 = vlaneseq
  %v2430 = vshrl.u32 %v2429, 7
  %v2431 = vsub.s32 1, %v2430
  %v2432 = vrot.slane %v1579, %v2431
  %v2433 = vlaneseq
  %v2434 = vshrl.u32 %v2433, 7
  %v2435 = vsub.s32 1, %v2434
  %v2436 = vrot.slane %v1580, %v2435
  %v2437 = vmul.f32 %v2419, %v2424
  %v2438 = vmul.f32 %v2419, %v2428
  %v2439 = vmul.f32 %v2419, %v2432
  %v2440 = vmul.f32 %v2419, %v2436
  %v2441 = vadd.f32 %v2413, %v2437
  %v2442 = vadd.f32 %v2414, %v2438
  %v2443 = vadd.f32 %v2415, %v2439
  %v2444 = vadd.f32 %v2416, %v2440
  %2445 = vset.pattern.permute.xlu0 30
  %2446 = vperm.xlu0 %2445, %v1597
  %v2447 = vpop.permute.xlu0 %2446
  %v2449 = vlaneseq
  %v2450 = vshrl.u32 %v2449, 7
  %v2451 = vsub.s32 2, %v2450
  %v2452 = vrot.slane %v1577, %v2451
  %v2453 = vlaneseq
  %v2454 = vshrl.u32 %v2453, 7
  %v2455 = vsub.s32 2, %v2454
  %v2456 = vrot.slane %v1578, %v2455
  %v2457 = vlaneseq
  %v2458 = vshrl.u32 %v2457, 7
  %v2459 = vsub.s32 2, %v2458
  %v2460 = vrot.slane %v1579, %v2459
  %v2461 = vlaneseq
  %v2462 = vshrl.u32 %v2461, 7
  %v2463 = vsub.s32 2, %v2462
  %v2464 = vrot.slane %v1580, %v2463
  %v2465 = vmul.f32 %v2447, %v2452
  %v2466 = vmul.f32 %v2447, %v2456
  %v2467 = vmul.f32 %v2447, %v2460
  %v2468 = vmul.f32 %v2447, %v2464
  %v2469 = vadd.f32 %v2441, %v2465
  %v2470 = vadd.f32 %v2442, %v2466
  %v2471 = vadd.f32 %v2443, %v2467
  %v2472 = vadd.f32 %v2444, %v2468
  %2473 = vset.pattern.permute.xlu0 31
  %2474 = vperm.xlu0 %2473, %v1597
  %v2475 = vpop.permute.xlu0 %2474
  %v2477 = vlaneseq
  %v2478 = vshrl.u32 %v2477, 7
  %v2479 = vsub.s32 3, %v2478
  %v2480 = vrot.slane %v1577, %v2479
  %v2481 = vlaneseq
  %v2482 = vshrl.u32 %v2481, 7
  %v2483 = vsub.s32 3, %v2482
  %v2484 = vrot.slane %v1578, %v2483
  %v2485 = vlaneseq
  %v2486 = vshrl.u32 %v2485, 7
  %v2487 = vsub.s32 3, %v2486
  %v2488 = vrot.slane %v1579, %v2487
  %v2489 = vlaneseq
  %v2490 = vshrl.u32 %v2489, 7
  %v2491 = vsub.s32 3, %v2490
  %v2492 = vrot.slane %v1580, %v2491
  %v2493 = vmul.f32 %v2475, %v2480
  %v2494 = vmul.f32 %v2475, %v2484
  %v2495 = vmul.f32 %v2475, %v2488
  %v2496 = vmul.f32 %v2475, %v2492
  %v2497 = vadd.f32 %v2469, %v2493
  %v2498 = vadd.f32 %v2470, %v2494
  %v2499 = vadd.f32 %v2471, %v2495
  %v2500 = vadd.f32 %v2472, %v2496
  %2501 = vset.pattern.permute.xlu0 32
  %2502 = vperm.xlu0 %2501, %v1597
  %v2503 = vpop.permute.xlu0 %2502
  %v2505 = vlaneseq
  %v2506 = vshrl.u32 %v2505, 7
  %v2507 = vsub.s32 0, %v2506
  %v2508 = vrot.slane %v1593, %v2507
  %v2509 = vlaneseq
  %v2510 = vshrl.u32 %v2509, 7
  %v2511 = vsub.s32 0, %v2510
  %v2512 = vrot.slane %v1594, %v2511
  %v2513 = vlaneseq
  %v2514 = vshrl.u32 %v2513, 7
  %v2515 = vsub.s32 0, %v2514
  %v2516 = vrot.slane %v1595, %v2515
  %v2517 = vlaneseq
  %v2518 = vshrl.u32 %v2517, 7
  %v2519 = vsub.s32 0, %v2518
  %v2520 = vrot.slane %v1596, %v2519
  %v2521 = vmul.f32 %v2503, %v2508
  %v2522 = vmul.f32 %v2503, %v2512
  %v2523 = vmul.f32 %v2503, %v2516
  %v2524 = vmul.f32 %v2503, %v2520
  %v2525 = vadd.f32 %v2497, %v2521
  %v2526 = vadd.f32 %v2498, %v2522
  %v2527 = vadd.f32 %v2499, %v2523
  %v2528 = vadd.f32 %v2500, %v2524
  %2529 = vset.pattern.permute.xlu0 33
  %2530 = vperm.xlu0 %2529, %v1597
  %v2531 = vpop.permute.xlu0 %2530
  %v2533 = vlaneseq
  %v2534 = vshrl.u32 %v2533, 7
  %v2535 = vsub.s32 1, %v2534
  %v2536 = vrot.slane %v1593, %v2535
  %v2537 = vlaneseq
  %v2538 = vshrl.u32 %v2537, 7
  %v2539 = vsub.s32 1, %v2538
  %v2540 = vrot.slane %v1594, %v2539
  %v2541 = vlaneseq
  %v2542 = vshrl.u32 %v2541, 7
  %v2543 = vsub.s32 1, %v2542
  %v2544 = vrot.slane %v1595, %v2543
  %v2545 = vlaneseq
  %v2546 = vshrl.u32 %v2545, 7
  %v2547 = vsub.s32 1, %v2546
  %v2548 = vrot.slane %v1596, %v2547
  %v2549 = vmul.f32 %v2531, %v2536
  %v2550 = vmul.f32 %v2531, %v2540
  %v2551 = vmul.f32 %v2531, %v2544
  %v2552 = vmul.f32 %v2531, %v2548
  %v2553 = vadd.f32 %v2525, %v2549
  %v2554 = vadd.f32 %v2526, %v2550
  %v2555 = vadd.f32 %v2527, %v2551
  %v2556 = vadd.f32 %v2528, %v2552
  %2557 = vset.pattern.permute.xlu0 34
  %2558 = vperm.xlu0 %2557, %v1597
  %v2559 = vpop.permute.xlu0 %2558
  %v2561 = vlaneseq
  %v2562 = vshrl.u32 %v2561, 7
  %v2563 = vsub.s32 2, %v2562
  %v2564 = vrot.slane %v1593, %v2563
  %v2565 = vlaneseq
  %v2566 = vshrl.u32 %v2565, 7
  %v2567 = vsub.s32 2, %v2566
  %v2568 = vrot.slane %v1594, %v2567
  %v2569 = vlaneseq
  %v2570 = vshrl.u32 %v2569, 7
  %v2571 = vsub.s32 2, %v2570
  %v2572 = vrot.slane %v1595, %v2571
  %v2573 = vlaneseq
  %v2574 = vshrl.u32 %v2573, 7
  %v2575 = vsub.s32 2, %v2574
  %v2576 = vrot.slane %v1596, %v2575
  %v2577 = vmul.f32 %v2559, %v2564
  %v2578 = vmul.f32 %v2559, %v2568
  %v2579 = vmul.f32 %v2559, %v2572
  %v2580 = vmul.f32 %v2559, %v2576
  %v2581 = vadd.f32 %v2553, %v2577
  %v2582 = vadd.f32 %v2554, %v2578
  %v2583 = vadd.f32 %v2555, %v2579
  %v2584 = vadd.f32 %v2556, %v2580
  %2585 = vset.pattern.permute.xlu0 35
  %2586 = vperm.xlu0 %2585, %v1597
  %v2587 = vpop.permute.xlu0 %2586
  %v2589 = vlaneseq
  %v2590 = vshrl.u32 %v2589, 7
  %v2591 = vsub.s32 3, %v2590
  %v2592 = vrot.slane %v1593, %v2591
  %v2593 = vlaneseq
  %v2594 = vshrl.u32 %v2593, 7
  %v2595 = vsub.s32 3, %v2594
  %v2596 = vrot.slane %v1594, %v2595
  %v2597 = vlaneseq
  %v2598 = vshrl.u32 %v2597, 7
  %v2599 = vsub.s32 3, %v2598
  %v2600 = vrot.slane %v1595, %v2599
  %v2601 = vlaneseq
  %v2602 = vshrl.u32 %v2601, 7
  %v2603 = vsub.s32 3, %v2602
  %v2604 = vrot.slane %v1596, %v2603
  %v2605 = vmul.f32 %v2587, %v2592
  %v2606 = vmul.f32 %v2587, %v2596
  %v2607 = vmul.f32 %v2587, %v2600
  %v2608 = vmul.f32 %v2587, %v2604
  %v2609 = vadd.f32 %v2581, %v2605
  %v2610 = vadd.f32 %v2582, %v2606
  %v2611 = vadd.f32 %v2583, %v2607
  %v2612 = vadd.f32 %v2584, %v2608
  %v2613 = vxor.u32 %v2609, 2147483648
  %v2614 = vxor.u32 %v2610, 2147483648
  %v2615 = vxor.u32 %v2611, 2147483648
  %v2616 = vxor.u32 %v2612, 2147483648
  %v2617 = vmul.f32 %v2613, 1.442695
  %v2618 = vpow.pop %v2617
  %v2619 = vmul.f32 %v2614, 1.442695
  %v2620 = vpow.pop %v2619
  %v2621 = vmul.f32 %v2615, 1.442695
  %v2622 = vpow.pop %v2621
  %v2623 = vmul.f32 %v2616, 1.442695
  %v2624 = vpow.pop %v2623
  %v2625 = vadd.f32 %v2618, 1.0
  %v2626 = vadd.f32 %v2620, 1.0
  %v2627 = vadd.f32 %v2622, 1.0
  %v2628 = vadd.f32 %v2624, 1.0
  %v2629 = vrcp.pop %v2625
  %v2630 = vmul.f32 1.0, %v2629
  %v2631 = vrcp.pop %v2626
  %v2632 = vmul.f32 1.0, %v2631
  %v2633 = vrcp.pop %v2627
  %v2634 = vmul.f32 1.0, %v2633
  %v2635 = vrcp.pop %v2628
  %v2636 = vmul.f32 1.0, %v2635
  %v2637 = vmul.f32 %v2609, %v2630
  %v2638 = vmul.f32 %v2610, %v2632
  %v2639 = vmul.f32 %v2611, %v2634
  %v2640 = vmul.f32 %v2612, %v2636
  %v2641 = vadd.f32 %v2637, %v23
  %v2642 = vadd.f32 %v2638, %v35
  %v2643 = vadd.f32 %v2639, %v24
  %v2644 = vadd.f32 %v2640, %v36
  %v2649 = vcombine.low %v2641, %v2642
  %v2650 = vcombine.low %v2643, %v2644
  %2653 = vst [vmem:[%s6] sm:$0xff] %v2649
  %2654 = vst [vmem:[%s6 + $0x8] sm:$0xff] %v2650
  // Predicated region
  $region26: #{bottleneck.1} parent=0 // pred_check
    _
  $region27: #{bottleneck.1} parent=0 // pred_check_branch
    %2656 = sbr.rel (0) target = $region29
  $region28: #{bottleneck.1} parent=0 // pred_region
    _
  $region29: #{bottleneck.1} parent=0 // pred_fallthru
    _
  // Predicated region
  $region30: #{bottleneck.1} parent=0 // pred_check
    _
  $region31: #{bottleneck.1} parent=0 // pred_check_branch
    %2658 = sbr.rel (0) target = $region33
  $region32: #{bottleneck.1} parent=0 // pred_region
    _
  $region33: #{bottleneck.1} parent=0 // pred_fallthru
    _

</llo_original>
